<compile_context>
chip_gen: v5e
topology: v5e:2x2
jax: 0.10.0
libtpu: 0.0.40
codegen_flags: <defaults>
</compile_context>

<pallas_src>
import functools
import math

import jax
import jax.numpy as jnp
from jax.experimental import pallas as pl
from jax.experimental.pallas import tpu as pltpu

_LANE = 128
_SUB = 8
_NEG = -1e30   # finite "minus infinity" for masked softmax lanes


def _round_up(v, m):
    return (v + m - 1) // m * m


def _vmem_capacity_bytes():
    try:
        return int(pltpu.get_tpu_info().vmem_capacity_bytes)
    except Exception:
        return 64 << 20   # conservative fallback valid on v5e/v6e/v7x


# ------------------------------ kernel ------------------------------------- #

def _dense_gcn3_kernel(x_ref, adj_ref,
                       w1_ref, w2a_ref, w2b_ref, w3a_ref, w3b_ref, w3c_ref,
                       b1_ref, b2_ref, b3_ref,
                       out_ref,
                       x1_scr, x2_scr, xw_scr,
                       *, nclass, tm):
    l = pl.program_id(0)   # layer phase (outer, sequential)
    t = pl.program_id(1)   # adj row tile (inner)
    f32 = jnp.float32
    cdt = xw_scr.dtype     # bf16 compute/storage dtype for activations

    # ---- Phase A: at the first row tile of each layer, (re)compute the dense
    # feature transform xw = H_in @ W_l for ALL nodes into VMEM scratch.
    # Concats are folded into slab matmuls; slabs are accumulated SEQUENTIALLY
    # into xw_scr so only one (n_pad, d) f32 temporary is live at a time.
    @pl.when((l == 0) & (t == 0))
    def _():
        xw_scr[...] = jnp.dot(x_ref[...], w1_ref[...],
                              preferred_element_type=f32).astype(cdt)

    @pl.when((l == 1) & (t == 0))
    def _():
        xw_scr[...] = jnp.dot(x1_scr[...], w2a_ref[...],
                              preferred_element_type=f32).astype(cdt)
        xw_scr[...] = (jnp.dot(x_ref[...], w2b_ref[...],
                               preferred_element_type=f32)
                       + xw_scr[...].astype(f32)).astype(cdt)

    @pl.when((l == 2) & (t == 0))
    def _():
        xw_scr[...] = jnp.dot(x2_scr[...], w3a_ref[...],
                              preferred_element_type=f32).astype(cdt)
        xw_scr[...] = (jnp.dot(x1_scr[...], w3b_ref[...],
                               preferred_element_type=f32)
                       + xw_scr[...].astype(f32)).astype(cdt)
        xw_scr[...] = (jnp.dot(x_ref[...], w3c_ref[...],
                               preferred_element_type=f32)
                       + xw_scr[...].astype(f32)).astype(cdt)

    # ---- Phase B: one row tile of the graph aggregation adj @ xw (+ bias,
    # relu, per-layer epilogue).  bf16 operands, f32 accumulation.
    h = jnp.dot(adj_ref[...], xw_scr[...], preferred_element_type=f32)
    row0 = pl.multiple_of(t * tm, tm)

    @pl.when(l == 0)
    def _():
        a = jnp.maximum(h + b1_ref[...], 0.0)
        x1_scr[pl.ds(row0, tm), :] = a.astype(cdt)

    @pl.when(l == 1)
    def _():
        a = jnp.maximum(h + b2_ref[...], 0.0)
        x2_scr[pl.ds(row0, tm), :] = a.astype(cdt)

    @pl.when(l == 2)
    def _():
        a = jnp.maximum(h + b3_ref[...], 0.0)
        # masked, numerically stable log-softmax over the real class lanes
        lane = jax.lax.broadcasted_iota(jnp.int32, a.shape, 1)
        valid = lane < nclass
        am = jnp.where(valid, a, _NEG)
        m = jnp.max(am, axis=1, keepdims=True)
        e = jnp.where(valid, jnp.exp(am - m), 0.0)
        lse = jnp.log(jnp.sum(e, axis=1, keepdims=True))
        out_ref[...] = am - m - lse


# ------------------------------ wrapper ------------------------------------- #

def _pad2(a, rows, cols, dtype):
    out = jnp.zeros((rows, cols), dtype)
    return out.at[: a.shape[0], : a.shape[1]].set(a.astype(dtype))


def dense_gcn3_forward(params, x, adj):
    n, nfeat = x.shape
    nhid = params["w1"].shape[1]
    nclass = params["w3"].shape[1]

    f_pad = _round_up(nfeat, _LANE)
    d = _round_up(max(nhid, nclass), _LANE)       # uniform padded lane width
    n_pad = _round_up(n, _LANE)

    bf = 2   # bf16 bytes
    # VMEM-resident regardless of the row tile: x + weight slabs (x2 for the
    # default double-buffering of constant-index inputs), f32 biases, and the
    # three bf16 activation scratch buffers.
    const_bytes = (2 * bf * (n_pad * f_pad + 3 * f_pad * d + 3 * d * d)
                   + 2 * 4 * 3 * d
                   + bf * 3 * n_pad * d)

    vmem_cap = _vmem_capacity_bytes()
    budget = max((vmem_cap * 7) // 8 - (8 << 20), 24 << 20)

    # Largest row tile that fits: tm == n_pad makes adj's block index constant
    # (DMA'd once, fully VMEM-resident); otherwise stream lane-dense row tiles.
    tm = _LANE
    for cand in (n_pad, 1024, 512, 256, _LANE):
        if cand > n_pad or n_pad % cand:
            continue
        need = const_bytes + 2 * bf * cand * n_pad + 2 * 4 * cand * d
        if need <= budget:
            tm = cand
            break
    n_tiles = n_pad // tm
    vmem_need = const_bytes + 2 * bf * tm * n_pad + 2 * 4 * tm * d
    vmem_limit = int(min(max(vmem_need * 5 // 4, 16 << 20),
                         max(vmem_cap - (4 << 20), 16 << 20)))

    cdt = jnp.bfloat16
    xp = _pad2(x, n_pad, f_pad, cdt)
    adjp = _pad2(adj, n_pad, n_pad, cdt)

    w1 = _pad2(params["w1"], f_pad, d, cdt)
    w2a = _pad2(params["w2"][:nhid], d, d, cdt)
    w2b = _pad2(params["w2"][nhid:], f_pad, d, cdt)
    w3a = _pad2(params["w3"][:nhid], d, d, cdt)
    w3b = _pad2(params["w3"][nhid:2 * nhid], d, d, cdt)
    w3c = _pad2(params["w3"][2 * nhid:], f_pad, d, cdt)
    b1 = _pad2(params["b1"].reshape(1, -1), 1, d, jnp.float32)
    b2 = _pad2(params["b2"].reshape(1, -1), 1, d, jnp.float32)
    b3 = _pad2(params["b3"].reshape(1, -1), 1, d, jnp.float32)

    def const(shape):
        # constant block index -> DMA'd once, VMEM-resident across the grid
        return pl.BlockSpec(shape, lambda l, t: (0, 0))

    out_pad = pl.pallas_call(
        functools.partial(_dense_gcn3_kernel, nclass=nclass, tm=tm),
        out_shape=jax.ShapeDtypeStruct((n_pad, d), jnp.float32),
        grid=(3, n_tiles),
        in_specs=[
            const((n_pad, f_pad)),                           # x  (resident)
            pl.BlockSpec((tm, n_pad), lambda l, t: (t, 0)),  # adj row tile
            const((f_pad, d)),                               # W1
            const((d, d)),                                   # W2a (x1 slab)
            const((f_pad, d)),                               # W2b (x  slab)
            const((d, d)),                                   # W3a (x2 slab)
            const((d, d)),                                   # W3b (x1 slab)
            const((f_pad, d)),                               # W3c (x  slab)
            const((1, d)), const((1, d)), const((1, d)),     # b1, b2, b3
        ],
        out_specs=pl.BlockSpec((tm, d), lambda l, t: (t, 0)),
        scratch_shapes=[
            pltpu.VMEM((n_pad, d), cdt),   # x1 (all nodes)
            pltpu.VMEM((n_pad, d), cdt),   # x2 (all nodes)
            pltpu.VMEM((n_pad, d), cdt),   # xw of the current layer
        ],
        compiler_params=pltpu.CompilerParams(
            # both axes carry cross-iteration scratch dependencies -> sequential
            dimension_semantics=("arbitrary", "arbitrary"),
            vmem_limit_bytes=vmem_limit),
    )(xp, adjp, w1, w2a, w2b, w3a, w3b, w3c, b1, b2, b3)

    return out_pad[:n, :nclass]


# ------------------------------ params / reference -------------------------- #

def init_params(key, nfeat, nhid, nclass):
    """uniform(-1/sqrt(out), 1/sqrt(out)) init, mirroring pygcn GraphConvolution."""
    def u(k, shape, s):
        return jax.random.uniform(k, shape, jnp.float32, -s, s)

    ks = jax.random.split(key, 6)
    s_h = 1.0 / math.sqrt(nhid)
    s_c = 1.0 / math.sqrt(nclass)
    return {
        "w1": u(ks[0], (nfeat, nhid), s_h), "b1": u(ks[1], (nhid,), s_h),
        "w2": u(ks[2], (nhid + nfeat, nhid), s_h), "b2": u(ks[3], (nhid,), s_h),
        "w3": u(ks[4], (nhid + nhid + nfeat, nclass), s_c),
        "b3": u(ks[5], (nclass,), s_c),
    }


def dense_gcn3_ref(params, x, adj):
    hi = jax.lax.Precision.HIGHEST

    def gc(h, w, b):
        return jnp.dot(adj, jnp.dot(h, w, precision=hi), precision=hi) + b

    x1 = jax.nn.relu(gc(x, params["w1"], params["b1"]))
    x2 = jax.nn.relu(gc(jnp.concatenate([x1, x], axis=1),
                        params["w2"], params["b2"]))
    x3 = jax.nn.relu(gc(jnp.concatenate([x2, x1, x], axis=1),
                        params["w3"], params["b3"]))
    return jax.nn.log_softmax(x3, axis=1)


# ------------------------------ main ---------------------------------------- #

if __name__ == "__main__":
    # n=200 pads to 256 rows; the whole plan fits VMEM so adj is resident and
    # the grid degenerates to (3, 1) — the streamed path is still exercised by
    # the same BlockSpecs for larger n.
    n, nfeat, nhid, nclass = 200, 40, 32, 7

    key = jax.random.PRNGKey(0)
    k_x, k_a, k_p = jax.random.split(key, 3)

    x = jax.random.normal(k_x, (n, nfeat), jnp.float32)
    a = jax.random.uniform(k_a, (n, n), jnp.float32)
    adj = (a + a.T) * 0.5
    adj = adj / jnp.sum(adj, axis=1, keepdims=True)

    params = init_params(k_p, nfeat, nhid, nclass)

    out = dense_gcn3_forward(params, x, adj)
    out = jax.block_until_ready(out)

    ref = dense_gcn3_ref(params, x, adj)
    assert out.shape == (n, nclass)
    # bf16 MXU operands with f32 accumulation: tolerance loosened vs the pure
    # f32 HIGHEST-precision reference (log-softmax outputs are O(1)).
    assert jnp.allclose(out, ref, atol=2e-2, rtol=2e-2), "mismatch vs JAX reference"

    print("KERNEL_OK")
</pallas_src>

<mosaic_0001>
module attributes {stable_mosaic.version = 11 : i64} {
  func.func @_dense_gcn3_kernel(%arg0: i32, %arg1: i32, %arg2: memref<256x128xbf16, #tpu.memory_space<vmem>>, %arg3: memref<256x256xbf16, #tpu.memory_space<vmem>>, %arg4: memref<128x128xbf16, #tpu.memory_space<vmem>>, %arg5: memref<128x128xbf16, #tpu.memory_space<vmem>>, %arg6: memref<128x128xbf16, #tpu.memory_space<vmem>>, %arg7: memref<128x128xbf16, #tpu.memory_space<vmem>>, %arg8: memref<128x128xbf16, #tpu.memory_space<vmem>>, %arg9: memref<128x128xbf16, #tpu.memory_space<vmem>>, %arg10: memref<1x128xf32, #tpu.memory_space<vmem>>, %arg11: memref<1x128xf32, #tpu.memory_space<vmem>>, %arg12: memref<1x128xf32, #tpu.memory_space<vmem>>, %arg13: memref<256x128xf32, #tpu.memory_space<vmem>>, %arg14: memref<256x128xbf16, #tpu.memory_space<vmem>>, %arg15: memref<256x128xbf16, #tpu.memory_space<vmem>>, %arg16: memref<256x128xbf16, #tpu.memory_space<vmem>>) attributes {dimension_semantics = [#tpu.dimension_semantics<arbitrary>, #tpu.dimension_semantics<arbitrary>], iteration_bounds = array<i64: 3, 1>, scalar_prefetch = 0 : i64, scratch_operands = 3 : i64, tpu.core_type = #tpu.core_type<tc>, window_params = [{pipeline_mode = #tpu.pipeline_mode<synchronous>, transform_indices = @transform_0, window_bounds = array<i64: 256, 128>}, {transform_indices = @transform_1, window_bounds = array<i64: 256, 256>}, {pipeline_mode = #tpu.pipeline_mode<synchronous>, transform_indices = @transform_2, window_bounds = array<i64: 128, 128>}, {pipeline_mode = #tpu.pipeline_mode<synchronous>, transform_indices = @transform_3, window_bounds = array<i64: 128, 128>}, {pipeline_mode = #tpu.pipeline_mode<synchronous>, transform_indices = @transform_4, window_bounds = array<i64: 128, 128>}, {pipeline_mode = #tpu.pipeline_mode<synchronous>, transform_indices = @transform_5, window_bounds = array<i64: 128, 128>}, {pipeline_mode = #tpu.pipeline_mode<synchronous>, transform_indices = @transform_6, window_bounds = array<i64: 128, 128>}, {pipeline_mode = #tpu.pipeline_mode<synchronous>, transform_indices = @transform_7, window_bounds = array<i64: 128, 128>}, {pipeline_mode = #tpu.pipeline_mode<synchronous>, transform_indices = @transform_8, window_bounds = array<i64: 1, 128>}, {pipeline_mode = #tpu.pipeline_mode<synchronous>, transform_indices = @transform_9, window_bounds = array<i64: 1, 128>}, {pipeline_mode = #tpu.pipeline_mode<synchronous>, transform_indices = @transform_10, window_bounds = array<i64: 1, 128>}, {transform_indices = @transform_11, window_bounds = array<i64: 256, 128>}]} {
    %c0_i32 = arith.constant 0 : i32
    %0 = arith.cmpi eq, %arg0, %c0_i32 : i32
    %c0_i32_0 = arith.constant 0 : i32
    %1 = arith.cmpi eq, %arg1, %c0_i32_0 : i32
    %2 = arith.andi %0, %1 : i1
    %3 = arith.extui %2 : i1 to i32
    %c0_i32_1 = arith.constant 0 : i32
    %4 = arith.cmpi ne, %3, %c0_i32_1 : i32
    scf.if %4 {
      %c0_15 = arith.constant 0 : index
      %c0_16 = arith.constant 0 : index
      %29 = vector.load %arg2[%c0_15, %c0_16] : memref<256x128xbf16, #tpu.memory_space<vmem>>, vector<256x128xbf16>
      %c0_17 = arith.constant 0 : index
      %c0_18 = arith.constant 0 : index
      %30 = vector.load %arg4[%c0_17, %c0_18] : memref<128x128xbf16, #tpu.memory_space<vmem>>, vector<128x128xbf16>
      %cst_19 = arith.constant dense<0.000000e+00> : vector<256x128xf32>
      %31 = tpu.matmul %29, %30, %cst_19 {dimension_numbers = #tpu.dot_dimension_numbers<[1], [0], [0], [1], [0, 0, 1, 1], [], []>} : vector<256x128xbf16>, vector<128x128xbf16>, vector<256x128xf32> -> vector<256x128xf32>
      %32 = arith.truncf %31 : vector<256x128xf32> to vector<256x128xbf16>
      %c0_20 = arith.constant 0 : index
      %c0_21 = arith.constant 0 : index
      %33 = vector.load %arg16[%c0_20, %c0_21] : memref<256x128xbf16, #tpu.memory_space<vmem>>, vector<256x128xbf16>
      tpu.vector_store %arg16[%c0_20, %c0_21], %32 {strides = array<i32>} : memref<256x128xbf16, #tpu.memory_space<vmem>>, vector<256x128xbf16>,
    } else {
    }
    %c1_i32 = arith.constant 1 : i32
    %5 = arith.cmpi eq, %arg0, %c1_i32 : i32
    %c0_i32_2 = arith.constant 0 : i32
    %6 = arith.cmpi eq, %arg1, %c0_i32_2 : i32
    %7 = arith.andi %5, %6 : i1
    %8 = arith.extui %7 : i1 to i32
    %c0_i32_3 = arith.constant 0 : i32
    %9 = arith.cmpi ne, %8, %c0_i32_3 : i32
    scf.if %9 {
      %c0_15 = arith.constant 0 : index
      %c0_16 = arith.constant 0 : index
      %29 = vector.load %arg14[%c0_15, %c0_16] : memref<256x128xbf16, #tpu.memory_space<vmem>>, vector<256x128xbf16>
      %c0_17 = arith.constant 0 : index
      %c0_18 = arith.constant 0 : index
      %30 = vector.load %arg5[%c0_17, %c0_18] : memref<128x128xbf16, #tpu.memory_space<vmem>>, vector<128x128xbf16>
      %cst_19 = arith.constant dense<0.000000e+00> : vector<256x128xf32>
      %31 = tpu.matmul %29, %30, %cst_19 {dimension_numbers = #tpu.dot_dimension_numbers<[1], [0], [0], [1], [0, 0, 1, 1], [], []>} : vector<256x128xbf16>, vector<128x128xbf16>, vector<256x128xf32> -> vector<256x128xf32>
      %32 = arith.truncf %31 : vector<256x128xf32> to vector<256x128xbf16>
      %c0_20 = arith.constant 0 : index
      %c0_21 = arith.constant 0 : index
      %33 = vector.load %arg16[%c0_20, %c0_21] : memref<256x128xbf16, #tpu.memory_space<vmem>>, vector<256x128xbf16>
      tpu.vector_store %arg16[%c0_20, %c0_21], %32 {strides = array<i32>} : memref<256x128xbf16, #tpu.memory_space<vmem>>, vector<256x128xbf16>,
      %c0_22 = arith.constant 0 : index
      %c0_23 = arith.constant 0 : index
      %34 = vector.load %arg2[%c0_22, %c0_23] : memref<256x128xbf16, #tpu.memory_space<vmem>>, vector<256x128xbf16>
      %c0_24 = arith.constant 0 : index
      %c0_25 = arith.constant 0 : index
      %35 = vector.load %arg6[%c0_24, %c0_25] : memref<128x128xbf16, #tpu.memory_space<vmem>>, vector<128x128xbf16>
      %cst_26 = arith.constant dense<0.000000e+00> : vector<256x128xf32>
      %36 = tpu.matmul %34, %35, %cst_26 {dimension_numbers = #tpu.dot_dimension_numbers<[1], [0], [0], [1], [0, 0, 1, 1], [], []>} : vector<256x128xbf16>, vector<128x128xbf16>, vector<256x128xf32> -> vector<256x128xf32>
      %c0_27 = arith.constant 0 : index
      %c0_28 = arith.constant 0 : index
      %37 = vector.load %arg16[%c0_27, %c0_28] : memref<256x128xbf16, #tpu.memory_space<vmem>>, vector<256x128xbf16>
      %38 = arith.extf %37 : vector<256x128xbf16> to vector<256x128xf32>
      %39 = arith.addf %36, %38 : vector<256x128xf32>
      %40 = arith.truncf %39 : vector<256x128xf32> to vector<256x128xbf16>
      %c0_29 = arith.constant 0 : index
      %c0_30 = arith.constant 0 : index
      %41 = vector.load %arg16[%c0_29, %c0_30] : memref<256x128xbf16, #tpu.memory_space<vmem>>, vector<256x128xbf16>
      tpu.vector_store %arg16[%c0_29, %c0_30], %40 {strides = array<i32>} : memref<256x128xbf16, #tpu.memory_space<vmem>>, vector<256x128xbf16>,
    } else {
    }
    %c2_i32 = arith.constant 2 : i32
    %10 = arith.cmpi eq, %arg0, %c2_i32 : i32
    %c0_i32_4 = arith.constant 0 : i32
    %11 = arith.cmpi eq, %arg1, %c0_i32_4 : i32
    %12 = arith.andi %10, %11 : i1
    %13 = arith.extui %12 : i1 to i32
    %c0_i32_5 = arith.constant 0 : i32
    %14 = arith.cmpi ne, %13, %c0_i32_5 : i32
    scf.if %14 {
      %c0_15 = arith.constant 0 : index
      %c0_16 = arith.constant 0 : index
      %29 = vector.load %arg15[%c0_15, %c0_16] : memref<256x128xbf16, #tpu.memory_space<vmem>>, vector<256x128xbf16>
      %c0_17 = arith.constant 0 : index
      %c0_18 = arith.constant 0 : index
      %30 = vector.load %arg7[%c0_17, %c0_18] : memref<128x128xbf16, #tpu.memory_space<vmem>>, vector<128x128xbf16>
      %cst_19 = arith.constant dense<0.000000e+00> : vector<256x128xf32>
      %31 = tpu.matmul %29, %30, %cst_19 {dimension_numbers = #tpu.dot_dimension_numbers<[1], [0], [0], [1], [0, 0, 1, 1], [], []>} : vector<256x128xbf16>, vector<128x128xbf16>, vector<256x128xf32> -> vector<256x128xf32>
      %32 = arith.truncf %31 : vector<256x128xf32> to vector<256x128xbf16>
      %c0_20 = arith.constant 0 : index
      %c0_21 = arith.constant 0 : index
      %33 = vector.load %arg16[%c0_20, %c0_21] : memref<256x128xbf16, #tpu.memory_space<vmem>>, vector<256x128xbf16>
      tpu.vector_store %arg16[%c0_20, %c0_21], %32 {strides = array<i32>} : memref<256x128xbf16, #tpu.memory_space<vmem>>, vector<256x128xbf16>,
      %c0_22 = arith.constant 0 : index
      %c0_23 = arith.constant 0 : index
      %34 = vector.load %arg14[%c0_22, %c0_23] : memref<256x128xbf16, #tpu.memory_space<vmem>>, vector<256x128xbf16>
      %c0_24 = arith.constant 0 : index
      %c0_25 = arith.constant 0 : index
      %35 = vector.load %arg8[%c0_24, %c0_25] : memref<128x128xbf16, #tpu.memory_space<vmem>>, vector<128x128xbf16>
      %cst_26 = arith.constant dense<0.000000e+00> : vector<256x128xf32>
      %36 = tpu.matmul %34, %35, %cst_26 {dimension_numbers = #tpu.dot_dimension_numbers<[1], [0], [0], [1], [0, 0, 1, 1], [], []>} : vector<256x128xbf16>, vector<128x128xbf16>, vector<256x128xf32> -> vector<256x128xf32>
      %c0_27 = arith.constant 0 : index
      %c0_28 = arith.constant 0 : index
      %37 = vector.load %arg16[%c0_27, %c0_28] : memref<256x128xbf16, #tpu.memory_space<vmem>>, vector<256x128xbf16>
      %38 = arith.extf %37 : vector<256x128xbf16> to vector<256x128xf32>
      %39 = arith.addf %36, %38 : vector<256x128xf32>
      %40 = arith.truncf %39 : vector<256x128xf32> to vector<256x128xbf16>
      %c0_29 = arith.constant 0 : index
      %c0_30 = arith.constant 0 : index
      %41 = vector.load %arg16[%c0_29, %c0_30] : memref<256x128xbf16, #tpu.memory_space<vmem>>, vector<256x128xbf16>
      tpu.vector_store %arg16[%c0_29, %c0_30], %40 {strides = array<i32>} : memref<256x128xbf16, #tpu.memory_space<vmem>>, vector<256x128xbf16>,
      %c0_31 = arith.constant 0 : index
      %c0_32 = arith.constant 0 : index
      %42 = vector.load %arg2[%c0_31, %c0_32] : memref<256x128xbf16, #tpu.memory_space<vmem>>, vector<256x128xbf16>
      %c0_33 = arith.constant 0 : index
      %c0_34 = arith.constant 0 : index
      %43 = vector.load %arg9[%c0_33, %c0_34] : memref<128x128xbf16, #tpu.memory_space<vmem>>, vector<128x128xbf16>
      %cst_35 = arith.constant dense<0.000000e+00> : vector<256x128xf32>
      %44 = tpu.matmul %42, %43, %cst_35 {dimension_numbers = #tpu.dot_dimension_numbers<[1], [0], [0], [1], [0, 0, 1, 1], [], []>} : vector<256x128xbf16>, vector<128x128xbf16>, vector<256x128xf32> -> vector<256x128xf32>
      %c0_36 = arith.constant 0 : index
      %c0_37 = arith.constant 0 : index
      %45 = vector.load %arg16[%c0_36, %c0_37] : memref<256x128xbf16, #tpu.memory_space<vmem>>, vector<256x128xbf16>
      %46 = arith.extf %45 : vector<256x128xbf16> to vector<256x128xf32>
      %47 = arith.addf %44, %46 : vector<256x128xf32>
      %48 = arith.truncf %47 : vector<256x128xf32> to vector<256x128xbf16>
      %c0_38 = arith.constant 0 : index
      %c0_39 = arith.constant 0 : index
      %49 = vector.load %arg16[%c0_38, %c0_39] : memref<256x128xbf16, #tpu.memory_space<vmem>>, vector<256x128xbf16>
      tpu.vector_store %arg16[%c0_38, %c0_39], %48 {strides = array<i32>} : memref<256x128xbf16, #tpu.memory_space<vmem>>, vector<256x128xbf16>,
    } else {
    }
    %c0 = arith.constant 0 : index
    %c0_6 = arith.constant 0 : index
    %15 = vector.load %arg3[%c0, %c0_6] : memref<256x256xbf16, #tpu.memory_space<vmem>>, vector<256x256xbf16>
    %c0_7 = arith.constant 0 : index
    %c0_8 = arith.constant 0 : index
    %16 = vector.load %arg16[%c0_7, %c0_8] : memref<256x128xbf16, #tpu.memory_space<vmem>>, vector<256x128xbf16>
    %cst = arith.constant dense<0.000000e+00> : vector<256x128xf32>
    %17 = tpu.matmul %15, %16, %cst {dimension_numbers = #tpu.dot_dimension_numbers<[1], [0], [0], [1], [0, 0, 1, 1], [], []>} : vector<256x256xbf16>, vector<256x128xbf16>, vector<256x128xf32> -> vector<256x128xf32>
    %c256_i32 = arith.constant 256 : i32
    %18 = arith.muli %arg1, %c256_i32 : i32
    %19 = tpu.assume_multiple %18, 256 : i32
    %c0_i32_9 = arith.constant 0 : i32
    %20 = arith.cmpi eq, %arg0, %c0_i32_9 : i32
    %21 = arith.extui %20 : i1 to i32
    %c0_i32_10 = arith.constant 0 : i32
    %22 = arith.cmpi ne, %21, %c0_i32_10 : i32
    scf.if %22 {
      %c0_15 = arith.constant 0 : index
      %c0_16 = arith.constant 0 : index
      %29 = vector.load %arg10[%c0_15, %c0_16] : memref<1x128xf32, #tpu.memory_space<vmem>>, vector<1x128xf32>
      %30 = vector.broadcast %29 : vector<1x128xf32> to vector<256x128xf32>
      %31 = arith.addf %17, %30 : vector<256x128xf32>
      %cst_17 = arith.constant 0.000000e+00 : f32
      %32 = vector.broadcast %cst_17 : f32 to vector<256x128xf32>
      %33 = arith.maximumf %31, %32 : vector<256x128xf32>
      %34 = arith.truncf %33 : vector<256x128xf32> to vector<256x128xbf16>
      %35 = arith.index_cast %19 : i32 to index
      %c0_18 = arith.constant 0 : index
      %36 = vector.load %arg14[%35, %c0_18] : memref<256x128xbf16, #tpu.memory_space<vmem>>, vector<256x128xbf16>
      tpu.vector_store %arg14[%35, %c0_18], %34 {strides = array<i32>} : memref<256x128xbf16, #tpu.memory_space<vmem>>, vector<256x128xbf16>,
    } else {
    }
    %c1_i32_11 = arith.constant 1 : i32
    %23 = arith.cmpi eq, %arg0, %c1_i32_11 : i32
    %24 = arith.extui %23 : i1 to i32
    %c0_i32_12 = arith.constant 0 : i32
    %25 = arith.cmpi ne, %24, %c0_i32_12 : i32
    scf.if %25 {
      %c0_15 = arith.constant 0 : index
      %c0_16 = arith.constant 0 : index
      %29 = vector.load %arg11[%c0_15, %c0_16] : memref<1x128xf32, #tpu.memory_space<vmem>>, vector<1x128xf32>
      %30 = vector.broadcast %29 : vector<1x128xf32> to vector<256x128xf32>
      %31 = arith.addf %17, %30 : vector<256x128xf32>
      %cst_17 = arith.constant 0.000000e+00 : f32
      %32 = vector.broadcast %cst_17 : f32 to vector<256x128xf32>
      %33 = arith.maximumf %31, %32 : vector<256x128xf32>
      %34 = arith.truncf %33 : vector<256x128xf32> to vector<256x128xbf16>
      %35 = arith.index_cast %19 : i32 to index
      %c0_18 = arith.constant 0 : index
      %36 = vector.load %arg15[%35, %c0_18] : memref<256x128xbf16, #tpu.memory_space<vmem>>, vector<256x128xbf16>
      tpu.vector_store %arg15[%35, %c0_18], %34 {strides = array<i32>} : memref<256x128xbf16, #tpu.memory_space<vmem>>, vector<256x128xbf16>,
    } else {
    }
    %c2_i32_13 = arith.constant 2 : i32
    %26 = arith.cmpi eq, %arg0, %c2_i32_13 : i32
    %27 = arith.extui %26 : i1 to i32
    %c0_i32_14 = arith.constant 0 : i32
    %28 = arith.cmpi ne, %27, %c0_i32_14 : i32
    scf.if %28 {
      %c0_15 = arith.constant 0 : index
      %c0_16 = arith.constant 0 : index
      %29 = vector.load %arg12[%c0_15, %c0_16] : memref<1x128xf32, #tpu.memory_space<vmem>>, vector<1x128xf32>
      %30 = vector.broadcast %29 : vector<1x128xf32> to vector<256x128xf32>
      %31 = arith.addf %17, %30 : vector<256x128xf32>
      %cst_17 = arith.constant 0.000000e+00 : f32
      %32 = vector.broadcast %cst_17 : f32 to vector<256x128xf32>
      %33 = arith.maximumf %31, %32 : vector<256x128xf32>
      %34 = tpu.iota {dimensions = array<i32: 1>} : vector<256x128xi32>
      %c7_i32 = arith.constant 7 : i32
      %35 = vector.broadcast %c7_i32 : i32 to vector<256x128xi32>
      %36 = arith.cmpi slt, %34, %35 : vector<256x128xi32>
      %cst_18 = arith.constant -1.000000e+30 : f32
      %37 = vector.broadcast %cst_18 : f32 to vector<256x128xf32>
      %38 = arith.select %36, %33, %37 : vector<256x128xi1>, vector<256x128xf32>
      %cst_19 = arith.constant dense<0xFF800000> : vector<256xf32>
      %39 = vector.multi_reduction <maximumf>, %38, %cst_19 [1] : vector<256x128xf32> to vector<256xf32>
      %40 = vector.shape_cast %39 : vector<256xf32> to vector<256x1xf32>
      %41 = vector.broadcast %40 : vector<256x1xf32> to vector<256x128xf32>
      %42 = arith.subf %38, %41 : vector<256x128xf32>
      %43 = math.exp %42 : vector<256x128xf32>
      %cst_20 = arith.constant 0.000000e+00 : f32
      %44 = vector.broadcast %cst_20 : f32 to vector<256x128xf32>
      %45 = arith.select %36, %43, %44 : vector<256x128xi1>, vector<256x128xf32>
      %cst_21 = arith.constant dense<0.000000e+00> : vector<256xf32>
      %46 = vector.multi_reduction <add>, %45, %cst_21 [1] : vector<256x128xf32> to vector<256xf32>
      %47 = vector.shape_cast %46 : vector<256xf32> to vector<256x1xf32>
      %48 = math.log %47 : vector<256x1xf32>
      %49 = vector.broadcast %40 : vector<256x1xf32> to vector<256x128xf32>
      %50 = arith.subf %38, %49 : vector<256x128xf32>
      %51 = vector.broadcast %48 : vector<256x1xf32> to vector<256x128xf32>
      %52 = arith.subf %50, %51 : vector<256x128xf32>
      %c0_22 = arith.constant 0 : index
      %c0_23 = arith.constant 0 : index
      %53 = vector.load %arg13[%c0_22, %c0_23] : memref<256x128xf32, #tpu.memory_space<vmem>>, vector<256x128xf32>
      tpu.vector_store %arg13[%c0_22, %c0_23], %52 {strides = array<i32>} : memref<256x128xf32, #tpu.memory_space<vmem>>, vector<256x128xf32>,
    } else {
    }
    return
  }
  func.func @transform_0(%arg0: i32, %arg1: i32) -> (i32, i32) {
    %c0_i32 = arith.constant 0 : i32
    %c0_i32_0 = arith.constant 0 : i32
    %c0_i32_1 = arith.constant 0 : i32
    return %c0_i32, %c0_i32_0 : i32, i32
  }
  func.func @transform_1(%arg0: i32, %arg1: i32) -> (i32, i32) {
    %c0_i32 = arith.constant 0 : i32
    %c0_i32_0 = arith.constant 0 : i32
    return %arg1, %c0_i32 : i32, i32
  }
  func.func @transform_2(%arg0: i32, %arg1: i32) -> (i32, i32) {
    %c0_i32 = arith.constant 0 : i32
    %c0_i32_0 = arith.constant 0 : i32
    %c0_i32_1 = arith.constant 0 : i32
    return %c0_i32, %c0_i32_0 : i32, i32
  }
  func.func @transform_3(%arg0: i32, %arg1: i32) -> (i32, i32) {
    %c0_i32 = arith.constant 0 : i32
    %c0_i32_0 = arith.constant 0 : i32
    %c0_i32_1 = arith.constant 0 : i32
    return %c0_i32, %c0_i32_0 : i32, i32
  }
  func.func @transform_4(%arg0: i32, %arg1: i32) -> (i32, i32) {
    %c0_i32 = arith.constant 0 : i32
    %c0_i32_0 = arith.constant 0 : i32
    %c0_i32_1 = arith.constant 0 : i32
    return %c0_i32, %c0_i32_0 : i32, i32
  }
  func.func @transform_5(%arg0: i32, %arg1: i32) -> (i32, i32) {
    %c0_i32 = arith.constant 0 : i32
    %c0_i32_0 = arith.constant 0 : i32
    %c0_i32_1 = arith.constant 0 : i32
    return %c0_i32, %c0_i32_0 : i32, i32
  }
  func.func @transform_6(%arg0: i32, %arg1: i32) -> (i32, i32) {
    %c0_i32 = arith.constant 0 : i32
    %c0_i32_0 = arith.constant 0 : i32
    %c0_i32_1 = arith.constant 0 : i32
    return %c0_i32, %c0_i32_0 : i32, i32
  }
  func.func @transform_7(%arg0: i32, %arg1: i32) -> (i32, i32) {
    %c0_i32 = arith.constant 0 : i32
    %c0_i32_0 = arith.constant 0 : i32
    %c0_i32_1 = arith.constant 0 : i32
    return %c0_i32, %c0_i32_0 : i32, i32
  }
  func.func @transform_8(%arg0: i32, %arg1: i32) -> (i32, i32) {
    %c0_i32 = arith.constant 0 : i32
    %c0_i32_0 = arith.constant 0 : i32
    %c0_i32_1 = arith.constant 0 : i32
    return %c0_i32, %c0_i32_0 : i32, i32
  }
  func.func @transform_9(%arg0: i32, %arg1: i32) -> (i32, i32) {
    %c0_i32 = arith.constant 0 : i32
    %c0_i32_0 = arith.constant 0 : i32
    %c0_i32_1 = arith.constant 0 : i32
    return %c0_i32, %c0_i32_0 : i32, i32
  }
  func.func @transform_10(%arg0: i32, %arg1: i32) -> (i32, i32) {
    %c0_i32 = arith.constant 0 : i32
    %c0_i32_0 = arith.constant 0 : i32
    %c0_i32_1 = arith.constant 0 : i32
    return %c0_i32, %c0_i32_0 : i32, i32
  }
  func.func @transform_11(%arg0: i32, %arg1: i32) -> (i32, i32) {
    %c0_i32 = arith.constant 0 : i32
    %c0_i32_0 = arith.constant 0 : i32
    return %arg1, %c0_i32 : i32, i32
  }
}

</mosaic_0001>

<llo_original>
// kernel: tpu_custom_call.1
$region0: #{tpu_custom_call.1}
  #allocation0 [shape = 'u32[]', space=smem, size = 0x4, offset = 0x4, fixed_abs, tag = 'smem constant byte address 0x4 - core index']
  #allocation1 [shape = 'u32[72,128]{1,0:T(1,128)}', space=vmem, size = 0x9000, scoped, tag = 'internal scratch']
  #allocation2 [shape = 'bf16[256,128]{1,0:T(8,128)(2,1)}', space=vmem, size = 0x10000, scoped, tag = 'scratch operand']
  #allocation3 [shape = 'bf16[256,128]{1,0:T(8,128)(2,1)}', space=vmem, size = 0x10000, scoped, tag = 'scratch operand']
  #allocation4 [shape = 'bf16[256,128]{1,0:T(8,128)(2,1)}', space=vmem, size = 0x10000, scoped, tag = 'scratch operand']
  %s0 = inlined_call_operand.hbm [shape: bf16[256,128], index: 0, kind: input, shape index: {}]
  %s1 = inlined_call_operand.hbm [shape: bf16[256,256], index: 1, kind: input, shape index: {}]
  %s2 = inlined_call_operand.hbm [shape: bf16[128,128], index: 2, kind: input, shape index: {}]
  %s3 = inlined_call_operand.hbm [shape: bf16[128,128], index: 3, kind: input, shape index: {}]
  %s4 = inlined_call_operand.hbm [shape: bf16[128,128], index: 4, kind: input, shape index: {}]
  %s5 = inlined_call_operand.hbm [shape: bf16[128,128], index: 5, kind: input, shape index: {}]
  %s6 = inlined_call_operand.hbm [shape: bf16[128,128], index: 6, kind: input, shape index: {}]
  %s7 = inlined_call_operand.hbm [shape: bf16[128,128], index: 7, kind: input, shape index: {}]
  %s8 = inlined_call_operand.vmem [shape: f32[1,128], index: 8, kind: input, shape index: {}]
  %s9 = inlined_call_operand.vmem [shape: f32[1,128], index: 9, kind: input, shape index: {}]
  %s10 = inlined_call_operand.vmem [shape: f32[1,128], index: 10, kind: input, shape index: {}]
  %s11 = inlined_call_operand.hbm [shape: f32[256,128], index: 11, kind: output, shape index: {}]
  %s12 = sld [smem:[#allocation0]]
  $region133: #{tpu_custom_call.1} parent=0
    _
  %s14 = ssub.s32 1, %s12
  %s15 = scalar_select 0, %s14, %s12
  $region1: #{tpu_custom_call.1} parent=0
    #allocation5 [shape = 'u8[65536]{0}', space=vmem, size = 0x10000, scoped, tag = 'input window, operand 0, single buffered']
    #allocation6 [shape = 's32[2]{0}', space=sflag, size = 0x8, scoped, tag = 'scoped memory for tpu_custom_call.1']
    #allocation7 [shape = 's32[2]{0}', space=sflag, size = 0x8, scoped, tag = 'scoped memory for tpu_custom_call.1']
    #allocation8 [shape = 'u8[131072]{0}', space=vmem, size = 0x20000, scoped, tag = 'input window, operand 1, single buffered']
    #allocation9 [shape = 's32[1]{0}', space=sflag, size = 0x4, scoped, tag = 'scoped memory for tpu_custom_call.1']
    #allocation10 [shape = 'u8[32768]{0}', space=vmem, size = 0x8000, scoped, tag = 'input window, operand 2, single buffered']
    #allocation11 [shape = 'u8[32768]{0}', space=vmem, size = 0x8000, scoped, tag = 'input window, operand 3, single buffered']
    #allocation12 [shape = 's32[1]{0}', space=sflag, size = 0x4, scoped, tag = 'scoped memory for tpu_custom_call.1']
    #allocation13 [shape = 'u8[32768]{0}', space=vmem, size = 0x8000, scoped, tag = 'input window, operand 4, single buffered']
    #allocation14 [shape = 'u8[32768]{0}', space=vmem, size = 0x8000, scoped, tag = 'input window, operand 5, single buffered']
    #allocation15 [shape = 's32[1]{0}', space=sflag, size = 0x4, scoped, tag = 'scoped memory for tpu_custom_call.1']
    #allocation16 [shape = 'u8[32768]{0}', space=vmem, size = 0x8000, scoped, tag = 'input window, operand 6, single buffered']
    #allocation17 [shape = 'u8[32768]{0}', space=vmem, size = 0x8000, scoped, tag = 'input window, operand 7, single buffered']
    #allocation18 [shape = 's32[1]{0}', space=sflag, size = 0x4, scoped, tag = 'scoped memory for tpu_custom_call.1']
    #allocation19 [shape = 'u8[131072]{0}', space=vmem, size = 0x20000, scoped, tag = 'output window, operand 0, single buffered']
    %16 = vsyncpa [#allocation6], 0
    %17 = vsyncpa [#allocation9], 0
    %18 = vsyncpa [#allocation12], 0
    %19 = vsyncpa [#allocation15], 0
    %20 = vsyncpa [#allocation18], 0
    %21 = vsyncpa [#allocation7], 0
    loop: start=0, step=1, limit=5
    $region2: #{tpu_custom_call.1} parent=1 // loop_pre_header
      _
    $region3: #{tpu_custom_call.1} parent=1 // loop_header
      %s23 = sphi 0, %s27
      %p24 = scmp.ge.s32.totalorder %s23, 5
      %s30 = sphi 0, %s42
      %s31 = sphi 0, %s38
      %s32 = sphi 0, %s30
      %s33 = sphi 0, %s31
      %s34 = sphi 0, %s32
      %s35 = sphi 0, %s33
      %s43 = sphi 0, %s43
      %s45 = sphi 0, %s43
      %s46 = sphi 0, %s45
      %s60 = sphi 0, %s46
      %s66 = sphi 0, %s68
      %s69 = sphi 0, %s66
      %s70 = sphi 0, %s69
      %s86 = sphi 0, %s70
      %s90 = sphi 0, %s90
      %s92 = sphi 0, %s90
      %s93 = sphi 0, %s92
      %s107 = sphi 0, %s93
      %s111 = sphi 0, %s111
      %s113 = sphi 0, %s111
      %s114 = sphi 0, %s113
      %s128 = sphi 0, %s114
      %s132 = sphi 0, %s132
      %s134 = sphi 0, %s132
      %s135 = sphi 0, %s134
      %s149 = sphi 0, %s135
      %s153 = sphi 0, %s153
      %s155 = sphi 0, %s153
      %s156 = sphi 0, %s155
      %s170 = sphi 0, %s156
      %s174 = sphi 0, %s174
      %s176 = sphi 0, %s174
      %s177 = sphi 0, %s176
      %s191 = sphi 0, %s177
      %s195 = sphi 0, %s195
      %s197 = sphi 0, %s195
      %s198 = sphi 0, %s197
      %s212 = sphi 0, %s198
      %s216 = sphi 0, %s216
      %s218 = sphi 0, %s216
      %s219 = sphi 0, %s218
      %s233 = sphi 0, %s219
      %s237 = sphi 0, %s237
      %s239 = sphi 0, %s237
      %s240 = sphi 0, %s239
      %s254 = sphi 0, %s240
      %s258 = sphi 0, %s258
      %s260 = sphi 0, %s258
      %s261 = sphi 0, %s260
      %s275 = sphi 0, %s261
      %s281 = sphi 0, %s283
      %s284 = sphi 0, %s281
      %s285 = sphi 0, %s284
      %s301 = sphi 0, %s285
    $region4: #{tpu_custom_call.1} parent=1 // loop_header_branch
      %26 = sbr.rel (%p24) target = $region8
    $region5: #{tpu_custom_call.1} parent=1 // loop_body
      %s28 = ssub.s32 %s23, 1
      %s29 = ssub.s32 %s23, 2
      %s36 = sadd.s32 1, %s31
      %p37 = scmp.ge.s32.totalorder %s36, 1
      %s38 = scalar_select %p37, 0, %s36
      %s39 = sadd.s32 1, %s30
      %s40 = scalar_select %p37, %s39, %s30
      %p41 = scmp.ge.s32.totalorder %s40, 3
      %s42 = scalar_select %p41, 0, %s40
      %s44 = sadd.s32 %s43, 1
      %p47 = scmp.eq.s32.totalorder %s23, 2
      %p48 = scmp.ne.s32.totalorder %s43, %s45
      %p49 = scmp.eq.s32.totalorder %s23, 0
      %p50 = por %p48, %p49
      %p51 = scmp.ne.s32.totalorder %s43, %s45
      %p52 = scmp.eq.s32.totalorder %s28, 2
      %p53 = por %p51, %p52
      %p54 = scmp.ne.s32.totalorder %s45, %s46
      %p55 = scmp.eq.s32.totalorder %s28, 0
      %p56 = por %p54, %p55
      %p57 = scmp.ne.s32.totalorder %s45, %s46
      %p58 = scmp.eq.s32.totalorder %s29, 2
      %p59 = por %p57, %p58
      %p61 = scmp.ne.s32.totalorder %s46, %s60
      %p62 = scmp.eq.s32.totalorder %s29, 0
      %p63 = por %p61, %p62
      %s64 = ssub.s32 %s31, %s38
      %p65 = scmp.eq.s32.totalorder %s64, 0
      %s67 = sadd.s32 %s66, 1
      %s68 = scalar_select %p65, %s66, %s67
      %p71 = pneg %p65
      %p72 = scmp.eq.s32.totalorder %s23, 2
      %p73 = por %p71, %p72
      %p74 = scmp.ne.s32.totalorder %s66, %s69
      %p75 = scmp.eq.s32.totalorder %s23, 0
      %p76 = por %p74, %p75
      %p77 = scmp.ne.s32.totalorder %s66, %s69
      %p78 = scmp.eq.s32.totalorder %s28, 2
      %p79 = por %p77, %p78
      %p80 = scmp.ne.s32.totalorder %s69, %s70
      %p81 = scmp.eq.s32.totalorder %s28, 0
      %p82 = por %p80, %p81
      %p83 = scmp.ne.s32.totalorder %s69, %s70
      %p84 = scmp.eq.s32.totalorder %s29, 2
      %p85 = por %p83, %p84
      %p87 = scmp.ne.s32.totalorder %s70, %s86
      %p88 = scmp.eq.s32.totalorder %s29, 0
      %p89 = por %p87, %p88
      %s91 = sadd.s32 %s90, 1
      %p94 = scmp.eq.s32.totalorder %s23, 2
      %p95 = scmp.ne.s32.totalorder %s90, %s92
      %p96 = scmp.eq.s32.totalorder %s23, 0
      %p97 = por %p95, %p96
      %p98 = scmp.ne.s32.totalorder %s90, %s92
      %p99 = scmp.eq.s32.totalorder %s28, 2
      %p100 = por %p98, %p99
      %p101 = scmp.ne.s32.totalorder %s92, %s93
      %p102 = scmp.eq.s32.totalorder %s28, 0
      %p103 = por %p101, %p102
      %p104 = scmp.ne.s32.totalorder %s92, %s93
      %p105 = scmp.eq.s32.totalorder %s29, 2
      %p106 = por %p104, %p105
      %p108 = scmp.ne.s32.totalorder %s93, %s107
      %p109 = scmp.eq.s32.totalorder %s29, 0
      %p110 = por %p108, %p109
      %s112 = sadd.s32 %s111, 1
      %p115 = scmp.eq.s32.totalorder %s23, 2
      %p116 = scmp.ne.s32.totalorder %s111, %s113
      %p117 = scmp.eq.s32.totalorder %s23, 0
      %p118 = por %p116, %p117
      %p119 = scmp.ne.s32.totalorder %s111, %s113
      %p120 = scmp.eq.s32.totalorder %s28, 2
      %p121 = por %p119, %p120
      %p122 = scmp.ne.s32.totalorder %s113, %s114
      %p123 = scmp.eq.s32.totalorder %s28, 0
      %p124 = por %p122, %p123
      %p125 = scmp.ne.s32.totalorder %s113, %s114
      %p126 = scmp.eq.s32.totalorder %s29, 2
      %p127 = por %p125, %p126
      %p129 = scmp.ne.s32.totalorder %s114, %s128
      %p130 = scmp.eq.s32.totalorder %s29, 0
      %p131 = por %p129, %p130
      %s133 = sadd.s32 %s132, 1
      %p136 = scmp.eq.s32.totalorder %s23, 2
      %p137 = scmp.ne.s32.totalorder %s132, %s134
      %p138 = scmp.eq.s32.totalorder %s23, 0
      %p139 = por %p137, %p138
      %p140 = scmp.ne.s32.totalorder %s132, %s134
      %p141 = scmp.eq.s32.totalorder %s28, 2
      %p142 = por %p140, %p141
      %p143 = scmp.ne.s32.totalorder %s134, %s135
      %p144 = scmp.eq.s32.totalorder %s28, 0
      %p145 = por %p143, %p144
      %p146 = scmp.ne.s32.totalorder %s134, %s135
      %p147 = scmp.eq.s32.totalorder %s29, 2
      %p148 = por %p146, %p147
      %p150 = scmp.ne.s32.totalorder %s135, %s149
      %p151 = scmp.eq.s32.totalorder %s29, 0
      %p152 = por %p150, %p151
      %s154 = sadd.s32 %s153, 1
      %p157 = scmp.eq.s32.totalorder %s23, 2
      %p158 = scmp.ne.s32.totalorder %s153, %s155
      %p159 = scmp.eq.s32.totalorder %s23, 0
      %p160 = por %p158, %p159
      %p161 = scmp.ne.s32.totalorder %s153, %s155
      %p162 = scmp.eq.s32.totalorder %s28, 2
      %p163 = por %p161, %p162
      %p164 = scmp.ne.s32.totalorder %s155, %s156
      %p165 = scmp.eq.s32.totalorder %s28, 0
      %p166 = por %p164, %p165
      %p167 = scmp.ne.s32.totalorder %s155, %s156
      %p168 = scmp.eq.s32.totalorder %s29, 2
      %p169 = por %p167, %p168
      %p171 = scmp.ne.s32.totalorder %s156, %s170
      %p172 = scmp.eq.s32.totalorder %s29, 0
      %p173 = por %p171, %p172
      %s175 = sadd.s32 %s174, 1
      %p178 = scmp.eq.s32.totalorder %s23, 2
      %p179 = scmp.ne.s32.totalorder %s174, %s176
      %p180 = scmp.eq.s32.totalorder %s23, 0
      %p181 = por %p179, %p180
      %p182 = scmp.ne.s32.totalorder %s174, %s176
      %p183 = scmp.eq.s32.totalorder %s28, 2
      %p184 = por %p182, %p183
      %p185 = scmp.ne.s32.totalorder %s176, %s177
      %p186 = scmp.eq.s32.totalorder %s28, 0
      %p187 = por %p185, %p186
      %p188 = scmp.ne.s32.totalorder %s176, %s177
      %p189 = scmp.eq.s32.totalorder %s29, 2
      %p190 = por %p188, %p189
      %p192 = scmp.ne.s32.totalorder %s177, %s191
      %p193 = scmp.eq.s32.totalorder %s29, 0
      %p194 = por %p192, %p193
      %s196 = sadd.s32 %s195, 1
      %p199 = scmp.eq.s32.totalorder %s23, 2
      %p200 = scmp.ne.s32.totalorder %s195, %s197
      %p201 = scmp.eq.s32.totalorder %s23, 0
      %p202 = por %p200, %p201
      %p203 = scmp.ne.s32.totalorder %s195, %s197
      %p204 = scmp.eq.s32.totalorder %s28, 2
      %p205 = por %p203, %p204
      %p206 = scmp.ne.s32.totalorder %s197, %s198
      %p207 = scmp.eq.s32.totalorder %s28, 0
      %p208 = por %p206, %p207
      %p209 = scmp.ne.s32.totalorder %s197, %s198
      %p210 = scmp.eq.s32.totalorder %s29, 2
      %p211 = por %p209, %p210
      %p213 = scmp.ne.s32.totalorder %s198, %s212
      %p214 = scmp.eq.s32.totalorder %s29, 0
      %p215 = por %p213, %p214
      %s217 = sadd.s32 %s216, 1
      %p220 = scmp.eq.s32.totalorder %s23, 2
      %p221 = scmp.ne.s32.totalorder %s216, %s218
      %p222 = scmp.eq.s32.totalorder %s23, 0
      %p223 = por %p221, %p222
      %p224 = scmp.ne.s32.totalorder %s216, %s218
      %p225 = scmp.eq.s32.totalorder %s28, 2
      %p226 = por %p224, %p225
      %p227 = scmp.ne.s32.totalorder %s218, %s219
      %p228 = scmp.eq.s32.totalorder %s28, 0
      %p229 = por %p227, %p228
      %p230 = scmp.ne.s32.totalorder %s218, %s219
      %p231 = scmp.eq.s32.totalorder %s29, 2
      %p232 = por %p230, %p231
      %p234 = scmp.ne.s32.totalorder %s219, %s233
      %p235 = scmp.eq.s32.totalorder %s29, 0
      %p236 = por %p234, %p235
      %s238 = sadd.s32 %s237, 1
      %p241 = scmp.eq.s32.totalorder %s23, 2
      %p242 = scmp.ne.s32.totalorder %s237, %s239
      %p243 = scmp.eq.s32.totalorder %s23, 0
      %p244 = por %p242, %p243
      %p245 = scmp.ne.s32.totalorder %s237, %s239
      %p246 = scmp.eq.s32.totalorder %s28, 2
      %p247 = por %p245, %p246
      %p248 = scmp.ne.s32.totalorder %s239, %s240
      %p249 = scmp.eq.s32.totalorder %s28, 0
      %p250 = por %p248, %p249
      %p251 = scmp.ne.s32.totalorder %s239, %s240
      %p252 = scmp.eq.s32.totalorder %s29, 2
      %p253 = por %p251, %p252
      %p255 = scmp.ne.s32.totalorder %s240, %s254
      %p256 = scmp.eq.s32.totalorder %s29, 0
      %p257 = por %p255, %p256
      %s259 = sadd.s32 %s258, 1
      %p262 = scmp.eq.s32.totalorder %s23, 2
      %p263 = scmp.ne.s32.totalorder %s258, %s260
      %p264 = scmp.eq.s32.totalorder %s23, 0
      %p265 = por %p263, %p264
      %p266 = scmp.ne.s32.totalorder %s258, %s260
      %p267 = scmp.eq.s32.totalorder %s28, 2
      %p268 = por %p266, %p267
      %p269 = scmp.ne.s32.totalorder %s260, %s261
      %p270 = scmp.eq.s32.totalorder %s28, 0
      %p271 = por %p269, %p270
      %p272 = scmp.ne.s32.totalorder %s260, %s261
      %p273 = scmp.eq.s32.totalorder %s29, 2
      %p274 = por %p272, %p273
      %p276 = scmp.ne.s32.totalorder %s261, %s275
      %p277 = scmp.eq.s32.totalorder %s29, 0
      %p278 = por %p276, %p277
      %s279 = ssub.s32 %s31, %s38
      %p280 = scmp.eq.s32.totalorder %s279, 0
      %s282 = sadd.s32 %s281, 1
      %s283 = scalar_select %p280, %s281, %s282
      %p286 = pneg %p280
      %p287 = scmp.eq.s32.totalorder %s23, 2
      %p288 = por %p286, %p287
      %p289 = scmp.ne.s32.totalorder %s281, %s284
      %p290 = scmp.eq.s32.totalorder %s23, 0
      %p291 = por %p289, %p290
      %p292 = scmp.ne.s32.totalorder %s281, %s284
      %p293 = scmp.eq.s32.totalorder %s28, 2
      %p294 = por %p292, %p293
      %p295 = scmp.ne.s32.totalorder %s284, %s285
      %p296 = scmp.eq.s32.totalorder %s28, 0
      %p297 = por %p295, %p296
      %p298 = scmp.ne.s32.totalorder %s284, %s285
      %p299 = scmp.eq.s32.totalorder %s29, 2
      %p300 = por %p298, %p299
      %p302 = scmp.ne.s32.totalorder %s285, %s301
      %p303 = scmp.eq.s32.totalorder %s29, 0
      %p304 = por %p302, %p303
      %p305 = scmp.le.s32.totalorder 1, %s23
      %p306 = scmp.lt.s32.totalorder %s23, 4
      %p307 = pnand %p305, %p306
      %p308 = pneg %p307
      // Predicated region
      $region9: #{tpu_custom_call.1} parent=5 // pred_check
        _
      $region10: #{tpu_custom_call.1} parent=5 // pred_check_branch
        %310 = sbr.rel (%p307) target = $region12
      $region11: #{tpu_custom_call.1} parent=5 // pred_region
        %s311 = ssub.s32 %s23, 1
        // Predicated region
        $region13: #{tpu_custom_call.1} parent=11 // pred_check
          %p312 = pneg %p56
        $region14: #{tpu_custom_call.1} parent=11 // pred_check_branch
          %314 = sbr.rel (%p312) target = $region16
        $region15: #{tpu_custom_call.1} parent=11 // pred_region
          %316 = vsyncadd [#allocation6], 0
          %s317 = sshll.u32 %s0, 4
          %s318 = int_to_ptr.hbm [resolvable:$true] %s317
          %s319 = sshll.u32 [#allocation5], 4
          %s320 = int_to_ptr.vmem [resolvable:$true] %s319
          %325 = dma.hbm_to_vmem [thread:$0]  %s318, 2048, %s320, [#allocation6], 64, 64, 4
        $region16: #{tpu_custom_call.1} parent=11 // pred_fallthru
          _
        // Predicated region
        $region17: #{tpu_custom_call.1} parent=11 // pred_check
          %p326 = pneg %p82
        $region18: #{tpu_custom_call.1} parent=11 // pred_check_branch
          %328 = sbr.rel (%p326) target = $region20
        $region19: #{tpu_custom_call.1} parent=11 // pred_region
          %s329 = smul.u32 32, %s33
          %331 = vsyncadd [#allocation9], 0
          %s332 = smul.addr %s329, 2
          %s333 = smul.addr %s332, 4
          %s334 = scalar_lea.hbm %s1, %s333
          %s335 = sshll.u32 %s334, 4
          %s336 = int_to_ptr.hbm [resolvable:$true] %s335
          %s337 = sshll.u32 [#allocation8], 4
          %s338 = int_to_ptr.vmem [resolvable:$true] %s337
          %343 = dma.hbm_to_vmem [thread:$0]  %s336, 4096, %s338, [#allocation9], 128, 128, 8
        $region20: #{tpu_custom_call.1} parent=11 // pred_fallthru
          _
        // Predicated region
        $region21: #{tpu_custom_call.1} parent=11 // pred_check
          %p344 = pneg %p103
        $region22: #{tpu_custom_call.1} parent=11 // pred_check_branch
          %346 = sbr.rel (%p344) target = $region24
        $region23: #{tpu_custom_call.1} parent=11 // pred_region
          %348 = vsyncadd [#allocation9], 0
          %s349 = sshll.u32 %s2, 4
          %s350 = int_to_ptr.hbm [resolvable:$true] %s349
          %s351 = sshll.u32 [#allocation10], 4
          %s352 = int_to_ptr.vmem [resolvable:$true] %s351
          %357 = dma.hbm_to_vmem [thread:$0]  %s350, 1024, %s352, [#allocation9], 64, 64, 4
        $region24: #{tpu_custom_call.1} parent=11 // pred_fallthru
          _
        // Predicated region
        $region25: #{tpu_custom_call.1} parent=11 // pred_check
          %p358 = pneg %p124
        $region26: #{tpu_custom_call.1} parent=11 // pred_check_branch
          %360 = sbr.rel (%p358) target = $region28
        $region27: #{tpu_custom_call.1} parent=11 // pred_region
          %362 = vsyncadd [#allocation12], 0
          %s363 = sshll.u32 %s3, 4
          %s364 = int_to_ptr.hbm [resolvable:$true] %s363
          %s365 = sshll.u32 [#allocation11], 4
          %s366 = int_to_ptr.vmem [resolvable:$true] %s365
          %371 = dma.hbm_to_vmem [thread:$0]  %s364, 1024, %s366, [#allocation12], 64, 64, 4
        $region28: #{tpu_custom_call.1} parent=11 // pred_fallthru
          _
        // Predicated region
        $region29: #{tpu_custom_call.1} parent=11 // pred_check
          %p372 = pneg %p145
        $region30: #{tpu_custom_call.1} parent=11 // pred_check_branch
          %374 = sbr.rel (%p372) target = $region32
        $region31: #{tpu_custom_call.1} parent=11 // pred_region
          %376 = vsyncadd [#allocation12], 0
          %s377 = sshll.u32 %s4, 4
          %s378 = int_to_ptr.hbm [resolvable:$true] %s377
          %s379 = sshll.u32 [#allocation13], 4
          %s380 = int_to_ptr.vmem [resolvable:$true] %s379
          %385 = dma.hbm_to_vmem [thread:$0]  %s378, 1024, %s380, [#allocation12], 64, 64, 4
        $region32: #{tpu_custom_call.1} parent=11 // pred_fallthru
          _
        // Predicated region
        $region33: #{tpu_custom_call.1} parent=11 // pred_check
          %p386 = pneg %p166
        $region34: #{tpu_custom_call.1} parent=11 // pred_check_branch
          %388 = sbr.rel (%p386) target = $region36
        $region35: #{tpu_custom_call.1} parent=11 // pred_region
          %390 = vsyncadd [#allocation15], 0
          %s391 = sshll.u32 %s5, 4
          %s392 = int_to_ptr.hbm [resolvable:$true] %s391
          %s393 = sshll.u32 [#allocation14], 4
          %s394 = int_to_ptr.vmem [resolvable:$true] %s393
          %399 = dma.hbm_to_vmem [thread:$0]  %s392, 1024, %s394, [#allocation15], 64, 64, 4
        $region36: #{tpu_custom_call.1} parent=11 // pred_fallthru
          _
        // Predicated region
        $region37: #{tpu_custom_call.1} parent=11 // pred_check
          %p400 = pneg %p187
        $region38: #{tpu_custom_call.1} parent=11 // pred_check_branch
          %402 = sbr.rel (%p400) target = $region40
        $region39: #{tpu_custom_call.1} parent=11 // pred_region
          %404 = vsyncadd [#allocation15], 0
          %s405 = sshll.u32 %s6, 4
          %s406 = int_to_ptr.hbm [resolvable:$true] %s405
          %s407 = sshll.u32 [#allocation16], 4
          %s408 = int_to_ptr.vmem [resolvable:$true] %s407
          %413 = dma.hbm_to_vmem [thread:$0]  %s406, 1024, %s408, [#allocation15], 64, 64, 4
        $region40: #{tpu_custom_call.1} parent=11 // pred_fallthru
          _
        // Predicated region
        $region41: #{tpu_custom_call.1} parent=11 // pred_check
          %p414 = pneg %p208
        $region42: #{tpu_custom_call.1} parent=11 // pred_check_branch
          %416 = sbr.rel (%p414) target = $region44
        $region43: #{tpu_custom_call.1} parent=11 // pred_region
          %418 = vsyncadd [#allocation18], 0
          %s419 = sshll.u32 %s7, 4
          %s420 = int_to_ptr.hbm [resolvable:$true] %s419
          %s421 = sshll.u32 [#allocation17], 4
          %s422 = int_to_ptr.vmem [resolvable:$true] %s421
          %427 = dma.hbm_to_vmem [thread:$0]  %s420, 1024, %s422, [#allocation18], 64, 64, 4
        $region44: #{tpu_custom_call.1} parent=11 // pred_fallthru
          _
        // Predicated region
        $region45: #{tpu_custom_call.1} parent=11 // pred_check
          %p428 = pneg %p229
        $region46: #{tpu_custom_call.1} parent=11 // pred_check_branch
          %430 = sbr.rel (%p428) target = $region48
        $region47: #{tpu_custom_call.1} parent=11 // pred_region
          _
        $region48: #{tpu_custom_call.1} parent=11 // pred_fallthru
          _
        // Predicated region
        $region49: #{tpu_custom_call.1} parent=11 // pred_check
          %p431 = pneg %p250
        $region50: #{tpu_custom_call.1} parent=11 // pred_check_branch
          %433 = sbr.rel (%p431) target = $region52
        $region51: #{tpu_custom_call.1} parent=11 // pred_region
          _
        $region52: #{tpu_custom_call.1} parent=11 // pred_fallthru
          _
        // Predicated region
        $region53: #{tpu_custom_call.1} parent=11 // pred_check
          %p434 = pneg %p271
        $region54: #{tpu_custom_call.1} parent=11 // pred_check_branch
          %436 = sbr.rel (%p434) target = $region56
        $region55: #{tpu_custom_call.1} parent=11 // pred_region
          _
        $region56: #{tpu_custom_call.1} parent=11 // pred_fallthru
          _
      $region12: #{tpu_custom_call.1} parent=5 // pred_fallthru
        _
      %p437 = scmp.lt.s32.totalorder %s23, 3
      // Predicated region
      $region57: #{tpu_custom_call.1} parent=5 // pred_check
        %p438 = pneg %p437
      $region58: #{tpu_custom_call.1} parent=5 // pred_check_branch
        %440 = sbr.rel (%p438) target = $region60
      $region59: #{tpu_custom_call.1} parent=5 // pred_region
        _
      $region60: #{tpu_custom_call.1} parent=5 // pred_fallthru
        _
      %p441 = scmp.le.s32.totalorder 1, %s23
      %p442 = scmp.lt.s32.totalorder %s23, 4
      %p443 = pnand %p441, %p442
      %p444 = pneg %p443
      // Predicated region
      $region61: #{tpu_custom_call.1} parent=5 // pred_check
        _
      $region62: #{tpu_custom_call.1} parent=5 // pred_check_branch
        %446 = sbr.rel (%p443) target = $region64
      $region63: #{tpu_custom_call.1} parent=5 // pred_region
        %s447 = ssub.s32 %s23, 1
        // Predicated region
        $region65: #{tpu_custom_call.1} parent=63 // pred_check
          %p448 = pneg %p56
        $region66: #{tpu_custom_call.1} parent=63 // pred_check_branch
          %450 = sbr.rel (%p448) target = $region68
        $region67: #{tpu_custom_call.1} parent=63 // pred_region
          %452 = dma.done [#allocation6], 2048
        $region68: #{tpu_custom_call.1} parent=63 // pred_fallthru
          _
        // Predicated region
        $region69: #{tpu_custom_call.1} parent=63 // pred_check
          %p453 = pneg %p82
        $region70: #{tpu_custom_call.1} parent=63 // pred_check_branch
          %455 = sbr.rel (%p453) target = $region72
        $region71: #{tpu_custom_call.1} parent=63 // pred_region
          %457 = dma.done [#allocation9], 4096
        $region72: #{tpu_custom_call.1} parent=63 // pred_fallthru
          _
        // Predicated region
        $region73: #{tpu_custom_call.1} parent=63 // pred_check
          %p458 = pneg %p103
        $region74: #{tpu_custom_call.1} parent=63 // pred_check_branch
          %460 = sbr.rel (%p458) target = $region76
        $region75: #{tpu_custom_call.1} parent=63 // pred_region
          %462 = dma.done [#allocation9], 1024
        $region76: #{tpu_custom_call.1} parent=63 // pred_fallthru
          _
        // Predicated region
        $region77: #{tpu_custom_call.1} parent=63 // pred_check
          %p463 = pneg %p124
        $region78: #{tpu_custom_call.1} parent=63 // pred_check_branch
          %465 = sbr.rel (%p463) target = $region80
        $region79: #{tpu_custom_call.1} parent=63 // pred_region
          %467 = dma.done [#allocation12], 1024
        $region80: #{tpu_custom_call.1} parent=63 // pred_fallthru
          _
        // Predicated region
        $region81: #{tpu_custom_call.1} parent=63 // pred_check
          %p468 = pneg %p145
        $region82: #{tpu_custom_call.1} parent=63 // pred_check_branch
          %470 = sbr.rel (%p468) target = $region84
        $region83: #{tpu_custom_call.1} parent=63 // pred_region
          %472 = dma.done [#allocation12], 1024
        $region84: #{tpu_custom_call.1} parent=63 // pred_fallthru
          _
        // Predicated region
        $region85: #{tpu_custom_call.1} parent=63 // pred_check
          %p473 = pneg %p166
        $region86: #{tpu_custom_call.1} parent=63 // pred_check_branch
          %475 = sbr.rel (%p473) target = $region88
        $region87: #{tpu_custom_call.1} parent=63 // pred_region
          %477 = dma.done [#allocation15], 1024
        $region88: #{tpu_custom_call.1} parent=63 // pred_fallthru
          _
        // Predicated region
        $region89: #{tpu_custom_call.1} parent=63 // pred_check
          %p478 = pneg %p187
        $region90: #{tpu_custom_call.1} parent=63 // pred_check_branch
          %480 = sbr.rel (%p478) target = $region92
        $region91: #{tpu_custom_call.1} parent=63 // pred_region
          %482 = dma.done [#allocation15], 1024
        $region92: #{tpu_custom_call.1} parent=63 // pred_fallthru
          _
        // Predicated region
        $region93: #{tpu_custom_call.1} parent=63 // pred_check
          %p483 = pneg %p208
        $region94: #{tpu_custom_call.1} parent=63 // pred_check_branch
          %485 = sbr.rel (%p483) target = $region96
        $region95: #{tpu_custom_call.1} parent=63 // pred_region
          %487 = dma.done [#allocation18], 1024
        $region96: #{tpu_custom_call.1} parent=63 // pred_fallthru
          _
        %p488 = pneg %p56
        %p489 = pneg %p53
        %p490 = pneg %p82
        %p491 = pneg %p79
        %p492 = pneg %p103
        %p493 = pneg %p100
        %p494 = pneg %p124
        %p495 = pneg %p121
        %p496 = pneg %p145
        %p497 = pneg %p142
        %p498 = pneg %p166
        %p499 = pneg %p163
        %p500 = pneg %p187
        %p501 = pneg %p184
        %p502 = pneg %p208
        %p503 = pneg %p205
        %p504 = pneg %p229
        %p505 = pneg %p226
        %p506 = pneg %p250
        %p507 = pneg %p247
        %p508 = pneg %p271
        %p509 = pneg %p268
        %p510 = pneg %p297
        %p511 = pneg %p294
        %s512 = smul.u32 32, %s33
        %s513 = smul.u32 32, %s33
        %p514 = scmp.eq.s32.totalorder %s32, 0
        %p515 = scmp.eq.s32.totalorder %s33, 0
        %p516 = pnand %p514, %p515
        %p517 = pneg %p516
        // Predicated region
        $region97: #{tpu_custom_call.1} parent=63 // pred_check
          _
        $region98: #{tpu_custom_call.1} parent=63 // pred_check_branch
          %519 = sbr.rel (%p516) target = $region100
        $region99: #{tpu_custom_call.1} parent=63 // pred_region
          %v520 = vld [vmem:[#allocation5] sm:$0xf]
          %v521 = vld [vmem:[#allocation5 + $0x4] sm:$0xf]
          %v522 = vld [vmem:[#allocation5 + $0x8] sm:$0xf]
          %v523 = vld [vmem:[#allocation5 + $0xc] sm:$0xf]
          %v524 = vld [vmem:[#allocation5 + $0x10] sm:$0xf]
          %v525 = vld [vmem:[#allocation5 + $0x14] sm:$0xf]
          %v526 = vld [vmem:[#allocation5 + $0x18] sm:$0xf]
          %v527 = vld [vmem:[#allocation5 + $0x1c] sm:$0xf]
          %v528 = vld [vmem:[#allocation5 + $0x20] sm:$0xf]
          %v529 = vld [vmem:[#allocation5 + $0x24] sm:$0xf]
          %v530 = vld [vmem:[#allocation5 + $0x28] sm:$0xf]
          %v531 = vld [vmem:[#allocation5 + $0x2c] sm:$0xf]
          %v532 = vld [vmem:[#allocation5 + $0x30] sm:$0xf]
          %v533 = vld [vmem:[#allocation5 + $0x34] sm:$0xf]
          %v534 = vld [vmem:[#allocation5 + $0x38] sm:$0xf]
          %v535 = vld [vmem:[#allocation5 + $0x3c] sm:$0xf]
          %v536 = vld [vmem:[#allocation5 + $0x40] sm:$0xf]
          %v537 = vld [vmem:[#allocation5 + $0x44] sm:$0xf]
          %v538 = vld [vmem:[#allocation5 + $0x48] sm:$0xf]
          %v539 = vld [vmem:[#allocation5 + $0x4c] sm:$0xf]
          %v540 = vld [vmem:[#allocation5 + $0x50] sm:$0xf]
          %v541 = vld [vmem:[#allocation5 + $0x54] sm:$0xf]
          %v542 = vld [vmem:[#allocation5 + $0x58] sm:$0xf]
          %v543 = vld [vmem:[#allocation5 + $0x5c] sm:$0xf]
          %v544 = vld [vmem:[#allocation5 + $0x60] sm:$0xf]
          %v545 = vld [vmem:[#allocation5 + $0x64] sm:$0xf]
          %v546 = vld [vmem:[#allocation5 + $0x68] sm:$0xf]
          %v547 = vld [vmem:[#allocation5 + $0x6c] sm:$0xf]
          %v548 = vld [vmem:[#allocation5 + $0x70] sm:$0xf]
          %v549 = vld [vmem:[#allocation5 + $0x74] sm:$0xf]
          %v550 = vld [vmem:[#allocation5 + $0x78] sm:$0xf]
          %v551 = vld [vmem:[#allocation5 + $0x7c] sm:$0xf]
          %v552 = vld [vmem:[#allocation10] sm:$0xf]
          %v553 = vld [vmem:[#allocation10 + $0x4] sm:$0xf]
          %v554 = vld [vmem:[#allocation10 + $0x8] sm:$0xf]
          %v555 = vld [vmem:[#allocation10 + $0xc] sm:$0xf]
          %v556 = vld [vmem:[#allocation10 + $0x10] sm:$0xf]
          %v557 = vld [vmem:[#allocation10 + $0x14] sm:$0xf]
          %v558 = vld [vmem:[#allocation10 + $0x18] sm:$0xf]
          %v559 = vld [vmem:[#allocation10 + $0x1c] sm:$0xf]
          %v560 = vld [vmem:[#allocation10 + $0x20] sm:$0xf]
          %v561 = vld [vmem:[#allocation10 + $0x24] sm:$0xf]
          %v562 = vld [vmem:[#allocation10 + $0x28] sm:$0xf]
          %v563 = vld [vmem:[#allocation10 + $0x2c] sm:$0xf]
          %v564 = vld [vmem:[#allocation10 + $0x30] sm:$0xf]
          %v565 = vld [vmem:[#allocation10 + $0x34] sm:$0xf]
          %v566 = vld [vmem:[#allocation10 + $0x38] sm:$0xf]
          %v567 = vld [vmem:[#allocation10 + $0x3c] sm:$0xf]
          %v600 = vunpack.c.l.b16 %v520
          %v601 = vunpack.c.l.b16 %v521
          %v602 = vunpack.c.l.b16 %v522
          %v603 = vunpack.c.l.b16 %v523
          %v604 = vunpack.c.l.b16 %v524
          %v605 = vunpack.c.l.b16 %v525
          %v606 = vunpack.c.l.b16 %v526
          %v607 = vunpack.c.l.b16 %v527
          %v608 = vunpack.c.l.b16 %v528
          %v609 = vunpack.c.l.b16 %v529
          %v610 = vunpack.c.l.b16 %v530
          %v611 = vunpack.c.l.b16 %v531
          %v612 = vunpack.c.l.b16 %v532
          %v613 = vunpack.c.l.b16 %v533
          %v614 = vunpack.c.l.b16 %v534
          %v615 = vunpack.c.l.b16 %v535
          %v616 = vunpack.c.l.b16 %v536
          %v617 = vunpack.c.l.b16 %v537
          %v618 = vunpack.c.l.b16 %v538
          %v619 = vunpack.c.l.b16 %v539
          %v620 = vunpack.c.l.b16 %v540
          %v621 = vunpack.c.l.b16 %v541
          %v622 = vunpack.c.l.b16 %v542
          %v623 = vunpack.c.l.b16 %v543
          %v624 = vunpack.c.l.b16 %v544
          %v625 = vunpack.c.l.b16 %v545
          %v626 = vunpack.c.l.b16 %v546
          %v627 = vunpack.c.l.b16 %v547
          %v628 = vunpack.c.l.b16 %v548
          %v629 = vunpack.c.l.b16 %v549
          %v630 = vunpack.c.l.b16 %v550
          %v631 = vunpack.c.l.b16 %v551
          %v632 = vpack.c.b16 %v601, %v600
          %v633 = vpack.c.b16 %v603, %v602
          %v634 = vpack.c.b16 %v605, %v604
          %v635 = vpack.c.b16 %v607, %v606
          %v636 = vpack.c.b16 %v609, %v608
          %v637 = vpack.c.b16 %v611, %v610
          %v638 = vpack.c.b16 %v613, %v612
          %v639 = vpack.c.b16 %v615, %v614
          %v640 = vpack.c.b16 %v617, %v616
          %v641 = vpack.c.b16 %v619, %v618
          %v642 = vpack.c.b16 %v621, %v620
          %v643 = vpack.c.b16 %v623, %v622
          %v644 = vpack.c.b16 %v625, %v624
          %v645 = vpack.c.b16 %v627, %v626
          %v646 = vpack.c.b16 %v629, %v628
          %v647 = vpack.c.b16 %v631, %v630
          %v680 = vunpack.c.l.b16 %v552
          %v681 = vunpack.c.l.b16 %v553
          %v682 = vunpack.c.l.b16 %v554
          %v683 = vunpack.c.l.b16 %v555
          %v684 = vunpack.c.l.b16 %v556
          %v685 = vunpack.c.l.b16 %v557
          %v686 = vunpack.c.l.b16 %v558
          %v687 = vunpack.c.l.b16 %v559
          %v688 = vunpack.c.l.b16 %v560
          %v689 = vunpack.c.l.b16 %v561
          %v690 = vunpack.c.l.b16 %v562
          %v691 = vunpack.c.l.b16 %v563
          %v692 = vunpack.c.l.b16 %v564
          %v693 = vunpack.c.l.b16 %v565
          %v694 = vunpack.c.l.b16 %v566
          %v695 = vunpack.c.l.b16 %v567
          %v696 = vpack.c.b16 %v681, %v680
          %v697 = vpack.c.b16 %v683, %v682
          %v698 = vpack.c.b16 %v685, %v684
          %v699 = vpack.c.b16 %v687, %v686
          %v700 = vpack.c.b16 %v689, %v688
          %v701 = vpack.c.b16 %v691, %v690
          %v702 = vpack.c.b16 %v693, %v692
          %v703 = vpack.c.b16 %v695, %v694
          %712 = vmatpush.bf16.msra.mxu0 %v703
          %713 = vmatpush.bf16.msra.mxu0 %v702
          %714 = vmatpush.bf16.msra.mxu0 %v701
          %715 = vmatpush.bf16.msra.mxu0 %v700
          %716 = vmatpush.bf16.msra.mxu0 %v699
          %717 = vmatpush.bf16.msra.mxu0 %v698
          %718 = vmatpush.bf16.msra.mxu0 %v697
          %719 = vmatpush.bf16.msra.mxu0 %v696
          %720 = vmatmul.bf16.gmra.mxu0 %v632
          %v721 = vpop.f32.mrf.mxu0
          %v722 = vadd.f32 0.0, %v721
          %v723 = vpop.f32.mrf.mxu0
          %v724 = vadd.f32 0.0, %v723
          %725 = vmatmul.bf16.gmra.mxu0 %v633
          %v726 = vpop.f32.mrf.mxu0
          %v727 = vadd.f32 0.0, %v726
          %v728 = vpop.f32.mrf.mxu0
          %v729 = vadd.f32 0.0, %v728
          %730 = vmatmul.bf16.gmra.mxu0 %v634
          %v731 = vpop.f32.mrf.mxu0
          %v732 = vadd.f32 0.0, %v731
          %v733 = vpop.f32.mrf.mxu0
          %v734 = vadd.f32 0.0, %v733
          %735 = vmatmul.bf16.gmra.mxu0 %v635
          %v736 = vpop.f32.mrf.mxu0
          %v737 = vadd.f32 0.0, %v736
          %v738 = vpop.f32.mrf.mxu0
          %v739 = vadd.f32 0.0, %v738
          %740 = vmatmul.bf16.gmra.mxu0 %v636
          %v741 = vpop.f32.mrf.mxu0
          %v742 = vadd.f32 0.0, %v741
          %v743 = vpop.f32.mrf.mxu0
          %v744 = vadd.f32 0.0, %v743
          %745 = vmatmul.bf16.gmra.mxu0 %v637
          %v746 = vpop.f32.mrf.mxu0
          %v747 = vadd.f32 0.0, %v746
          %v748 = vpop.f32.mrf.mxu0
          %v749 = vadd.f32 0.0, %v748
          %750 = vmatmul.bf16.gmra.mxu0 %v638
          %v751 = vpop.f32.mrf.mxu0
          %v752 = vadd.f32 0.0, %v751
          %v753 = vpop.f32.mrf.mxu0
          %v754 = vadd.f32 0.0, %v753
          %755 = vmatmul.bf16.gmra.mxu0 %v639
          %v756 = vpop.f32.mrf.mxu0
          %v757 = vadd.f32 0.0, %v756
          %v758 = vpop.f32.mrf.mxu0
          %v759 = vadd.f32 0.0, %v758
          %760 = vmatmul.bf16.gmra.mxu0 %v640
          %v761 = vpop.f32.mrf.mxu0
          %v762 = vadd.f32 0.0, %v761
          %v763 = vpop.f32.mrf.mxu0
          %v764 = vadd.f32 0.0, %v763
          %765 = vmatmul.bf16.gmra.mxu0 %v641
          %v766 = vpop.f32.mrf.mxu0
          %v767 = vadd.f32 0.0, %v766
          %v768 = vpop.f32.mrf.mxu0
          %v769 = vadd.f32 0.0, %v768
          %770 = vmatmul.bf16.gmra.mxu0 %v642
          %v771 = vpop.f32.mrf.mxu0
          %v772 = vadd.f32 0.0, %v771
          %v773 = vpop.f32.mrf.mxu0
          %v774 = vadd.f32 0.0, %v773
          %775 = vmatmul.bf16.gmra.mxu0 %v643
          %v776 = vpop.f32.mrf.mxu0
          %v777 = vadd.f32 0.0, %v776
          %v778 = vpop.f32.mrf.mxu0
          %v779 = vadd.f32 0.0, %v778
          %780 = vmatmul.bf16.gmra.mxu0 %v644
          %v781 = vpop.f32.mrf.mxu0
          %v782 = vadd.f32 0.0, %v781
          %v783 = vpop.f32.mrf.mxu0
          %v784 = vadd.f32 0.0, %v783
          %785 = vmatmul.bf16.gmra.mxu0 %v645
          %v786 = vpop.f32.mrf.mxu0
          %v787 = vadd.f32 0.0, %v786
          %v788 = vpop.f32.mrf.mxu0
          %v789 = vadd.f32 0.0, %v788
          %790 = vmatmul.bf16.gmra.mxu0 %v646
          %v791 = vpop.f32.mrf.mxu0
          %v792 = vadd.f32 0.0, %v791
          %v793 = vpop.f32.mrf.mxu0
          %v794 = vadd.f32 0.0, %v793
          %795 = vmatmul.bf16.gmra.mxu0 %v647
          %v796 = vpop.f32.mrf.mxu0
          %v797 = vadd.f32 0.0, %v796
          %v798 = vpop.f32.mrf.mxu0
          %v799 = vadd.f32 0.0, %v798
          %800 = vdwg.mxu0
          %v801 = vpack.c.bf16 %v722, %v722
          %v802 = vpack.c.bf16 %v724, %v724
          %v803 = vpack.c.bf16 %v727, %v727
          %v804 = vpack.c.bf16 %v729, %v729
          %v805 = vpack.c.bf16 %v732, %v732
          %v806 = vpack.c.bf16 %v734, %v734
          %v807 = vpack.c.bf16 %v737, %v737
          %v808 = vpack.c.bf16 %v739, %v739
          %v809 = vpack.c.bf16 %v742, %v742
          %v810 = vpack.c.bf16 %v744, %v744
          %v811 = vpack.c.bf16 %v747, %v747
          %v812 = vpack.c.bf16 %v749, %v749
          %v813 = vpack.c.bf16 %v752, %v752
          %v814 = vpack.c.bf16 %v754, %v754
          %v815 = vpack.c.bf16 %v757, %v757
          %v816 = vpack.c.bf16 %v759, %v759
          %v817 = vpack.c.bf16 %v762, %v762
          %v818 = vpack.c.bf16 %v764, %v764
          %v819 = vpack.c.bf16 %v767, %v767
          %v820 = vpack.c.bf16 %v769, %v769
          %v821 = vpack.c.bf16 %v772, %v772
          %v822 = vpack.c.bf16 %v774, %v774
          %v823 = vpack.c.bf16 %v777, %v777
          %v824 = vpack.c.bf16 %v779, %v779
          %v825 = vpack.c.bf16 %v782, %v782
          %v826 = vpack.c.bf16 %v784, %v784
          %v827 = vpack.c.bf16 %v787, %v787
          %v828 = vpack.c.bf16 %v789, %v789
          %v829 = vpack.c.bf16 %v792, %v792
          %v830 = vpack.c.bf16 %v794, %v794
          %v831 = vpack.c.bf16 %v797, %v797
          %v832 = vpack.c.bf16 %v799, %v799
          %833 = vst [vmem:[#allocation4] sm:$0xf] %v801
          %834 = vst [vmem:[#allocation4 + $0x4] sm:$0xf] %v802
          %835 = vst [vmem:[#allocation4 + $0x8] sm:$0xf] %v803
          %836 = vst [vmem:[#allocation4 + $0xc] sm:$0xf] %v804
          %837 = vst [vmem:[#allocation4 + $0x10] sm:$0xf] %v805
          %838 = vst [vmem:[#allocation4 + $0x14] sm:$0xf] %v806
          %839 = vst [vmem:[#allocation4 + $0x18] sm:$0xf] %v807
          %840 = vst [vmem:[#allocation4 + $0x1c] sm:$0xf] %v808
          %841 = vst [vmem:[#allocation4 + $0x20] sm:$0xf] %v809
          %842 = vst [vmem:[#allocation4 + $0x24] sm:$0xf] %v810
          %843 = vst [vmem:[#allocation4 + $0x28] sm:$0xf] %v811
          %844 = vst [vmem:[#allocation4 + $0x2c] sm:$0xf] %v812
          %845 = vst [vmem:[#allocation4 + $0x30] sm:$0xf] %v813
          %846 = vst [vmem:[#allocation4 + $0x34] sm:$0xf] %v814
          %847 = vst [vmem:[#allocation4 + $0x38] sm:$0xf] %v815
          %848 = vst [vmem:[#allocation4 + $0x3c] sm:$0xf] %v816
          %849 = vst [vmem:[#allocation4 + $0x40] sm:$0xf] %v817
          %850 = vst [vmem:[#allocation4 + $0x44] sm:$0xf] %v818
          %851 = vst [vmem:[#allocation4 + $0x48] sm:$0xf] %v819
          %852 = vst [vmem:[#allocation4 + $0x4c] sm:$0xf] %v820
          %853 = vst [vmem:[#allocation4 + $0x50] sm:$0xf] %v821
          %854 = vst [vmem:[#allocation4 + $0x54] sm:$0xf] %v822
          %855 = vst [vmem:[#allocation4 + $0x58] sm:$0xf] %v823
          %856 = vst [vmem:[#allocation4 + $0x5c] sm:$0xf] %v824
          %857 = vst [vmem:[#allocation4 + $0x60] sm:$0xf] %v825
          %858 = vst [vmem:[#allocation4 + $0x64] sm:$0xf] %v826
          %859 = vst [vmem:[#allocation4 + $0x68] sm:$0xf] %v827
          %860 = vst [vmem:[#allocation4 + $0x6c] sm:$0xf] %v828
          %861 = vst [vmem:[#allocation4 + $0x70] sm:$0xf] %v829
          %862 = vst [vmem:[#allocation4 + $0x74] sm:$0xf] %v830
          %863 = vst [vmem:[#allocation4 + $0x78] sm:$0xf] %v831
          %864 = vst [vmem:[#allocation4 + $0x7c] sm:$0xf] %v832
        $region100: #{tpu_custom_call.1} parent=63 // pred_fallthru
          _
        %p865 = scmp.eq.s32.totalorder %s32, 1
        %p866 = pnand %p865, %p515
        %p867 = pneg %p866
        // Predicated region
        $region101: #{tpu_custom_call.1} parent=63 // pred_check
          _
        $region102: #{tpu_custom_call.1} parent=63 // pred_check_branch
          %869 = sbr.rel (%p866) target = $region104
        $region103: #{tpu_custom_call.1} parent=63 // pred_region
          %v870 = vld [vmem:[#allocation2] sm:$0xf]
          %v871 = vld [vmem:[#allocation2 + $0x4] sm:$0xf]
          %v872 = vld [vmem:[#allocation2 + $0x8] sm:$0xf]
          %v873 = vld [vmem:[#allocation2 + $0xc] sm:$0xf]
          %v874 = vld [vmem:[#allocation2 + $0x10] sm:$0xf]
          %v875 = vld [vmem:[#allocation2 + $0x14] sm:$0xf]
          %v876 = vld [vmem:[#allocation2 + $0x18] sm:$0xf]
          %v877 = vld [vmem:[#allocation2 + $0x1c] sm:$0xf]
          %v878 = vld [vmem:[#allocation2 + $0x20] sm:$0xf]
          %v879 = vld [vmem:[#allocation2 + $0x24] sm:$0xf]
          %v880 = vld [vmem:[#allocation2 + $0x28] sm:$0xf]
          %v881 = vld [vmem:[#allocation2 + $0x2c] sm:$0xf]
          %v882 = vld [vmem:[#allocation2 + $0x30] sm:$0xf]
          %v883 = vld [vmem:[#allocation2 + $0x34] sm:$0xf]
          %v884 = vld [vmem:[#allocation2 + $0x38] sm:$0xf]
          %v885 = vld [vmem:[#allocation2 + $0x3c] sm:$0xf]
          %v886 = vld [vmem:[#allocation2 + $0x40] sm:$0xf]
          %v887 = vld [vmem:[#allocation2 + $0x44] sm:$0xf]
          %v888 = vld [vmem:[#allocation2 + $0x48] sm:$0xf]
          %v889 = vld [vmem:[#allocation2 + $0x4c] sm:$0xf]
          %v890 = vld [vmem:[#allocation2 + $0x50] sm:$0xf]
          %v891 = vld [vmem:[#allocation2 + $0x54] sm:$0xf]
          %v892 = vld [vmem:[#allocation2 + $0x58] sm:$0xf]
          %v893 = vld [vmem:[#allocation2 + $0x5c] sm:$0xf]
          %v894 = vld [vmem:[#allocation2 + $0x60] sm:$0xf]
          %v895 = vld [vmem:[#allocation2 + $0x64] sm:$0xf]
          %v896 = vld [vmem:[#allocation2 + $0x68] sm:$0xf]
          %v897 = vld [vmem:[#allocation2 + $0x6c] sm:$0xf]
          %v898 = vld [vmem:[#allocation2 + $0x70] sm:$0xf]
          %v899 = vld [vmem:[#allocation2 + $0x74] sm:$0xf]
          %v900 = vld [vmem:[#allocation2 + $0x78] sm:$0xf]
          %v901 = vld [vmem:[#allocation2 + $0x7c] sm:$0xf]
          %v902 = vld [vmem:[#allocation11] sm:$0xf]
          %v903 = vld [vmem:[#allocation11 + $0x4] sm:$0xf]
          %v904 = vld [vmem:[#allocation11 + $0x8] sm:$0xf]
          %v905 = vld [vmem:[#allocation11 + $0xc] sm:$0xf]
          %v906 = vld [vmem:[#allocation11 + $0x10] sm:$0xf]
          %v907 = vld [vmem:[#allocation11 + $0x14] sm:$0xf]
          %v908 = vld [vmem:[#allocation11 + $0x18] sm:$0xf]
          %v909 = vld [vmem:[#allocation11 + $0x1c] sm:$0xf]
          %v910 = vld [vmem:[#allocation11 + $0x20] sm:$0xf]
          %v911 = vld [vmem:[#allocation11 + $0x24] sm:$0xf]
          %v912 = vld [vmem:[#allocation11 + $0x28] sm:$0xf]
          %v913 = vld [vmem:[#allocation11 + $0x2c] sm:$0xf]
          %v914 = vld [vmem:[#allocation11 + $0x30] sm:$0xf]
          %v915 = vld [vmem:[#allocation11 + $0x34] sm:$0xf]
          %v916 = vld [vmem:[#allocation11 + $0x38] sm:$0xf]
          %v917 = vld [vmem:[#allocation11 + $0x3c] sm:$0xf]
          %v950 = vunpack.c.l.b16 %v870
          %v951 = vunpack.c.l.b16 %v871
          %v952 = vunpack.c.l.b16 %v872
          %v953 = vunpack.c.l.b16 %v873
          %v954 = vunpack.c.l.b16 %v874
          %v955 = vunpack.c.l.b16 %v875
          %v956 = vunpack.c.l.b16 %v876
          %v957 = vunpack.c.l.b16 %v877
          %v958 = vunpack.c.l.b16 %v878
          %v959 = vunpack.c.l.b16 %v879
          %v960 = vunpack.c.l.b16 %v880
          %v961 = vunpack.c.l.b16 %v881
          %v962 = vunpack.c.l.b16 %v882
          %v963 = vunpack.c.l.b16 %v883
          %v964 = vunpack.c.l.b16 %v884
          %v965 = vunpack.c.l.b16 %v885
          %v966 = vunpack.c.l.b16 %v886
          %v967 = vunpack.c.l.b16 %v887
          %v968 = vunpack.c.l.b16 %v888
          %v969 = vunpack.c.l.b16 %v889
          %v970 = vunpack.c.l.b16 %v890
          %v971 = vunpack.c.l.b16 %v891
          %v972 = vunpack.c.l.b16 %v892
          %v973 = vunpack.c.l.b16 %v893
          %v974 = vunpack.c.l.b16 %v894
          %v975 = vunpack.c.l.b16 %v895
          %v976 = vunpack.c.l.b16 %v896
          %v977 = vunpack.c.l.b16 %v897
          %v978 = vunpack.c.l.b16 %v898
          %v979 = vunpack.c.l.b16 %v899
          %v980 = vunpack.c.l.b16 %v900
          %v981 = vunpack.c.l.b16 %v901
          %v982 = vpack.c.b16 %v951, %v950
          %v983 = vpack.c.b16 %v953, %v952
          %v984 = vpack.c.b16 %v955, %v954
          %v985 = vpack.c.b16 %v957, %v956
          %v986 = vpack.c.b16 %v959, %v958
          %v987 = vpack.c.b16 %v961, %v960
          %v988 = vpack.c.b16 %v963, %v962
          %v989 = vpack.c.b16 %v965, %v964
          %v990 = vpack.c.b16 %v967, %v966
          %v991 = vpack.c.b16 %v969, %v968
          %v992 = vpack.c.b16 %v971, %v970
          %v993 = vpack.c.b16 %v973, %v972
          %v994 = vpack.c.b16 %v975, %v974
          %v995 = vpack.c.b16 %v977, %v976
          %v996 = vpack.c.b16 %v979, %v978
          %v997 = vpack.c.b16 %v981, %v980
          %v1030 = vunpack.c.l.b16 %v902
          %v1031 = vunpack.c.l.b16 %v903
          %v1032 = vunpack.c.l.b16 %v904
          %v1033 = vunpack.c.l.b16 %v905
          %v1034 = vunpack.c.l.b16 %v906
          %v1035 = vunpack.c.l.b16 %v907
          %v1036 = vunpack.c.l.b16 %v908
          %v1037 = vunpack.c.l.b16 %v909
          %v1038 = vunpack.c.l.b16 %v910
          %v1039 = vunpack.c.l.b16 %v911
          %v1040 = vunpack.c.l.b16 %v912
          %v1041 = vunpack.c.l.b16 %v913
          %v1042 = vunpack.c.l.b16 %v914
          %v1043 = vunpack.c.l.b16 %v915
          %v1044 = vunpack.c.l.b16 %v916
          %v1045 = vunpack.c.l.b16 %v917
          %v1046 = vpack.c.b16 %v1031, %v1030
          %v1047 = vpack.c.b16 %v1033, %v1032
          %v1048 = vpack.c.b16 %v1035, %v1034
          %v1049 = vpack.c.b16 %v1037, %v1036
          %v1050 = vpack.c.b16 %v1039, %v1038
          %v1051 = vpack.c.b16 %v1041, %v1040
          %v1052 = vpack.c.b16 %v1043, %v1042
          %v1053 = vpack.c.b16 %v1045, %v1044
          %1062 = vmatpush.bf16.msra.mxu0 %v1053
          %1063 = vmatpush.bf16.msra.mxu0 %v1052
          %1064 = vmatpush.bf16.msra.mxu0 %v1051
          %1065 = vmatpush.bf16.msra.mxu0 %v1050
          %1066 = vmatpush.bf16.msra.mxu0 %v1049
          %1067 = vmatpush.bf16.msra.mxu0 %v1048
          %1068 = vmatpush.bf16.msra.mxu0 %v1047
          %1069 = vmatpush.bf16.msra.mxu0 %v1046
          %1070 = vmatmul.bf16.gmra.mxu0 %v982
          %v1071 = vpop.f32.mrf.mxu0
          %v1072 = vadd.f32 0.0, %v1071
          %v1073 = vpop.f32.mrf.mxu0
          %v1074 = vadd.f32 0.0, %v1073
          %1075 = vmatmul.bf16.gmra.mxu0 %v983
          %v1076 = vpop.f32.mrf.mxu0
          %v1077 = vadd.f32 0.0, %v1076
          %v1078 = vpop.f32.mrf.mxu0
          %v1079 = vadd.f32 0.0, %v1078
          %1080 = vmatmul.bf16.gmra.mxu0 %v984
          %v1081 = vpop.f32.mrf.mxu0
          %v1082 = vadd.f32 0.0, %v1081
          %v1083 = vpop.f32.mrf.mxu0
          %v1084 = vadd.f32 0.0, %v1083
          %1085 = vmatmul.bf16.gmra.mxu0 %v985
          %v1086 = vpop.f32.mrf.mxu0
          %v1087 = vadd.f32 0.0, %v1086
          %v1088 = vpop.f32.mrf.mxu0
          %v1089 = vadd.f32 0.0, %v1088
          %1090 = vmatmul.bf16.gmra.mxu0 %v986
          %v1091 = vpop.f32.mrf.mxu0
          %v1092 = vadd.f32 0.0, %v1091
          %v1093 = vpop.f32.mrf.mxu0
          %v1094 = vadd.f32 0.0, %v1093
          %1095 = vmatmul.bf16.gmra.mxu0 %v987
          %v1096 = vpop.f32.mrf.mxu0
          %v1097 = vadd.f32 0.0, %v1096
          %v1098 = vpop.f32.mrf.mxu0
          %v1099 = vadd.f32 0.0, %v1098
          %1100 = vmatmul.bf16.gmra.mxu0 %v988
          %v1101 = vpop.f32.mrf.mxu0
          %v1102 = vadd.f32 0.0, %v1101
          %v1103 = vpop.f32.mrf.mxu0
          %v1104 = vadd.f32 0.0, %v1103
          %1105 = vmatmul.bf16.gmra.mxu0 %v989
          %v1106 = vpop.f32.mrf.mxu0
          %v1107 = vadd.f32 0.0, %v1106
          %v1108 = vpop.f32.mrf.mxu0
          %v1109 = vadd.f32 0.0, %v1108
          %1110 = vmatmul.bf16.gmra.mxu0 %v990
          %v1111 = vpop.f32.mrf.mxu0
          %v1112 = vadd.f32 0.0, %v1111
          %v1113 = vpop.f32.mrf.mxu0
          %v1114 = vadd.f32 0.0, %v1113
          %1115 = vmatmul.bf16.gmra.mxu0 %v991
          %v1116 = vpop.f32.mrf.mxu0
          %v1117 = vadd.f32 0.0, %v1116
          %v1118 = vpop.f32.mrf.mxu0
          %v1119 = vadd.f32 0.0, %v1118
          %1120 = vmatmul.bf16.gmra.mxu0 %v992
          %v1121 = vpop.f32.mrf.mxu0
          %v1122 = vadd.f32 0.0, %v1121
          %v1123 = vpop.f32.mrf.mxu0
          %v1124 = vadd.f32 0.0, %v1123
          %1125 = vmatmul.bf16.gmra.mxu0 %v993
          %v1126 = vpop.f32.mrf.mxu0
          %v1127 = vadd.f32 0.0, %v1126
          %v1128 = vpop.f32.mrf.mxu0
          %v1129 = vadd.f32 0.0, %v1128
          %1130 = vmatmul.bf16.gmra.mxu0 %v994
          %v1131 = vpop.f32.mrf.mxu0
          %v1132 = vadd.f32 0.0, %v1131
          %v1133 = vpop.f32.mrf.mxu0
          %v1134 = vadd.f32 0.0, %v1133
          %1135 = vmatmul.bf16.gmra.mxu0 %v995
          %v1136 = vpop.f32.mrf.mxu0
          %v1137 = vadd.f32 0.0, %v1136
          %v1138 = vpop.f32.mrf.mxu0
          %v1139 = vadd.f32 0.0, %v1138
          %1140 = vmatmul.bf16.gmra.mxu0 %v996
          %v1141 = vpop.f32.mrf.mxu0
          %v1142 = vadd.f32 0.0, %v1141
          %v1143 = vpop.f32.mrf.mxu0
          %v1144 = vadd.f32 0.0, %v1143
          %1145 = vmatmul.bf16.gmra.mxu0 %v997
          %v1146 = vpop.f32.mrf.mxu0
          %v1147 = vadd.f32 0.0, %v1146
          %v1148 = vpop.f32.mrf.mxu0
          %v1149 = vadd.f32 0.0, %v1148
          %1150 = vdwg.mxu0
          %v1151 = vpack.c.bf16 %v1072, %v1072
          %v1152 = vpack.c.bf16 %v1074, %v1074
          %v1153 = vpack.c.bf16 %v1077, %v1077
          %v1154 = vpack.c.bf16 %v1079, %v1079
          %v1155 = vpack.c.bf16 %v1082, %v1082
          %v1156 = vpack.c.bf16 %v1084, %v1084
          %v1157 = vpack.c.bf16 %v1087, %v1087
          %v1158 = vpack.c.bf16 %v1089, %v1089
          %v1159 = vpack.c.bf16 %v1092, %v1092
          %v1160 = vpack.c.bf16 %v1094, %v1094
          %v1161 = vpack.c.bf16 %v1097, %v1097
          %v1162 = vpack.c.bf16 %v1099, %v1099
          %v1163 = vpack.c.bf16 %v1102, %v1102
          %v1164 = vpack.c.bf16 %v1104, %v1104
          %v1165 = vpack.c.bf16 %v1107, %v1107
          %v1166 = vpack.c.bf16 %v1109, %v1109
          %v1167 = vpack.c.bf16 %v1112, %v1112
          %v1168 = vpack.c.bf16 %v1114, %v1114
          %v1169 = vpack.c.bf16 %v1117, %v1117
          %v1170 = vpack.c.bf16 %v1119, %v1119
          %v1171 = vpack.c.bf16 %v1122, %v1122
          %v1172 = vpack.c.bf16 %v1124, %v1124
          %v1173 = vpack.c.bf16 %v1127, %v1127
          %v1174 = vpack.c.bf16 %v1129, %v1129
          %v1175 = vpack.c.bf16 %v1132, %v1132
          %v1176 = vpack.c.bf16 %v1134, %v1134
          %v1177 = vpack.c.bf16 %v1137, %v1137
          %v1178 = vpack.c.bf16 %v1139, %v1139
          %v1179 = vpack.c.bf16 %v1142, %v1142
          %v1180 = vpack.c.bf16 %v1144, %v1144
          %v1181 = vpack.c.bf16 %v1147, %v1147
          %v1182 = vpack.c.bf16 %v1149, %v1149
          %1183 = vst [vmem:[#allocation4] sm:$0xf] %v1151
          %1184 = vst [vmem:[#allocation4 + $0x4] sm:$0xf] %v1152
          %1185 = vst [vmem:[#allocation4 + $0x8] sm:$0xf] %v1153
          %1186 = vst [vmem:[#allocation4 + $0xc] sm:$0xf] %v1154
          %1187 = vst [vmem:[#allocation4 + $0x10] sm:$0xf] %v1155
          %1188 = vst [vmem:[#allocation4 + $0x14] sm:$0xf] %v1156
          %1189 = vst [vmem:[#allocation4 + $0x18] sm:$0xf] %v1157
          %1190 = vst [vmem:[#allocation4 + $0x1c] sm:$0xf] %v1158
          %1191 = vst [vmem:[#allocation4 + $0x20] sm:$0xf] %v1159
          %1192 = vst [vmem:[#allocation4 + $0x24] sm:$0xf] %v1160
          %1193 = vst [vmem:[#allocation4 + $0x28] sm:$0xf] %v1161
          %1194 = vst [vmem:[#allocation4 + $0x2c] sm:$0xf] %v1162
          %1195 = vst [vmem:[#allocation4 + $0x30] sm:$0xf] %v1163
          %1196 = vst [vmem:[#allocation4 + $0x34] sm:$0xf] %v1164
          %1197 = vst [vmem:[#allocation4 + $0x38] sm:$0xf] %v1165
          %1198 = vst [vmem:[#allocation4 + $0x3c] sm:$0xf] %v1166
          %1199 = vst [vmem:[#allocation4 + $0x40] sm:$0xf] %v1167
          %1200 = vst [vmem:[#allocation4 + $0x44] sm:$0xf] %v1168
          %1201 = vst [vmem:[#allocation4 + $0x48] sm:$0xf] %v1169
          %1202 = vst [vmem:[#allocation4 + $0x4c] sm:$0xf] %v1170
          %1203 = vst [vmem:[#allocation4 + $0x50] sm:$0xf] %v1171
          %1204 = vst [vmem:[#allocation4 + $0x54] sm:$0xf] %v1172
          %1205 = vst [vmem:[#allocation4 + $0x58] sm:$0xf] %v1173
          %1206 = vst [vmem:[#allocation4 + $0x5c] sm:$0xf] %v1174
          %1207 = vst [vmem:[#allocation4 + $0x60] sm:$0xf] %v1175
          %1208 = vst [vmem:[#allocation4 + $0x64] sm:$0xf] %v1176
          %1209 = vst [vmem:[#allocation4 + $0x68] sm:$0xf] %v1177
          %1210 = vst [vmem:[#allocation4 + $0x6c] sm:$0xf] %v1178
          %1211 = vst [vmem:[#allocation4 + $0x70] sm:$0xf] %v1179
          %1212 = vst [vmem:[#allocation4 + $0x74] sm:$0xf] %v1180
          %1213 = vst [vmem:[#allocation4 + $0x78] sm:$0xf] %v1181
          %1214 = vst [vmem:[#allocation4 + $0x7c] sm:$0xf] %v1182
          %v1215 = vld [vmem:[#allocation5] sm:$0xf]
          %v1216 = vld [vmem:[#allocation5 + $0x4] sm:$0xf]
          %v1217 = vld [vmem:[#allocation5 + $0x8] sm:$0xf]
          %v1218 = vld [vmem:[#allocation5 + $0xc] sm:$0xf]
          %v1219 = vld [vmem:[#allocation5 + $0x10] sm:$0xf]
          %v1220 = vld [vmem:[#allocation5 + $0x14] sm:$0xf]
          %v1221 = vld [vmem:[#allocation5 + $0x18] sm:$0xf]
          %v1222 = vld [vmem:[#allocation5 + $0x1c] sm:$0xf]
          %v1223 = vld [vmem:[#allocation5 + $0x20] sm:$0xf]
          %v1224 = vld [vmem:[#allocation5 + $0x24] sm:$0xf]
          %v1225 = vld [vmem:[#allocation5 + $0x28] sm:$0xf]
          %v1226 = vld [vmem:[#allocation5 + $0x2c] sm:$0xf]
          %v1227 = vld [vmem:[#allocation5 + $0x30] sm:$0xf]
          %v1228 = vld [vmem:[#allocation5 + $0x34] sm:$0xf]
          %v1229 = vld [vmem:[#allocation5 + $0x38] sm:$0xf]
          %v1230 = vld [vmem:[#allocation5 + $0x3c] sm:$0xf]
          %v1231 = vld [vmem:[#allocation5 + $0x40] sm:$0xf]
          %v1232 = vld [vmem:[#allocation5 + $0x44] sm:$0xf]
          %v1233 = vld [vmem:[#allocation5 + $0x48] sm:$0xf]
          %v1234 = vld [vmem:[#allocation5 + $0x4c] sm:$0xf]
          %v1235 = vld [vmem:[#allocation5 + $0x50] sm:$0xf]
          %v1236 = vld [vmem:[#allocation5 + $0x54] sm:$0xf]
          %v1237 = vld [vmem:[#allocation5 + $0x58] sm:$0xf]
          %v1238 = vld [vmem:[#allocation5 + $0x5c] sm:$0xf]
          %v1239 = vld [vmem:[#allocation5 + $0x60] sm:$0xf]
          %v1240 = vld [vmem:[#allocation5 + $0x64] sm:$0xf]
          %v1241 = vld [vmem:[#allocation5 + $0x68] sm:$0xf]
          %v1242 = vld [vmem:[#allocation5 + $0x6c] sm:$0xf]
          %v1243 = vld [vmem:[#allocation5 + $0x70] sm:$0xf]
          %v1244 = vld [vmem:[#allocation5 + $0x74] sm:$0xf]
          %v1245 = vld [vmem:[#allocation5 + $0x78] sm:$0xf]
          %v1246 = vld [vmem:[#allocation5 + $0x7c] sm:$0xf]
          %v1247 = vld [vmem:[#allocation13] sm:$0xf]
          %v1248 = vld [vmem:[#allocation13 + $0x4] sm:$0xf]
          %v1249 = vld [vmem:[#allocation13 + $0x8] sm:$0xf]
          %v1250 = vld [vmem:[#allocation13 + $0xc] sm:$0xf]
          %v1251 = vld [vmem:[#allocation13 + $0x10] sm:$0xf]
          %v1252 = vld [vmem:[#allocation13 + $0x14] sm:$0xf]
          %v1253 = vld [vmem:[#allocation13 + $0x18] sm:$0xf]
          %v1254 = vld [vmem:[#allocation13 + $0x1c] sm:$0xf]
          %v1255 = vld [vmem:[#allocation13 + $0x20] sm:$0xf]
          %v1256 = vld [vmem:[#allocation13 + $0x24] sm:$0xf]
          %v1257 = vld [vmem:[#allocation13 + $0x28] sm:$0xf]
          %v1258 = vld [vmem:[#allocation13 + $0x2c] sm:$0xf]
          %v1259 = vld [vmem:[#allocation13 + $0x30] sm:$0xf]
          %v1260 = vld [vmem:[#allocation13 + $0x34] sm:$0xf]
          %v1261 = vld [vmem:[#allocation13 + $0x38] sm:$0xf]
          %v1262 = vld [vmem:[#allocation13 + $0x3c] sm:$0xf]
          %v1263 = vld [vmem:[#allocation4] sm:$0xf]
          %v1264 = vld [vmem:[#allocation4 + $0x4] sm:$0xf]
          %v1265 = vld [vmem:[#allocation4 + $0x8] sm:$0xf]
          %v1266 = vld [vmem:[#allocation4 + $0xc] sm:$0xf]
          %v1267 = vld [vmem:[#allocation4 + $0x10] sm:$0xf]
          %v1268 = vld [vmem:[#allocation4 + $0x14] sm:$0xf]
          %v1269 = vld [vmem:[#allocation4 + $0x18] sm:$0xf]
          %v1270 = vld [vmem:[#allocation4 + $0x1c] sm:$0xf]
          %v1271 = vld [vmem:[#allocation4 + $0x20] sm:$0xf]
          %v1272 = vld [vmem:[#allocation4 + $0x24] sm:$0xf]
          %v1273 = vld [vmem:[#allocation4 + $0x28] sm:$0xf]
          %v1274 = vld [vmem:[#allocation4 + $0x2c] sm:$0xf]
          %v1275 = vld [vmem:[#allocation4 + $0x30] sm:$0xf]
          %v1276 = vld [vmem:[#allocation4 + $0x34] sm:$0xf]
          %v1277 = vld [vmem:[#allocation4 + $0x38] sm:$0xf]
          %v1278 = vld [vmem:[#allocation4 + $0x3c] sm:$0xf]
          %v1279 = vld [vmem:[#allocation4 + $0x40] sm:$0xf]
          %v1280 = vld [vmem:[#allocation4 + $0x44] sm:$0xf]
          %v1281 = vld [vmem:[#allocation4 + $0x48] sm:$0xf]
          %v1282 = vld [vmem:[#allocation4 + $0x4c] sm:$0xf]
          %v1283 = vld [vmem:[#allocation4 + $0x50] sm:$0xf]
          %v1284 = vld [vmem:[#allocation4 + $0x54] sm:$0xf]
          %v1285 = vld [vmem:[#allocation4 + $0x58] sm:$0xf]
          %v1286 = vld [vmem:[#allocation4 + $0x5c] sm:$0xf]
          %v1287 = vld [vmem:[#allocation4 + $0x60] sm:$0xf]
          %v1288 = vld [vmem:[#allocation4 + $0x64] sm:$0xf]
          %v1289 = vld [vmem:[#allocation4 + $0x68] sm:$0xf]
          %v1290 = vld [vmem:[#allocation4 + $0x6c] sm:$0xf]
          %v1291 = vld [vmem:[#allocation4 + $0x70] sm:$0xf]
          %v1292 = vld [vmem:[#allocation4 + $0x74] sm:$0xf]
          %v1293 = vld [vmem:[#allocation4 + $0x78] sm:$0xf]
          %v1294 = vld [vmem:[#allocation4 + $0x7c] sm:$0xf]
          %v1295 = vunpack.c.l.bf16 %v1263
          %v1296 = vunpack.c.l.bf16 %v1264
          %v1297 = vunpack.c.l.bf16 %v1265
          %v1298 = vunpack.c.l.bf16 %v1266
          %v1299 = vunpack.c.l.bf16 %v1267
          %v1300 = vunpack.c.l.bf16 %v1268
          %v1301 = vunpack.c.l.bf16 %v1269
          %v1302 = vunpack.c.l.bf16 %v1270
          %v1303 = vunpack.c.l.bf16 %v1271
          %v1304 = vunpack.c.l.bf16 %v1272
          %v1305 = vunpack.c.l.bf16 %v1273
          %v1306 = vunpack.c.l.bf16 %v1274
          %v1307 = vunpack.c.l.bf16 %v1275
          %v1308 = vunpack.c.l.bf16 %v1276
          %v1309 = vunpack.c.l.bf16 %v1277
          %v1310 = vunpack.c.l.bf16 %v1278
          %v1311 = vunpack.c.l.bf16 %v1279
          %v1312 = vunpack.c.l.bf16 %v1280
          %v1313 = vunpack.c.l.bf16 %v1281
          %v1314 = vunpack.c.l.bf16 %v1282
          %v1315 = vunpack.c.l.bf16 %v1283
          %v1316 = vunpack.c.l.bf16 %v1284
          %v1317 = vunpack.c.l.bf16 %v1285
          %v1318 = vunpack.c.l.bf16 %v1286
          %v1319 = vunpack.c.l.bf16 %v1287
          %v1320 = vunpack.c.l.bf16 %v1288
          %v1321 = vunpack.c.l.bf16 %v1289
          %v1322 = vunpack.c.l.bf16 %v1290
          %v1323 = vunpack.c.l.bf16 %v1291
          %v1324 = vunpack.c.l.bf16 %v1292
          %v1325 = vunpack.c.l.bf16 %v1293
          %v1326 = vunpack.c.l.bf16 %v1294
          %v1359 = vunpack.c.l.b16 %v1215
          %v1360 = vunpack.c.l.b16 %v1216
          %v1361 = vunpack.c.l.b16 %v1217
          %v1362 = vunpack.c.l.b16 %v1218
          %v1363 = vunpack.c.l.b16 %v1219
          %v1364 = vunpack.c.l.b16 %v1220
          %v1365 = vunpack.c.l.b16 %v1221
          %v1366 = vunpack.c.l.b16 %v1222
          %v1367 = vunpack.c.l.b16 %v1223
          %v1368 = vunpack.c.l.b16 %v1224
          %v1369 = vunpack.c.l.b16 %v1225
          %v1370 = vunpack.c.l.b16 %v1226
          %v1371 = vunpack.c.l.b16 %v1227
          %v1372 = vunpack.c.l.b16 %v1228
          %v1373 = vunpack.c.l.b16 %v1229
          %v1374 = vunpack.c.l.b16 %v1230
          %v1375 = vunpack.c.l.b16 %v1231
          %v1376 = vunpack.c.l.b16 %v1232
          %v1377 = vunpack.c.l.b16 %v1233
          %v1378 = vunpack.c.l.b16 %v1234
          %v1379 = vunpack.c.l.b16 %v1235
          %v1380 = vunpack.c.l.b16 %v1236
          %v1381 = vunpack.c.l.b16 %v1237
          %v1382 = vunpack.c.l.b16 %v1238
          %v1383 = vunpack.c.l.b16 %v1239
          %v1384 = vunpack.c.l.b16 %v1240
          %v1385 = vunpack.c.l.b16 %v1241
          %v1386 = vunpack.c.l.b16 %v1242
          %v1387 = vunpack.c.l.b16 %v1243
          %v1388 = vunpack.c.l.b16 %v1244
          %v1389 = vunpack.c.l.b16 %v1245
          %v1390 = vunpack.c.l.b16 %v1246
          %v1391 = vpack.c.b16 %v1360, %v1359
          %v1392 = vpack.c.b16 %v1362, %v1361
          %v1393 = vpack.c.b16 %v1364, %v1363
          %v1394 = vpack.c.b16 %v1366, %v1365
          %v1395 = vpack.c.b16 %v1368, %v1367
          %v1396 = vpack.c.b16 %v1370, %v1369
          %v1397 = vpack.c.b16 %v1372, %v1371
          %v1398 = vpack.c.b16 %v1374, %v1373
          %v1399 = vpack.c.b16 %v1376, %v1375
          %v1400 = vpack.c.b16 %v1378, %v1377
          %v1401 = vpack.c.b16 %v1380, %v1379
          %v1402 = vpack.c.b16 %v1382, %v1381
          %v1403 = vpack.c.b16 %v1384, %v1383
          %v1404 = vpack.c.b16 %v1386, %v1385
          %v1405 = vpack.c.b16 %v1388, %v1387
          %v1406 = vpack.c.b16 %v1390, %v1389
          %v1439 = vunpack.c.l.b16 %v1247
          %v1440 = vunpack.c.l.b16 %v1248
          %v1441 = vunpack.c.l.b16 %v1249
          %v1442 = vunpack.c.l.b16 %v1250
          %v1443 = vunpack.c.l.b16 %v1251
          %v1444 = vunpack.c.l.b16 %v1252
          %v1445 = vunpack.c.l.b16 %v1253
          %v1446 = vunpack.c.l.b16 %v1254
          %v1447 = vunpack.c.l.b16 %v1255
          %v1448 = vunpack.c.l.b16 %v1256
          %v1449 = vunpack.c.l.b16 %v1257
          %v1450 = vunpack.c.l.b16 %v1258
          %v1451 = vunpack.c.l.b16 %v1259
          %v1452 = vunpack.c.l.b16 %v1260
          %v1453 = vunpack.c.l.b16 %v1261
          %v1454 = vunpack.c.l.b16 %v1262
          %v1455 = vpack.c.b16 %v1440, %v1439
          %v1456 = vpack.c.b16 %v1442, %v1441
          %v1457 = vpack.c.b16 %v1444, %v1443
          %v1458 = vpack.c.b16 %v1446, %v1445
          %v1459 = vpack.c.b16 %v1448, %v1447
          %v1460 = vpack.c.b16 %v1450, %v1449
          %v1461 = vpack.c.b16 %v1452, %v1451
          %v1462 = vpack.c.b16 %v1454, %v1453
          %1471 = vmatpush.bf16.msra.mxu0 %v1462
          %1472 = vmatpush.bf16.msra.mxu0 %v1461
          %1473 = vmatpush.bf16.msra.mxu0 %v1460
          %1474 = vmatpush.bf16.msra.mxu0 %v1459
          %1475 = vmatpush.bf16.msra.mxu0 %v1458
          %1476 = vmatpush.bf16.msra.mxu0 %v1457
          %1477 = vmatpush.bf16.msra.mxu0 %v1456
          %1478 = vmatpush.bf16.msra.mxu0 %v1455
          %1479 = vmatmul.bf16.gmra.mxu0 %v1391
          %v1480 = vpop.f32.mrf.mxu0
          %v1481 = vadd.f32 %v1295, %v1480
          %v1482 = vpop.f32.mrf.mxu0
          %v1483 = vadd.f32 %v1296, %v1482
          %1484 = vmatmul.bf16.gmra.mxu0 %v1392
          %v1485 = vpop.f32.mrf.mxu0
          %v1486 = vadd.f32 %v1297, %v1485
          %v1487 = vpop.f32.mrf.mxu0
          %v1488 = vadd.f32 %v1298, %v1487
          %1489 = vmatmul.bf16.gmra.mxu0 %v1393
          %v1490 = vpop.f32.mrf.mxu0
          %v1491 = vadd.f32 %v1299, %v1490
          %v1492 = vpop.f32.mrf.mxu0
          %v1493 = vadd.f32 %v1300, %v1492
          %1494 = vmatmul.bf16.gmra.mxu0 %v1394
          %v1495 = vpop.f32.mrf.mxu0
          %v1496 = vadd.f32 %v1301, %v1495
          %v1497 = vpop.f32.mrf.mxu0
          %v1498 = vadd.f32 %v1302, %v1497
          %1499 = vmatmul.bf16.gmra.mxu0 %v1395
          %v1500 = vpop.f32.mrf.mxu0
          %v1501 = vadd.f32 %v1303, %v1500
          %v1502 = vpop.f32.mrf.mxu0
          %v1503 = vadd.f32 %v1304, %v1502
          %1504 = vmatmul.bf16.gmra.mxu0 %v1396
          %v1505 = vpop.f32.mrf.mxu0
          %v1506 = vadd.f32 %v1305, %v1505
          %v1507 = vpop.f32.mrf.mxu0
          %v1508 = vadd.f32 %v1306, %v1507
          %1509 = vmatmul.bf16.gmra.mxu0 %v1397
          %v1510 = vpop.f32.mrf.mxu0
          %v1511 = vadd.f32 %v1307, %v1510
          %v1512 = vpop.f32.mrf.mxu0
          %v1513 = vadd.f32 %v1308, %v1512
          %1514 = vmatmul.bf16.gmra.mxu0 %v1398
          %v1515 = vpop.f32.mrf.mxu0
          %v1516 = vadd.f32 %v1309, %v1515
          %v1517 = vpop.f32.mrf.mxu0
          %v1518 = vadd.f32 %v1310, %v1517
          %1519 = vmatmul.bf16.gmra.mxu0 %v1399
          %v1520 = vpop.f32.mrf.mxu0
          %v1521 = vadd.f32 %v1311, %v1520
          %v1522 = vpop.f32.mrf.mxu0
          %v1523 = vadd.f32 %v1312, %v1522
          %1524 = vmatmul.bf16.gmra.mxu0 %v1400
          %v1525 = vpop.f32.mrf.mxu0
          %v1526 = vadd.f32 %v1313, %v1525
          %v1527 = vpop.f32.mrf.mxu0
          %v1528 = vadd.f32 %v1314, %v1527
          %1529 = vmatmul.bf16.gmra.mxu0 %v1401
          %v1530 = vpop.f32.mrf.mxu0
          %v1531 = vadd.f32 %v1315, %v1530
          %v1532 = vpop.f32.mrf.mxu0
          %v1533 = vadd.f32 %v1316, %v1532
          %1534 = vmatmul.bf16.gmra.mxu0 %v1402
          %v1535 = vpop.f32.mrf.mxu0
          %v1536 = vadd.f32 %v1317, %v1535
          %v1537 = vpop.f32.mrf.mxu0
          %v1538 = vadd.f32 %v1318, %v1537
          %1539 = vmatmul.bf16.gmra.mxu0 %v1403
          %v1540 = vpop.f32.mrf.mxu0
          %v1541 = vadd.f32 %v1319, %v1540
          %v1542 = vpop.f32.mrf.mxu0
          %v1543 = vadd.f32 %v1320, %v1542
          %1544 = vmatmul.bf16.gmra.mxu0 %v1404
          %v1545 = vpop.f32.mrf.mxu0
          %v1546 = vadd.f32 %v1321, %v1545
          %v1547 = vpop.f32.mrf.mxu0
          %v1548 = vadd.f32 %v1322, %v1547
          %1549 = vmatmul.bf16.gmra.mxu0 %v1405
          %v1550 = vpop.f32.mrf.mxu0
          %v1551 = vadd.f32 %v1323, %v1550
          %v1552 = vpop.f32.mrf.mxu0
          %v1553 = vadd.f32 %v1324, %v1552
          %1554 = vmatmul.bf16.gmra.mxu0 %v1406
          %v1555 = vpop.f32.mrf.mxu0
          %v1556 = vadd.f32 %v1325, %v1555
          %v1557 = vpop.f32.mrf.mxu0
          %v1558 = vadd.f32 %v1326, %v1557
          %1559 = vdwg.mxu0
          %v1560 = vpack.c.bf16 %v1481, %v1481
          %v1561 = vpack.c.bf16 %v1483, %v1483
          %v1562 = vpack.c.bf16 %v1486, %v1486
          %v1563 = vpack.c.bf16 %v1488, %v1488
          %v1564 = vpack.c.bf16 %v1491, %v1491
          %v1565 = vpack.c.bf16 %v1493, %v1493
          %v1566 = vpack.c.bf16 %v1496, %v1496
          %v1567 = vpack.c.bf16 %v1498, %v1498
          %v1568 = vpack.c.bf16 %v1501, %v1501
          %v1569 = vpack.c.bf16 %v1503, %v1503
          %v1570 = vpack.c.bf16 %v1506, %v1506
          %v1571 = vpack.c.bf16 %v1508, %v1508
          %v1572 = vpack.c.bf16 %v1511, %v1511
          %v1573 = vpack.c.bf16 %v1513, %v1513
          %v1574 = vpack.c.bf16 %v1516, %v1516
          %v1575 = vpack.c.bf16 %v1518, %v1518
          %v1576 = vpack.c.bf16 %v1521, %v1521
          %v1577 = vpack.c.bf16 %v1523, %v1523
          %v1578 = vpack.c.bf16 %v1526, %v1526
          %v1579 = vpack.c.bf16 %v1528, %v1528
          %v1580 = vpack.c.bf16 %v1531, %v1531
          %v1581 = vpack.c.bf16 %v1533, %v1533
          %v1582 = vpack.c.bf16 %v1536, %v1536
          %v1583 = vpack.c.bf16 %v1538, %v1538
          %v1584 = vpack.c.bf16 %v1541, %v1541
          %v1585 = vpack.c.bf16 %v1543, %v1543
          %v1586 = vpack.c.bf16 %v1546, %v1546
          %v1587 = vpack.c.bf16 %v1548, %v1548
          %v1588 = vpack.c.bf16 %v1551, %v1551
          %v1589 = vpack.c.bf16 %v1553, %v1553
          %v1590 = vpack.c.bf16 %v1556, %v1556
          %v1591 = vpack.c.bf16 %v1558, %v1558
          %1592 = vst [vmem:[#allocation4] sm:$0xf] %v1560
          %1593 = vst [vmem:[#allocation4 + $0x4] sm:$0xf] %v1561
          %1594 = vst [vmem:[#allocation4 + $0x8] sm:$0xf] %v1562
          %1595 = vst [vmem:[#allocation4 + $0xc] sm:$0xf] %v1563
          %1596 = vst [vmem:[#allocation4 + $0x10] sm:$0xf] %v1564
          %1597 = vst [vmem:[#allocation4 + $0x14] sm:$0xf] %v1565
          %1598 = vst [vmem:[#allocation4 + $0x18] sm:$0xf] %v1566
          %1599 = vst [vmem:[#allocation4 + $0x1c] sm:$0xf] %v1567
          %1600 = vst [vmem:[#allocation4 + $0x20] sm:$0xf] %v1568
          %1601 = vst [vmem:[#allocation4 + $0x24] sm:$0xf] %v1569
          %1602 = vst [vmem:[#allocation4 + $0x28] sm:$0xf] %v1570
          %1603 = vst [vmem:[#allocation4 + $0x2c] sm:$0xf] %v1571
          %1604 = vst [vmem:[#allocation4 + $0x30] sm:$0xf] %v1572
          %1605 = vst [vmem:[#allocation4 + $0x34] sm:$0xf] %v1573
          %1606 = vst [vmem:[#allocation4 + $0x38] sm:$0xf] %v1574
          %1607 = vst [vmem:[#allocation4 + $0x3c] sm:$0xf] %v1575
          %1608 = vst [vmem:[#allocation4 + $0x40] sm:$0xf] %v1576
          %1609 = vst [vmem:[#allocation4 + $0x44] sm:$0xf] %v1577
          %1610 = vst [vmem:[#allocation4 + $0x48] sm:$0xf] %v1578
          %1611 = vst [vmem:[#allocation4 + $0x4c] sm:$0xf] %v1579
          %1612 = vst [vmem:[#allocation4 + $0x50] sm:$0xf] %v1580
          %1613 = vst [vmem:[#allocation4 + $0x54] sm:$0xf] %v1581
          %1614 = vst [vmem:[#allocation4 + $0x58] sm:$0xf] %v1582
          %1615 = vst [vmem:[#allocation4 + $0x5c] sm:$0xf] %v1583
          %1616 = vst [vmem:[#allocation4 + $0x60] sm:$0xf] %v1584
          %1617 = vst [vmem:[#allocation4 + $0x64] sm:$0xf] %v1585
          %1618 = vst [vmem:[#allocation4 + $0x68] sm:$0xf] %v1586
          %1619 = vst [vmem:[#allocation4 + $0x6c] sm:$0xf] %v1587
          %1620 = vst [vmem:[#allocation4 + $0x70] sm:$0xf] %v1588
          %1621 = vst [vmem:[#allocation4 + $0x74] sm:$0xf] %v1589
          %1622 = vst [vmem:[#allocation4 + $0x78] sm:$0xf] %v1590
          %1623 = vst [vmem:[#allocation4 + $0x7c] sm:$0xf] %v1591
        $region104: #{tpu_custom_call.1} parent=63 // pred_fallthru
          _
        %p1624 = scmp.eq.s32.totalorder %s32, 2
        %p1625 = pnand %p1624, %p515
        %p1626 = pneg %p1625
        // Predicated region
        $region105: #{tpu_custom_call.1} parent=63 // pred_check
          _
        $region106: #{tpu_custom_call.1} parent=63 // pred_check_branch
          %1628 = sbr.rel (%p1625) target = $region108
        $region107: #{tpu_custom_call.1} parent=63 // pred_region
          %v1629 = vld [vmem:[#allocation3] sm:$0xf]
          %v1630 = vld [vmem:[#allocation3 + $0x4] sm:$0xf]
          %v1631 = vld [vmem:[#allocation3 + $0x8] sm:$0xf]
          %v1632 = vld [vmem:[#allocation3 + $0xc] sm:$0xf]
          %v1633 = vld [vmem:[#allocation3 + $0x10] sm:$0xf]
          %v1634 = vld [vmem:[#allocation3 + $0x14] sm:$0xf]
          %v1635 = vld [vmem:[#allocation3 + $0x18] sm:$0xf]
          %v1636 = vld [vmem:[#allocation3 + $0x1c] sm:$0xf]
          %v1637 = vld [vmem:[#allocation3 + $0x20] sm:$0xf]
          %v1638 = vld [vmem:[#allocation3 + $0x24] sm:$0xf]
          %v1639 = vld [vmem:[#allocation3 + $0x28] sm:$0xf]
          %v1640 = vld [vmem:[#allocation3 + $0x2c] sm:$0xf]
          %v1641 = vld [vmem:[#allocation3 + $0x30] sm:$0xf]
          %v1642 = vld [vmem:[#allocation3 + $0x34] sm:$0xf]
          %v1643 = vld [vmem:[#allocation3 + $0x38] sm:$0xf]
          %v1644 = vld [vmem:[#allocation3 + $0x3c] sm:$0xf]
          %v1645 = vld [vmem:[#allocation3 + $0x40] sm:$0xf]
          %v1646 = vld [vmem:[#allocation3 + $0x44] sm:$0xf]
          %v1647 = vld [vmem:[#allocation3 + $0x48] sm:$0xf]
          %v1648 = vld [vmem:[#allocation3 + $0x4c] sm:$0xf]
          %v1649 = vld [vmem:[#allocation3 + $0x50] sm:$0xf]
          %v1650 = vld [vmem:[#allocation3 + $0x54] sm:$0xf]
          %v1651 = vld [vmem:[#allocation3 + $0x58] sm:$0xf]
          %v1652 = vld [vmem:[#allocation3 + $0x5c] sm:$0xf]
          %v1653 = vld [vmem:[#allocation3 + $0x60] sm:$0xf]
          %v1654 = vld [vmem:[#allocation3 + $0x64] sm:$0xf]
          %v1655 = vld [vmem:[#allocation3 + $0x68] sm:$0xf]
          %v1656 = vld [vmem:[#allocation3 + $0x6c] sm:$0xf]
          %v1657 = vld [vmem:[#allocation3 + $0x70] sm:$0xf]
          %v1658 = vld [vmem:[#allocation3 + $0x74] sm:$0xf]
          %v1659 = vld [vmem:[#allocation3 + $0x78] sm:$0xf]
          %v1660 = vld [vmem:[#allocation3 + $0x7c] sm:$0xf]
          %v1661 = vld [vmem:[#allocation14] sm:$0xf]
          %v1662 = vld [vmem:[#allocation14 + $0x4] sm:$0xf]
          %v1663 = vld [vmem:[#allocation14 + $0x8] sm:$0xf]
          %v1664 = vld [vmem:[#allocation14 + $0xc] sm:$0xf]
          %v1665 = vld [vmem:[#allocation14 + $0x10] sm:$0xf]
          %v1666 = vld [vmem:[#allocation14 + $0x14] sm:$0xf]
          %v1667 = vld [vmem:[#allocation14 + $0x18] sm:$0xf]
          %v1668 = vld [vmem:[#allocation14 + $0x1c] sm:$0xf]
          %v1669 = vld [vmem:[#allocation14 + $0x20] sm:$0xf]
          %v1670 = vld [vmem:[#allocation14 + $0x24] sm:$0xf]
          %v1671 = vld [vmem:[#allocation14 + $0x28] sm:$0xf]
          %v1672 = vld [vmem:[#allocation14 + $0x2c] sm:$0xf]
          %v1673 = vld [vmem:[#allocation14 + $0x30] sm:$0xf]
          %v1674 = vld [vmem:[#allocation14 + $0x34] sm:$0xf]
          %v1675 = vld [vmem:[#allocation14 + $0x38] sm:$0xf]
          %v1676 = vld [vmem:[#allocation14 + $0x3c] sm:$0xf]
          %v1709 = vunpack.c.l.b16 %v1629
          %v1710 = vunpack.c.l.b16 %v1630
          %v1711 = vunpack.c.l.b16 %v1631
          %v1712 = vunpack.c.l.b16 %v1632
          %v1713 = vunpack.c.l.b16 %v1633
          %v1714 = vunpack.c.l.b16 %v1634
          %v1715 = vunpack.c.l.b16 %v1635
          %v1716 = vunpack.c.l.b16 %v1636
          %v1717 = vunpack.c.l.b16 %v1637
          %v1718 = vunpack.c.l.b16 %v1638
          %v1719 = vunpack.c.l.b16 %v1639
          %v1720 = vunpack.c.l.b16 %v1640
          %v1721 = vunpack.c.l.b16 %v1641
          %v1722 = vunpack.c.l.b16 %v1642
          %v1723 = vunpack.c.l.b16 %v1643
          %v1724 = vunpack.c.l.b16 %v1644
          %v1725 = vunpack.c.l.b16 %v1645
          %v1726 = vunpack.c.l.b16 %v1646
          %v1727 = vunpack.c.l.b16 %v1647
          %v1728 = vunpack.c.l.b16 %v1648
          %v1729 = vunpack.c.l.b16 %v1649
          %v1730 = vunpack.c.l.b16 %v1650
          %v1731 = vunpack.c.l.b16 %v1651
          %v1732 = vunpack.c.l.b16 %v1652
          %v1733 = vunpack.c.l.b16 %v1653
          %v1734 = vunpack.c.l.b16 %v1654
          %v1735 = vunpack.c.l.b16 %v1655
          %v1736 = vunpack.c.l.b16 %v1656
          %v1737 = vunpack.c.l.b16 %v1657
          %v1738 = vunpack.c.l.b16 %v1658
          %v1739 = vunpack.c.l.b16 %v1659
          %v1740 = vunpack.c.l.b16 %v1660
          %v1741 = vpack.c.b16 %v1710, %v1709
          %v1742 = vpack.c.b16 %v1712, %v1711
          %v1743 = vpack.c.b16 %v1714, %v1713
          %v1744 = vpack.c.b16 %v1716, %v1715
          %v1745 = vpack.c.b16 %v1718, %v1717
          %v1746 = vpack.c.b16 %v1720, %v1719
          %v1747 = vpack.c.b16 %v1722, %v1721
          %v1748 = vpack.c.b16 %v1724, %v1723
          %v1749 = vpack.c.b16 %v1726, %v1725
          %v1750 = vpack.c.b16 %v1728, %v1727
          %v1751 = vpack.c.b16 %v1730, %v1729
          %v1752 = vpack.c.b16 %v1732, %v1731
          %v1753 = vpack.c.b16 %v1734, %v1733
          %v1754 = vpack.c.b16 %v1736, %v1735
          %v1755 = vpack.c.b16 %v1738, %v1737
          %v1756 = vpack.c.b16 %v1740, %v1739
          %v1789 = vunpack.c.l.b16 %v1661
          %v1790 = vunpack.c.l.b16 %v1662
          %v1791 = vunpack.c.l.b16 %v1663
          %v1792 = vunpack.c.l.b16 %v1664
          %v1793 = vunpack.c.l.b16 %v1665
          %v1794 = vunpack.c.l.b16 %v1666
          %v1795 = vunpack.c.l.b16 %v1667
          %v1796 = vunpack.c.l.b16 %v1668
          %v1797 = vunpack.c.l.b16 %v1669
          %v1798 = vunpack.c.l.b16 %v1670
          %v1799 = vunpack.c.l.b16 %v1671
          %v1800 = vunpack.c.l.b16 %v1672
          %v1801 = vunpack.c.l.b16 %v1673
          %v1802 = vunpack.c.l.b16 %v1674
          %v1803 = vunpack.c.l.b16 %v1675
          %v1804 = vunpack.c.l.b16 %v1676
          %v1805 = vpack.c.b16 %v1790, %v1789
          %v1806 = vpack.c.b16 %v1792, %v1791
          %v1807 = vpack.c.b16 %v1794, %v1793
          %v1808 = vpack.c.b16 %v1796, %v1795
          %v1809 = vpack.c.b16 %v1798, %v1797
          %v1810 = vpack.c.b16 %v1800, %v1799
          %v1811 = vpack.c.b16 %v1802, %v1801
          %v1812 = vpack.c.b16 %v1804, %v1803
          %1821 = vmatpush.bf16.msra.mxu0 %v1812
          %1822 = vmatpush.bf16.msra.mxu0 %v1811
          %1823 = vmatpush.bf16.msra.mxu0 %v1810
          %1824 = vmatpush.bf16.msra.mxu0 %v1809
          %1825 = vmatpush.bf16.msra.mxu0 %v1808
          %1826 = vmatpush.bf16.msra.mxu0 %v1807
          %1827 = vmatpush.bf16.msra.mxu0 %v1806
          %1828 = vmatpush.bf16.msra.mxu0 %v1805
          %1829 = vmatmul.bf16.gmra.mxu0 %v1741
          %v1830 = vpop.f32.mrf.mxu0
          %v1831 = vadd.f32 0.0, %v1830
          %v1832 = vpop.f32.mrf.mxu0
          %v1833 = vadd.f32 0.0, %v1832
          %1834 = vmatmul.bf16.gmra.mxu0 %v1742
          %v1835 = vpop.f32.mrf.mxu0
          %v1836 = vadd.f32 0.0, %v1835
          %v1837 = vpop.f32.mrf.mxu0
          %v1838 = vadd.f32 0.0, %v1837
          %1839 = vmatmul.bf16.gmra.mxu0 %v1743
          %v1840 = vpop.f32.mrf.mxu0
          %v1841 = vadd.f32 0.0, %v1840
          %v1842 = vpop.f32.mrf.mxu0
          %v1843 = vadd.f32 0.0, %v1842
          %1844 = vmatmul.bf16.gmra.mxu0 %v1744
          %v1845 = vpop.f32.mrf.mxu0
          %v1846 = vadd.f32 0.0, %v1845
          %v1847 = vpop.f32.mrf.mxu0
          %v1848 = vadd.f32 0.0, %v1847
          %1849 = vmatmul.bf16.gmra.mxu0 %v1745
          %v1850 = vpop.f32.mrf.mxu0
          %v1851 = vadd.f32 0.0, %v1850
          %v1852 = vpop.f32.mrf.mxu0
          %v1853 = vadd.f32 0.0, %v1852
          %1854 = vmatmul.bf16.gmra.mxu0 %v1746
          %v1855 = vpop.f32.mrf.mxu0
          %v1856 = vadd.f32 0.0, %v1855
          %v1857 = vpop.f32.mrf.mxu0
          %v1858 = vadd.f32 0.0, %v1857
          %1859 = vmatmul.bf16.gmra.mxu0 %v1747
          %v1860 = vpop.f32.mrf.mxu0
          %v1861 = vadd.f32 0.0, %v1860
          %v1862 = vpop.f32.mrf.mxu0
          %v1863 = vadd.f32 0.0, %v1862
          %1864 = vmatmul.bf16.gmra.mxu0 %v1748
          %v1865 = vpop.f32.mrf.mxu0
          %v1866 = vadd.f32 0.0, %v1865
          %v1867 = vpop.f32.mrf.mxu0
          %v1868 = vadd.f32 0.0, %v1867
          %1869 = vmatmul.bf16.gmra.mxu0 %v1749
          %v1870 = vpop.f32.mrf.mxu0
          %v1871 = vadd.f32 0.0, %v1870
          %v1872 = vpop.f32.mrf.mxu0
          %v1873 = vadd.f32 0.0, %v1872
          %1874 = vmatmul.bf16.gmra.mxu0 %v1750
          %v1875 = vpop.f32.mrf.mxu0
          %v1876 = vadd.f32 0.0, %v1875
          %v1877 = vpop.f32.mrf.mxu0
          %v1878 = vadd.f32 0.0, %v1877
          %1879 = vmatmul.bf16.gmra.mxu0 %v1751
          %v1880 = vpop.f32.mrf.mxu0
          %v1881 = vadd.f32 0.0, %v1880
          %v1882 = vpop.f32.mrf.mxu0
          %v1883 = vadd.f32 0.0, %v1882
          %1884 = vmatmul.bf16.gmra.mxu0 %v1752
          %v1885 = vpop.f32.mrf.mxu0
          %v1886 = vadd.f32 0.0, %v1885
          %v1887 = vpop.f32.mrf.mxu0
          %v1888 = vadd.f32 0.0, %v1887
          %1889 = vmatmul.bf16.gmra.mxu0 %v1753
          %v1890 = vpop.f32.mrf.mxu0
          %v1891 = vadd.f32 0.0, %v1890
          %v1892 = vpop.f32.mrf.mxu0
          %v1893 = vadd.f32 0.0, %v1892
          %1894 = vmatmul.bf16.gmra.mxu0 %v1754
          %v1895 = vpop.f32.mrf.mxu0
          %v1896 = vadd.f32 0.0, %v1895
          %v1897 = vpop.f32.mrf.mxu0
          %v1898 = vadd.f32 0.0, %v1897
          %1899 = vmatmul.bf16.gmra.mxu0 %v1755
          %v1900 = vpop.f32.mrf.mxu0
          %v1901 = vadd.f32 0.0, %v1900
          %v1902 = vpop.f32.mrf.mxu0
          %v1903 = vadd.f32 0.0, %v1902
          %1904 = vmatmul.bf16.gmra.mxu0 %v1756
          %v1905 = vpop.f32.mrf.mxu0
          %v1906 = vadd.f32 0.0, %v1905
          %v1907 = vpop.f32.mrf.mxu0
          %v1908 = vadd.f32 0.0, %v1907
          %1909 = vdwg.mxu0
          %v1910 = vpack.c.bf16 %v1831, %v1831
          %v1911 = vpack.c.bf16 %v1833, %v1833
          %v1912 = vpack.c.bf16 %v1836, %v1836
          %v1913 = vpack.c.bf16 %v1838, %v1838
          %v1914 = vpack.c.bf16 %v1841, %v1841
          %v1915 = vpack.c.bf16 %v1843, %v1843
          %v1916 = vpack.c.bf16 %v1846, %v1846
          %v1917 = vpack.c.bf16 %v1848, %v1848
          %v1918 = vpack.c.bf16 %v1851, %v1851
          %v1919 = vpack.c.bf16 %v1853, %v1853
          %v1920 = vpack.c.bf16 %v1856, %v1856
          %v1921 = vpack.c.bf16 %v1858, %v1858
          %v1922 = vpack.c.bf16 %v1861, %v1861
          %v1923 = vpack.c.bf16 %v1863, %v1863
          %v1924 = vpack.c.bf16 %v1866, %v1866
          %v1925 = vpack.c.bf16 %v1868, %v1868
          %v1926 = vpack.c.bf16 %v1871, %v1871
          %v1927 = vpack.c.bf16 %v1873, %v1873
          %v1928 = vpack.c.bf16 %v1876, %v1876
          %v1929 = vpack.c.bf16 %v1878, %v1878
          %v1930 = vpack.c.bf16 %v1881, %v1881
          %v1931 = vpack.c.bf16 %v1883, %v1883
          %v1932 = vpack.c.bf16 %v1886, %v1886
          %v1933 = vpack.c.bf16 %v1888, %v1888
          %v1934 = vpack.c.bf16 %v1891, %v1891
          %v1935 = vpack.c.bf16 %v1893, %v1893
          %v1936 = vpack.c.bf16 %v1896, %v1896
          %v1937 = vpack.c.bf16 %v1898, %v1898
          %v1938 = vpack.c.bf16 %v1901, %v1901
          %v1939 = vpack.c.bf16 %v1903, %v1903
          %v1940 = vpack.c.bf16 %v1906, %v1906
          %v1941 = vpack.c.bf16 %v1908, %v1908
          %1942 = vst [vmem:[#allocation4] sm:$0xf] %v1910
          %1943 = vst [vmem:[#allocation4 + $0x4] sm:$0xf] %v1911
          %1944 = vst [vmem:[#allocation4 + $0x8] sm:$0xf] %v1912
          %1945 = vst [vmem:[#allocation4 + $0xc] sm:$0xf] %v1913
          %1946 = vst [vmem:[#allocation4 + $0x10] sm:$0xf] %v1914
          %1947 = vst [vmem:[#allocation4 + $0x14] sm:$0xf] %v1915
          %1948 = vst [vmem:[#allocation4 + $0x18] sm:$0xf] %v1916
          %1949 = vst [vmem:[#allocation4 + $0x1c] sm:$0xf] %v1917
          %1950 = vst [vmem:[#allocation4 + $0x20] sm:$0xf] %v1918
          %1951 = vst [vmem:[#allocation4 + $0x24] sm:$0xf] %v1919
          %1952 = vst [vmem:[#allocation4 + $0x28] sm:$0xf] %v1920
          %1953 = vst [vmem:[#allocation4 + $0x2c] sm:$0xf] %v1921
          %1954 = vst [vmem:[#allocation4 + $0x30] sm:$0xf] %v1922
          %1955 = vst [vmem:[#allocation4 + $0x34] sm:$0xf] %v1923
          %1956 = vst [vmem:[#allocation4 + $0x38] sm:$0xf] %v1924
          %1957 = vst [vmem:[#allocation4 + $0x3c] sm:$0xf] %v1925
          %1958 = vst [vmem:[#allocation4 + $0x40] sm:$0xf] %v1926
          %1959 = vst [vmem:[#allocation4 + $0x44] sm:$0xf] %v1927
          %1960 = vst [vmem:[#allocation4 + $0x48] sm:$0xf] %v1928
          %1961 = vst [vmem:[#allocation4 + $0x4c] sm:$0xf] %v1929
          %1962 = vst [vmem:[#allocation4 + $0x50] sm:$0xf] %v1930
          %1963 = vst [vmem:[#allocation4 + $0x54] sm:$0xf] %v1931
          %1964 = vst [vmem:[#allocation4 + $0x58] sm:$0xf] %v1932
          %1965 = vst [vmem:[#allocation4 + $0x5c] sm:$0xf] %v1933
          %1966 = vst [vmem:[#allocation4 + $0x60] sm:$0xf] %v1934
          %1967 = vst [vmem:[#allocation4 + $0x64] sm:$0xf] %v1935
          %1968 = vst [vmem:[#allocation4 + $0x68] sm:$0xf] %v1936
          %1969 = vst [vmem:[#allocation4 + $0x6c] sm:$0xf] %v1937
          %1970 = vst [vmem:[#allocation4 + $0x70] sm:$0xf] %v1938
          %1971 = vst [vmem:[#allocation4 + $0x74] sm:$0xf] %v1939
          %1972 = vst [vmem:[#allocation4 + $0x78] sm:$0xf] %v1940
          %1973 = vst [vmem:[#allocation4 + $0x7c] sm:$0xf] %v1941
          %v1974 = vld [vmem:[#allocation2] sm:$0xf]
          %v1975 = vld [vmem:[#allocation2 + $0x4] sm:$0xf]
          %v1976 = vld [vmem:[#allocation2 + $0x8] sm:$0xf]
          %v1977 = vld [vmem:[#allocation2 + $0xc] sm:$0xf]
          %v1978 = vld [vmem:[#allocation2 + $0x10] sm:$0xf]
          %v1979 = vld [vmem:[#allocation2 + $0x14] sm:$0xf]
          %v1980 = vld [vmem:[#allocation2 + $0x18] sm:$0xf]
          %v1981 = vld [vmem:[#allocation2 + $0x1c] sm:$0xf]
          %v1982 = vld [vmem:[#allocation2 + $0x20] sm:$0xf]
          %v1983 = vld [vmem:[#allocation2 + $0x24] sm:$0xf]
          %v1984 = vld [vmem:[#allocation2 + $0x28] sm:$0xf]
          %v1985 = vld [vmem:[#allocation2 + $0x2c] sm:$0xf]
          %v1986 = vld [vmem:[#allocation2 + $0x30] sm:$0xf]
          %v1987 = vld [vmem:[#allocation2 + $0x34] sm:$0xf]
          %v1988 = vld [vmem:[#allocation2 + $0x38] sm:$0xf]
          %v1989 = vld [vmem:[#allocation2 + $0x3c] sm:$0xf]
          %v1990 = vld [vmem:[#allocation2 + $0x40] sm:$0xf]
          %v1991 = vld [vmem:[#allocation2 + $0x44] sm:$0xf]
          %v1992 = vld [vmem:[#allocation2 + $0x48] sm:$0xf]
          %v1993 = vld [vmem:[#allocation2 + $0x4c] sm:$0xf]
          %v1994 = vld [vmem:[#allocation2 + $0x50] sm:$0xf]
          %v1995 = vld [vmem:[#allocation2 + $0x54] sm:$0xf]
          %v1996 = vld [vmem:[#allocation2 + $0x58] sm:$0xf]
          %v1997 = vld [vmem:[#allocation2 + $0x5c] sm:$0xf]
          %v1998 = vld [vmem:[#allocation2 + $0x60] sm:$0xf]
          %v1999 = vld [vmem:[#allocation2 + $0x64] sm:$0xf]
          %v2000 = vld [vmem:[#allocation2 + $0x68] sm:$0xf]
          %v2001 = vld [vmem:[#allocation2 + $0x6c] sm:$0xf]
          %v2002 = vld [vmem:[#allocation2 + $0x70] sm:$0xf]
          %v2003 = vld [vmem:[#allocation2 + $0x74] sm:$0xf]
          %v2004 = vld [vmem:[#allocation2 + $0x78] sm:$0xf]
          %v2005 = vld [vmem:[#allocation2 + $0x7c] sm:$0xf]
          %v2006 = vld [vmem:[#allocation16] sm:$0xf]
          %v2007 = vld [vmem:[#allocation16 + $0x4] sm:$0xf]
          %v2008 = vld [vmem:[#allocation16 + $0x8] sm:$0xf]
          %v2009 = vld [vmem:[#allocation16 + $0xc] sm:$0xf]
          %v2010 = vld [vmem:[#allocation16 + $0x10] sm:$0xf]
          %v2011 = vld [vmem:[#allocation16 + $0x14] sm:$0xf]
          %v2012 = vld [vmem:[#allocation16 + $0x18] sm:$0xf]
          %v2013 = vld [vmem:[#allocation16 + $0x1c] sm:$0xf]
          %v2014 = vld [vmem:[#allocation16 + $0x20] sm:$0xf]
          %v2015 = vld [vmem:[#allocation16 + $0x24] sm:$0xf]
          %v2016 = vld [vmem:[#allocation16 + $0x28] sm:$0xf]
          %v2017 = vld [vmem:[#allocation16 + $0x2c] sm:$0xf]
          %v2018 = vld [vmem:[#allocation16 + $0x30] sm:$0xf]
          %v2019 = vld [vmem:[#allocation16 + $0x34] sm:$0xf]
          %v2020 = vld [vmem:[#allocation16 + $0x38] sm:$0xf]
          %v2021 = vld [vmem:[#allocation16 + $0x3c] sm:$0xf]
          %v2022 = vld [vmem:[#allocation4] sm:$0xf]
          %v2023 = vld [vmem:[#allocation4 + $0x4] sm:$0xf]
          %v2024 = vld [vmem:[#allocation4 + $0x8] sm:$0xf]
          %v2025 = vld [vmem:[#allocation4 + $0xc] sm:$0xf]
          %v2026 = vld [vmem:[#allocation4 + $0x10] sm:$0xf]
          %v2027 = vld [vmem:[#allocation4 + $0x14] sm:$0xf]
          %v2028 = vld [vmem:[#allocation4 + $0x18] sm:$0xf]
          %v2029 = vld [vmem:[#allocation4 + $0x1c] sm:$0xf]
          %v2030 = vld [vmem:[#allocation4 + $0x20] sm:$0xf]
          %v2031 = vld [vmem:[#allocation4 + $0x24] sm:$0xf]
          %v2032 = vld [vmem:[#allocation4 + $0x28] sm:$0xf]
          %v2033 = vld [vmem:[#allocation4 + $0x2c] sm:$0xf]
          %v2034 = vld [vmem:[#allocation4 + $0x30] sm:$0xf]
          %v2035 = vld [vmem:[#allocation4 + $0x34] sm:$0xf]
          %v2036 = vld [vmem:[#allocation4 + $0x38] sm:$0xf]
          %v2037 = vld [vmem:[#allocation4 + $0x3c] sm:$0xf]
          %v2038 = vld [vmem:[#allocation4 + $0x40] sm:$0xf]
          %v2039 = vld [vmem:[#allocation4 + $0x44] sm:$0xf]
          %v2040 = vld [vmem:[#allocation4 + $0x48] sm:$0xf]
          %v2041 = vld [vmem:[#allocation4 + $0x4c] sm:$0xf]
          %v2042 = vld [vmem:[#allocation4 + $0x50] sm:$0xf]
          %v2043 = vld [vmem:[#allocation4 + $0x54] sm:$0xf]
          %v2044 = vld [vmem:[#allocation4 + $0x58] sm:$0xf]
          %v2045 = vld [vmem:[#allocation4 + $0x5c] sm:$0xf]
          %v2046 = vld [vmem:[#allocation4 + $0x60] sm:$0xf]
          %v2047 = vld [vmem:[#allocation4 + $0x64] sm:$0xf]
          %v2048 = vld [vmem:[#allocation4 + $0x68] sm:$0xf]
          %v2049 = vld [vmem:[#allocation4 + $0x6c] sm:$0xf]
          %v2050 = vld [vmem:[#allocation4 + $0x70] sm:$0xf]
          %v2051 = vld [vmem:[#allocation4 + $0x74] sm:$0xf]
          %v2052 = vld [vmem:[#allocation4 + $0x78] sm:$0xf]
          %v2053 = vld [vmem:[#allocation4 + $0x7c] sm:$0xf]
          %v2054 = vunpack.c.l.bf16 %v2022
          %v2055 = vunpack.c.l.bf16 %v2023
          %v2056 = vunpack.c.l.bf16 %v2024
          %v2057 = vunpack.c.l.bf16 %v2025
          %v2058 = vunpack.c.l.bf16 %v2026
          %v2059 = vunpack.c.l.bf16 %v2027
          %v2060 = vunpack.c.l.bf16 %v2028
          %v2061 = vunpack.c.l.bf16 %v2029
          %v2062 = vunpack.c.l.bf16 %v2030
          %v2063 = vunpack.c.l.bf16 %v2031
          %v2064 = vunpack.c.l.bf16 %v2032
          %v2065 = vunpack.c.l.bf16 %v2033
          %v2066 = vunpack.c.l.bf16 %v2034
          %v2067 = vunpack.c.l.bf16 %v2035
          %v2068 = vunpack.c.l.bf16 %v2036
          %v2069 = vunpack.c.l.bf16 %v2037
          %v2070 = vunpack.c.l.bf16 %v2038
          %v2071 = vunpack.c.l.bf16 %v2039
          %v2072 = vunpack.c.l.bf16 %v2040
          %v2073 = vunpack.c.l.bf16 %v2041
          %v2074 = vunpack.c.l.bf16 %v2042
          %v2075 = vunpack.c.l.bf16 %v2043
          %v2076 = vunpack.c.l.bf16 %v2044
          %v2077 = vunpack.c.l.bf16 %v2045
          %v2078 = vunpack.c.l.bf16 %v2046
          %v2079 = vunpack.c.l.bf16 %v2047
          %v2080 = vunpack.c.l.bf16 %v2048
          %v2081 = vunpack.c.l.bf16 %v2049
          %v2082 = vunpack.c.l.bf16 %v2050
          %v2083 = vunpack.c.l.bf16 %v2051
          %v2084 = vunpack.c.l.bf16 %v2052
          %v2085 = vunpack.c.l.bf16 %v2053
          %v2118 = vunpack.c.l.b16 %v1974
          %v2119 = vunpack.c.l.b16 %v1975
          %v2120 = vunpack.c.l.b16 %v1976
          %v2121 = vunpack.c.l.b16 %v1977
          %v2122 = vunpack.c.l.b16 %v1978
          %v2123 = vunpack.c.l.b16 %v1979
          %v2124 = vunpack.c.l.b16 %v1980
          %v2125 = vunpack.c.l.b16 %v1981
          %v2126 = vunpack.c.l.b16 %v1982
          %v2127 = vunpack.c.l.b16 %v1983
          %v2128 = vunpack.c.l.b16 %v1984
          %v2129 = vunpack.c.l.b16 %v1985
          %v2130 = vunpack.c.l.b16 %v1986
          %v2131 = vunpack.c.l.b16 %v1987
          %v2132 = vunpack.c.l.b16 %v1988
          %v2133 = vunpack.c.l.b16 %v1989
          %v2134 = vunpack.c.l.b16 %v1990
          %v2135 = vunpack.c.l.b16 %v1991
          %v2136 = vunpack.c.l.b16 %v1992
          %v2137 = vunpack.c.l.b16 %v1993
          %v2138 = vunpack.c.l.b16 %v1994
          %v2139 = vunpack.c.l.b16 %v1995
          %v2140 = vunpack.c.l.b16 %v1996
          %v2141 = vunpack.c.l.b16 %v1997
          %v2142 = vunpack.c.l.b16 %v1998
          %v2143 = vunpack.c.l.b16 %v1999
          %v2144 = vunpack.c.l.b16 %v2000
          %v2145 = vunpack.c.l.b16 %v2001
          %v2146 = vunpack.c.l.b16 %v2002
          %v2147 = vunpack.c.l.b16 %v2003
          %v2148 = vunpack.c.l.b16 %v2004
          %v2149 = vunpack.c.l.b16 %v2005
          %v2150 = vpack.c.b16 %v2119, %v2118
          %v2151 = vpack.c.b16 %v2121, %v2120
          %v2152 = vpack.c.b16 %v2123, %v2122
          %v2153 = vpack.c.b16 %v2125, %v2124
          %v2154 = vpack.c.b16 %v2127, %v2126
          %v2155 = vpack.c.b16 %v2129, %v2128
          %v2156 = vpack.c.b16 %v2131, %v2130
          %v2157 = vpack.c.b16 %v2133, %v2132
          %v2158 = vpack.c.b16 %v2135, %v2134
          %v2159 = vpack.c.b16 %v2137, %v2136
          %v2160 = vpack.c.b16 %v2139, %v2138
          %v2161 = vpack.c.b16 %v2141, %v2140
          %v2162 = vpack.c.b16 %v2143, %v2142
          %v2163 = vpack.c.b16 %v2145, %v2144
          %v2164 = vpack.c.b16 %v2147, %v2146
          %v2165 = vpack.c.b16 %v2149, %v2148
          %v2198 = vunpack.c.l.b16 %v2006
          %v2199 = vunpack.c.l.b16 %v2007
          %v2200 = vunpack.c.l.b16 %v2008
          %v2201 = vunpack.c.l.b16 %v2009
          %v2202 = vunpack.c.l.b16 %v2010
          %v2203 = vunpack.c.l.b16 %v2011
          %v2204 = vunpack.c.l.b16 %v2012
          %v2205 = vunpack.c.l.b16 %v2013
          %v2206 = vunpack.c.l.b16 %v2014
          %v2207 = vunpack.c.l.b16 %v2015
          %v2208 = vunpack.c.l.b16 %v2016
          %v2209 = vunpack.c.l.b16 %v2017
          %v2210 = vunpack.c.l.b16 %v2018
          %v2211 = vunpack.c.l.b16 %v2019
          %v2212 = vunpack.c.l.b16 %v2020
          %v2213 = vunpack.c.l.b16 %v2021
          %v2214 = vpack.c.b16 %v2199, %v2198
          %v2215 = vpack.c.b16 %v2201, %v2200
          %v2216 = vpack.c.b16 %v2203, %v2202
          %v2217 = vpack.c.b16 %v2205, %v2204
          %v2218 = vpack.c.b16 %v2207, %v2206
          %v2219 = vpack.c.b16 %v2209, %v2208
          %v2220 = vpack.c.b16 %v2211, %v2210
          %v2221 = vpack.c.b16 %v2213, %v2212
          %2230 = vmatpush.bf16.msra.mxu0 %v2221
          %2231 = vmatpush.bf16.msra.mxu0 %v2220
          %2232 = vmatpush.bf16.msra.mxu0 %v2219
          %2233 = vmatpush.bf16.msra.mxu0 %v2218
          %2234 = vmatpush.bf16.msra.mxu0 %v2217
          %2235 = vmatpush.bf16.msra.mxu0 %v2216
          %2236 = vmatpush.bf16.msra.mxu0 %v2215
          %2237 = vmatpush.bf16.msra.mxu0 %v2214
          %2238 = vmatmul.bf16.gmra.mxu0 %v2150
          %v2239 = vpop.f32.mrf.mxu0
          %v2240 = vadd.f32 %v2054, %v2239
          %v2241 = vpop.f32.mrf.mxu0
          %v2242 = vadd.f32 %v2055, %v2241
          %2243 = vmatmul.bf16.gmra.mxu0 %v2151
          %v2244 = vpop.f32.mrf.mxu0
          %v2245 = vadd.f32 %v2056, %v2244
          %v2246 = vpop.f32.mrf.mxu0
          %v2247 = vadd.f32 %v2057, %v2246
          %2248 = vmatmul.bf16.gmra.mxu0 %v2152
          %v2249 = vpop.f32.mrf.mxu0
          %v2250 = vadd.f32 %v2058, %v2249
          %v2251 = vpop.f32.mrf.mxu0
          %v2252 = vadd.f32 %v2059, %v2251
          %2253 = vmatmul.bf16.gmra.mxu0 %v2153
          %v2254 = vpop.f32.mrf.mxu0
          %v2255 = vadd.f32 %v2060, %v2254
          %v2256 = vpop.f32.mrf.mxu0
          %v2257 = vadd.f32 %v2061, %v2256
          %2258 = vmatmul.bf16.gmra.mxu0 %v2154
          %v2259 = vpop.f32.mrf.mxu0
          %v2260 = vadd.f32 %v2062, %v2259
          %v2261 = vpop.f32.mrf.mxu0
          %v2262 = vadd.f32 %v2063, %v2261
          %2263 = vmatmul.bf16.gmra.mxu0 %v2155
          %v2264 = vpop.f32.mrf.mxu0
          %v2265 = vadd.f32 %v2064, %v2264
          %v2266 = vpop.f32.mrf.mxu0
          %v2267 = vadd.f32 %v2065, %v2266
          %2268 = vmatmul.bf16.gmra.mxu0 %v2156
          %v2269 = vpop.f32.mrf.mxu0
          %v2270 = vadd.f32 %v2066, %v2269
          %v2271 = vpop.f32.mrf.mxu0
          %v2272 = vadd.f32 %v2067, %v2271
          %2273 = vmatmul.bf16.gmra.mxu0 %v2157
          %v2274 = vpop.f32.mrf.mxu0
          %v2275 = vadd.f32 %v2068, %v2274
          %v2276 = vpop.f32.mrf.mxu0
          %v2277 = vadd.f32 %v2069, %v2276
          %2278 = vmatmul.bf16.gmra.mxu0 %v2158
          %v2279 = vpop.f32.mrf.mxu0
          %v2280 = vadd.f32 %v2070, %v2279
          %v2281 = vpop.f32.mrf.mxu0
          %v2282 = vadd.f32 %v2071, %v2281
          %2283 = vmatmul.bf16.gmra.mxu0 %v2159
          %v2284 = vpop.f32.mrf.mxu0
          %v2285 = vadd.f32 %v2072, %v2284
          %v2286 = vpop.f32.mrf.mxu0
          %v2287 = vadd.f32 %v2073, %v2286
          %2288 = vmatmul.bf16.gmra.mxu0 %v2160
          %v2289 = vpop.f32.mrf.mxu0
          %v2290 = vadd.f32 %v2074, %v2289
          %v2291 = vpop.f32.mrf.mxu0
          %v2292 = vadd.f32 %v2075, %v2291
          %2293 = vmatmul.bf16.gmra.mxu0 %v2161
          %v2294 = vpop.f32.mrf.mxu0
          %v2295 = vadd.f32 %v2076, %v2294
          %v2296 = vpop.f32.mrf.mxu0
          %v2297 = vadd.f32 %v2077, %v2296
          %2298 = vmatmul.bf16.gmra.mxu0 %v2162
          %v2299 = vpop.f32.mrf.mxu0
          %v2300 = vadd.f32 %v2078, %v2299
          %v2301 = vpop.f32.mrf.mxu0
          %v2302 = vadd.f32 %v2079, %v2301
          %2303 = vmatmul.bf16.gmra.mxu0 %v2163
          %v2304 = vpop.f32.mrf.mxu0
          %v2305 = vadd.f32 %v2080, %v2304
          %v2306 = vpop.f32.mrf.mxu0
          %v2307 = vadd.f32 %v2081, %v2306
          %2308 = vmatmul.bf16.gmra.mxu0 %v2164
          %v2309 = vpop.f32.mrf.mxu0
          %v2310 = vadd.f32 %v2082, %v2309
          %v2311 = vpop.f32.mrf.mxu0
          %v2312 = vadd.f32 %v2083, %v2311
          %2313 = vmatmul.bf16.gmra.mxu0 %v2165
          %v2314 = vpop.f32.mrf.mxu0
          %v2315 = vadd.f32 %v2084, %v2314
          %v2316 = vpop.f32.mrf.mxu0
          %v2317 = vadd.f32 %v2085, %v2316
          %2318 = vdwg.mxu0
          %v2319 = vpack.c.bf16 %v2240, %v2240
          %v2320 = vpack.c.bf16 %v2242, %v2242
          %v2321 = vpack.c.bf16 %v2245, %v2245
          %v2322 = vpack.c.bf16 %v2247, %v2247
          %v2323 = vpack.c.bf16 %v2250, %v2250
          %v2324 = vpack.c.bf16 %v2252, %v2252
          %v2325 = vpack.c.bf16 %v2255, %v2255
          %v2326 = vpack.c.bf16 %v2257, %v2257
          %v2327 = vpack.c.bf16 %v2260, %v2260
          %v2328 = vpack.c.bf16 %v2262, %v2262
          %v2329 = vpack.c.bf16 %v2265, %v2265
          %v2330 = vpack.c.bf16 %v2267, %v2267
          %v2331 = vpack.c.bf16 %v2270, %v2270
          %v2332 = vpack.c.bf16 %v2272, %v2272
          %v2333 = vpack.c.bf16 %v2275, %v2275
          %v2334 = vpack.c.bf16 %v2277, %v2277
          %v2335 = vpack.c.bf16 %v2280, %v2280
          %v2336 = vpack.c.bf16 %v2282, %v2282
          %v2337 = vpack.c.bf16 %v2285, %v2285
          %v2338 = vpack.c.bf16 %v2287, %v2287
          %v2339 = vpack.c.bf16 %v2290, %v2290
          %v2340 = vpack.c.bf16 %v2292, %v2292
          %v2341 = vpack.c.bf16 %v2295, %v2295
          %v2342 = vpack.c.bf16 %v2297, %v2297
          %v2343 = vpack.c.bf16 %v2300, %v2300
          %v2344 = vpack.c.bf16 %v2302, %v2302
          %v2345 = vpack.c.bf16 %v2305, %v2305
          %v2346 = vpack.c.bf16 %v2307, %v2307
          %v2347 = vpack.c.bf16 %v2310, %v2310
          %v2348 = vpack.c.bf16 %v2312, %v2312
          %v2349 = vpack.c.bf16 %v2315, %v2315
          %v2350 = vpack.c.bf16 %v2317, %v2317
          %2351 = vst [vmem:[#allocation4] sm:$0xf] %v2319
          %2352 = vst [vmem:[#allocation4 + $0x4] sm:$0xf] %v2320
          %2353 = vst [vmem:[#allocation4 + $0x8] sm:$0xf] %v2321
          %2354 = vst [vmem:[#allocation4 + $0xc] sm:$0xf] %v2322
          %2355 = vst [vmem:[#allocation4 + $0x10] sm:$0xf] %v2323
          %2356 = vst [vmem:[#allocation4 + $0x14] sm:$0xf] %v2324
          %2357 = vst [vmem:[#allocation4 + $0x18] sm:$0xf] %v2325
          %2358 = vst [vmem:[#allocation4 + $0x1c] sm:$0xf] %v2326
          %2359 = vst [vmem:[#allocation4 + $0x20] sm:$0xf] %v2327
          %2360 = vst [vmem:[#allocation4 + $0x24] sm:$0xf] %v2328
          %2361 = vst [vmem:[#allocation4 + $0x28] sm:$0xf] %v2329
          %2362 = vst [vmem:[#allocation4 + $0x2c] sm:$0xf] %v2330
          %2363 = vst [vmem:[#allocation4 + $0x30] sm:$0xf] %v2331
          %2364 = vst [vmem:[#allocation4 + $0x34] sm:$0xf] %v2332
          %2365 = vst [vmem:[#allocation4 + $0x38] sm:$0xf] %v2333
          %2366 = vst [vmem:[#allocation4 + $0x3c] sm:$0xf] %v2334
          %2367 = vst [vmem:[#allocation4 + $0x40] sm:$0xf] %v2335
          %2368 = vst [vmem:[#allocation4 + $0x44] sm:$0xf] %v2336
          %2369 = vst [vmem:[#allocation4 + $0x48] sm:$0xf] %v2337
          %2370 = vst [vmem:[#allocation4 + $0x4c] sm:$0xf] %v2338
          %2371 = vst [vmem:[#allocation4 + $0x50] sm:$0xf] %v2339
          %2372 = vst [vmem:[#allocation4 + $0x54] sm:$0xf] %v2340
          %2373 = vst [vmem:[#allocation4 + $0x58] sm:$0xf] %v2341
          %2374 = vst [vmem:[#allocation4 + $0x5c] sm:$0xf] %v2342
          %2375 = vst [vmem:[#allocation4 + $0x60] sm:$0xf] %v2343
          %2376 = vst [vmem:[#allocation4 + $0x64] sm:$0xf] %v2344
          %2377 = vst [vmem:[#allocation4 + $0x68] sm:$0xf] %v2345
          %2378 = vst [vmem:[#allocation4 + $0x6c] sm:$0xf] %v2346
          %2379 = vst [vmem:[#allocation4 + $0x70] sm:$0xf] %v2347
          %2380 = vst [vmem:[#allocation4 + $0x74] sm:$0xf] %v2348
          %2381 = vst [vmem:[#allocation4 + $0x78] sm:$0xf] %v2349
          %2382 = vst [vmem:[#allocation4 + $0x7c] sm:$0xf] %v2350
          %v2383 = vld [vmem:[#allocation5] sm:$0xf]
          %v2384 = vld [vmem:[#allocation5 + $0x4] sm:$0xf]
          %v2385 = vld [vmem:[#allocation5 + $0x8] sm:$0xf]
          %v2386 = vld [vmem:[#allocation5 + $0xc] sm:$0xf]
          %v2387 = vld [vmem:[#allocation5 + $0x10] sm:$0xf]
          %v2388 = vld [vmem:[#allocation5 + $0x14] sm:$0xf]
          %v2389 = vld [vmem:[#allocation5 + $0x18] sm:$0xf]
          %v2390 = vld [vmem:[#allocation5 + $0x1c] sm:$0xf]
          %v2391 = vld [vmem:[#allocation5 + $0x20] sm:$0xf]
          %v2392 = vld [vmem:[#allocation5 + $0x24] sm:$0xf]
          %v2393 = vld [vmem:[#allocation5 + $0x28] sm:$0xf]
          %v2394 = vld [vmem:[#allocation5 + $0x2c] sm:$0xf]
          %v2395 = vld [vmem:[#allocation5 + $0x30] sm:$0xf]
          %v2396 = vld [vmem:[#allocation5 + $0x34] sm:$0xf]
          %v2397 = vld [vmem:[#allocation5 + $0x38] sm:$0xf]
          %v2398 = vld [vmem:[#allocation5 + $0x3c] sm:$0xf]
          %v2399 = vld [vmem:[#allocation5 + $0x40] sm:$0xf]
          %v2400 = vld [vmem:[#allocation5 + $0x44] sm:$0xf]
          %v2401 = vld [vmem:[#allocation5 + $0x48] sm:$0xf]
          %v2402 = vld [vmem:[#allocation5 + $0x4c] sm:$0xf]
          %v2403 = vld [vmem:[#allocation5 + $0x50] sm:$0xf]
          %v2404 = vld [vmem:[#allocation5 + $0x54] sm:$0xf]
          %v2405 = vld [vmem:[#allocation5 + $0x58] sm:$0xf]
          %v2406 = vld [vmem:[#allocation5 + $0x5c] sm:$0xf]
          %v2407 = vld [vmem:[#allocation5 + $0x60] sm:$0xf]
          %v2408 = vld [vmem:[#allocation5 + $0x64] sm:$0xf]
          %v2409 = vld [vmem:[#allocation5 + $0x68] sm:$0xf]
          %v2410 = vld [vmem:[#allocation5 + $0x6c] sm:$0xf]
          %v2411 = vld [vmem:[#allocation5 + $0x70] sm:$0xf]
          %v2412 = vld [vmem:[#allocation5 + $0x74] sm:$0xf]
          %v2413 = vld [vmem:[#allocation5 + $0x78] sm:$0xf]
          %v2414 = vld [vmem:[#allocation5 + $0x7c] sm:$0xf]
          %v2415 = vld [vmem:[#allocation17] sm:$0xf]
          %v2416 = vld [vmem:[#allocation17 + $0x4] sm:$0xf]
          %v2417 = vld [vmem:[#allocation17 + $0x8] sm:$0xf]
          %v2418 = vld [vmem:[#allocation17 + $0xc] sm:$0xf]
          %v2419 = vld [vmem:[#allocation17 + $0x10] sm:$0xf]
          %v2420 = vld [vmem:[#allocation17 + $0x14] sm:$0xf]
          %v2421 = vld [vmem:[#allocation17 + $0x18] sm:$0xf]
          %v2422 = vld [vmem:[#allocation17 + $0x1c] sm:$0xf]
          %v2423 = vld [vmem:[#allocation17 + $0x20] sm:$0xf]
          %v2424 = vld [vmem:[#allocation17 + $0x24] sm:$0xf]
          %v2425 = vld [vmem:[#allocation17 + $0x28] sm:$0xf]
          %v2426 = vld [vmem:[#allocation17 + $0x2c] sm:$0xf]
          %v2427 = vld [vmem:[#allocation17 + $0x30] sm:$0xf]
          %v2428 = vld [vmem:[#allocation17 + $0x34] sm:$0xf]
          %v2429 = vld [vmem:[#allocation17 + $0x38] sm:$0xf]
          %v2430 = vld [vmem:[#allocation17 + $0x3c] sm:$0xf]
          %v2431 = vld [vmem:[#allocation4] sm:$0xf]
          %v2432 = vld [vmem:[#allocation4 + $0x4] sm:$0xf]
          %v2433 = vld [vmem:[#allocation4 + $0x8] sm:$0xf]
          %v2434 = vld [vmem:[#allocation4 + $0xc] sm:$0xf]
          %v2435 = vld [vmem:[#allocation4 + $0x10] sm:$0xf]
          %v2436 = vld [vmem:[#allocation4 + $0x14] sm:$0xf]
          %v2437 = vld [vmem:[#allocation4 + $0x18] sm:$0xf]
          %v2438 = vld [vmem:[#allocation4 + $0x1c] sm:$0xf]
          %v2439 = vld [vmem:[#allocation4 + $0x20] sm:$0xf]
          %v2440 = vld [vmem:[#allocation4 + $0x24] sm:$0xf]
          %v2441 = vld [vmem:[#allocation4 + $0x28] sm:$0xf]
          %v2442 = vld [vmem:[#allocation4 + $0x2c] sm:$0xf]
          %v2443 = vld [vmem:[#allocation4 + $0x30] sm:$0xf]
          %v2444 = vld [vmem:[#allocation4 + $0x34] sm:$0xf]
          %v2445 = vld [vmem:[#allocation4 + $0x38] sm:$0xf]
          %v2446 = vld [vmem:[#allocation4 + $0x3c] sm:$0xf]
          %v2447 = vld [vmem:[#allocation4 + $0x40] sm:$0xf]
          %v2448 = vld [vmem:[#allocation4 + $0x44] sm:$0xf]
          %v2449 = vld [vmem:[#allocation4 + $0x48] sm:$0xf]
          %v2450 = vld [vmem:[#allocation4 + $0x4c] sm:$0xf]
          %v2451 = vld [vmem:[#allocation4 + $0x50] sm:$0xf]
          %v2452 = vld [vmem:[#allocation4 + $0x54] sm:$0xf]
          %v2453 = vld [vmem:[#allocation4 + $0x58] sm:$0xf]
          %v2454 = vld [vmem:[#allocation4 + $0x5c] sm:$0xf]
          %v2455 = vld [vmem:[#allocation4 + $0x60] sm:$0xf]
          %v2456 = vld [vmem:[#allocation4 + $0x64] sm:$0xf]
          %v2457 = vld [vmem:[#allocation4 + $0x68] sm:$0xf]
          %v2458 = vld [vmem:[#allocation4 + $0x6c] sm:$0xf]
          %v2459 = vld [vmem:[#allocation4 + $0x70] sm:$0xf]
          %v2460 = vld [vmem:[#allocation4 + $0x74] sm:$0xf]
          %v2461 = vld [vmem:[#allocation4 + $0x78] sm:$0xf]
          %v2462 = vld [vmem:[#allocation4 + $0x7c] sm:$0xf]
          %v2463 = vunpack.c.l.bf16 %v2431
          %v2464 = vunpack.c.l.bf16 %v2432
          %v2465 = vunpack.c.l.bf16 %v2433
          %v2466 = vunpack.c.l.bf16 %v2434
          %v2467 = vunpack.c.l.bf16 %v2435
          %v2468 = vunpack.c.l.bf16 %v2436
          %v2469 = vunpack.c.l.bf16 %v2437
          %v2470 = vunpack.c.l.bf16 %v2438
          %v2471 = vunpack.c.l.bf16 %v2439
          %v2472 = vunpack.c.l.bf16 %v2440
          %v2473 = vunpack.c.l.bf16 %v2441
          %v2474 = vunpack.c.l.bf16 %v2442
          %v2475 = vunpack.c.l.bf16 %v2443
          %v2476 = vunpack.c.l.bf16 %v2444
          %v2477 = vunpack.c.l.bf16 %v2445
          %v2478 = vunpack.c.l.bf16 %v2446
          %v2479 = vunpack.c.l.bf16 %v2447
          %v2480 = vunpack.c.l.bf16 %v2448
          %v2481 = vunpack.c.l.bf16 %v2449
          %v2482 = vunpack.c.l.bf16 %v2450
          %v2483 = vunpack.c.l.bf16 %v2451
          %v2484 = vunpack.c.l.bf16 %v2452
          %v2485 = vunpack.c.l.bf16 %v2453
          %v2486 = vunpack.c.l.bf16 %v2454
          %v2487 = vunpack.c.l.bf16 %v2455
          %v2488 = vunpack.c.l.bf16 %v2456
          %v2489 = vunpack.c.l.bf16 %v2457
          %v2490 = vunpack.c.l.bf16 %v2458
          %v2491 = vunpack.c.l.bf16 %v2459
          %v2492 = vunpack.c.l.bf16 %v2460
          %v2493 = vunpack.c.l.bf16 %v2461
          %v2494 = vunpack.c.l.bf16 %v2462
          %v2527 = vunpack.c.l.b16 %v2383
          %v2528 = vunpack.c.l.b16 %v2384
          %v2529 = vunpack.c.l.b16 %v2385
          %v2530 = vunpack.c.l.b16 %v2386
          %v2531 = vunpack.c.l.b16 %v2387
          %v2532 = vunpack.c.l.b16 %v2388
          %v2533 = vunpack.c.l.b16 %v2389
          %v2534 = vunpack.c.l.b16 %v2390
          %v2535 = vunpack.c.l.b16 %v2391
          %v2536 = vunpack.c.l.b16 %v2392
          %v2537 = vunpack.c.l.b16 %v2393
          %v2538 = vunpack.c.l.b16 %v2394
          %v2539 = vunpack.c.l.b16 %v2395
          %v2540 = vunpack.c.l.b16 %v2396
          %v2541 = vunpack.c.l.b16 %v2397
          %v2542 = vunpack.c.l.b16 %v2398
          %v2543 = vunpack.c.l.b16 %v2399
          %v2544 = vunpack.c.l.b16 %v2400
          %v2545 = vunpack.c.l.b16 %v2401
          %v2546 = vunpack.c.l.b16 %v2402
          %v2547 = vunpack.c.l.b16 %v2403
          %v2548 = vunpack.c.l.b16 %v2404
          %v2549 = vunpack.c.l.b16 %v2405
          %v2550 = vunpack.c.l.b16 %v2406
          %v2551 = vunpack.c.l.b16 %v2407
          %v2552 = vunpack.c.l.b16 %v2408
          %v2553 = vunpack.c.l.b16 %v2409
          %v2554 = vunpack.c.l.b16 %v2410
          %v2555 = vunpack.c.l.b16 %v2411
          %v2556 = vunpack.c.l.b16 %v2412
          %v2557 = vunpack.c.l.b16 %v2413
          %v2558 = vunpack.c.l.b16 %v2414
          %v2559 = vpack.c.b16 %v2528, %v2527
          %v2560 = vpack.c.b16 %v2530, %v2529
          %v2561 = vpack.c.b16 %v2532, %v2531
          %v2562 = vpack.c.b16 %v2534, %v2533
          %v2563 = vpack.c.b16 %v2536, %v2535
          %v2564 = vpack.c.b16 %v2538, %v2537
          %v2565 = vpack.c.b16 %v2540, %v2539
          %v2566 = vpack.c.b16 %v2542, %v2541
          %v2567 = vpack.c.b16 %v2544, %v2543
          %v2568 = vpack.c.b16 %v2546, %v2545
          %v2569 = vpack.c.b16 %v2548, %v2547
          %v2570 = vpack.c.b16 %v2550, %v2549
          %v2571 = vpack.c.b16 %v2552, %v2551
          %v2572 = vpack.c.b16 %v2554, %v2553
          %v2573 = vpack.c.b16 %v2556, %v2555
          %v2574 = vpack.c.b16 %v2558, %v2557
          %v2607 = vunpack.c.l.b16 %v2415
          %v2608 = vunpack.c.l.b16 %v2416
          %v2609 = vunpack.c.l.b16 %v2417
          %v2610 = vunpack.c.l.b16 %v2418
          %v2611 = vunpack.c.l.b16 %v2419
          %v2612 = vunpack.c.l.b16 %v2420
          %v2613 = vunpack.c.l.b16 %v2421
          %v2614 = vunpack.c.l.b16 %v2422
          %v2615 = vunpack.c.l.b16 %v2423
          %v2616 = vunpack.c.l.b16 %v2424
          %v2617 = vunpack.c.l.b16 %v2425
          %v2618 = vunpack.c.l.b16 %v2426
          %v2619 = vunpack.c.l.b16 %v2427
          %v2620 = vunpack.c.l.b16 %v2428
          %v2621 = vunpack.c.l.b16 %v2429
          %v2622 = vunpack.c.l.b16 %v2430
          %v2623 = vpack.c.b16 %v2608, %v2607
          %v2624 = vpack.c.b16 %v2610, %v2609
          %v2625 = vpack.c.b16 %v2612, %v2611
          %v2626 = vpack.c.b16 %v2614, %v2613
          %v2627 = vpack.c.b16 %v2616, %v2615
          %v2628 = vpack.c.b16 %v2618, %v2617
          %v2629 = vpack.c.b16 %v2620, %v2619
          %v2630 = vpack.c.b16 %v2622, %v2621
          %2639 = vmatpush.bf16.msra.mxu0 %v2630
          %2640 = vmatpush.bf16.msra.mxu0 %v2629
          %2641 = vmatpush.bf16.msra.mxu0 %v2628
          %2642 = vmatpush.bf16.msra.mxu0 %v2627
          %2643 = vmatpush.bf16.msra.mxu0 %v2626
          %2644 = vmatpush.bf16.msra.mxu0 %v2625
          %2645 = vmatpush.bf16.msra.mxu0 %v2624
          %2646 = vmatpush.bf16.msra.mxu0 %v2623
          %2647 = vmatmul.bf16.gmra.mxu0 %v2559
          %v2648 = vpop.f32.mrf.mxu0
          %v2649 = vadd.f32 %v2463, %v2648
          %v2650 = vpop.f32.mrf.mxu0
          %v2651 = vadd.f32 %v2464, %v2650
          %2652 = vmatmul.bf16.gmra.mxu0 %v2560
          %v2653 = vpop.f32.mrf.mxu0
          %v2654 = vadd.f32 %v2465, %v2653
          %v2655 = vpop.f32.mrf.mxu0
          %v2656 = vadd.f32 %v2466, %v2655
          %2657 = vmatmul.bf16.gmra.mxu0 %v2561
          %v2658 = vpop.f32.mrf.mxu0
          %v2659 = vadd.f32 %v2467, %v2658
          %v2660 = vpop.f32.mrf.mxu0
          %v2661 = vadd.f32 %v2468, %v2660
          %2662 = vmatmul.bf16.gmra.mxu0 %v2562
          %v2663 = vpop.f32.mrf.mxu0
          %v2664 = vadd.f32 %v2469, %v2663
          %v2665 = vpop.f32.mrf.mxu0
          %v2666 = vadd.f32 %v2470, %v2665
          %2667 = vmatmul.bf16.gmra.mxu0 %v2563
          %v2668 = vpop.f32.mrf.mxu0
          %v2669 = vadd.f32 %v2471, %v2668
          %v2670 = vpop.f32.mrf.mxu0
          %v2671 = vadd.f32 %v2472, %v2670
          %2672 = vmatmul.bf16.gmra.mxu0 %v2564
          %v2673 = vpop.f32.mrf.mxu0
          %v2674 = vadd.f32 %v2473, %v2673
          %v2675 = vpop.f32.mrf.mxu0
          %v2676 = vadd.f32 %v2474, %v2675
          %2677 = vmatmul.bf16.gmra.mxu0 %v2565
          %v2678 = vpop.f32.mrf.mxu0
          %v2679 = vadd.f32 %v2475, %v2678
          %v2680 = vpop.f32.mrf.mxu0
          %v2681 = vadd.f32 %v2476, %v2680
          %2682 = vmatmul.bf16.gmra.mxu0 %v2566
          %v2683 = vpop.f32.mrf.mxu0
          %v2684 = vadd.f32 %v2477, %v2683
          %v2685 = vpop.f32.mrf.mxu0
          %v2686 = vadd.f32 %v2478, %v2685
          %2687 = vmatmul.bf16.gmra.mxu0 %v2567
          %v2688 = vpop.f32.mrf.mxu0
          %v2689 = vadd.f32 %v2479, %v2688
          %v2690 = vpop.f32.mrf.mxu0
          %v2691 = vadd.f32 %v2480, %v2690
          %2692 = vmatmul.bf16.gmra.mxu0 %v2568
          %v2693 = vpop.f32.mrf.mxu0
          %v2694 = vadd.f32 %v2481, %v2693
          %v2695 = vpop.f32.mrf.mxu0
          %v2696 = vadd.f32 %v2482, %v2695
          %2697 = vmatmul.bf16.gmra.mxu0 %v2569
          %v2698 = vpop.f32.mrf.mxu0
          %v2699 = vadd.f32 %v2483, %v2698
          %v2700 = vpop.f32.mrf.mxu0
          %v2701 = vadd.f32 %v2484, %v2700
          %2702 = vmatmul.bf16.gmra.mxu0 %v2570
          %v2703 = vpop.f32.mrf.mxu0
          %v2704 = vadd.f32 %v2485, %v2703
          %v2705 = vpop.f32.mrf.mxu0
          %v2706 = vadd.f32 %v2486, %v2705
          %2707 = vmatmul.bf16.gmra.mxu0 %v2571
          %v2708 = vpop.f32.mrf.mxu0
          %v2709 = vadd.f32 %v2487, %v2708
          %v2710 = vpop.f32.mrf.mxu0
          %v2711 = vadd.f32 %v2488, %v2710
          %2712 = vmatmul.bf16.gmra.mxu0 %v2572
          %v2713 = vpop.f32.mrf.mxu0
          %v2714 = vadd.f32 %v2489, %v2713
          %v2715 = vpop.f32.mrf.mxu0
          %v2716 = vadd.f32 %v2490, %v2715
          %2717 = vmatmul.bf16.gmra.mxu0 %v2573
          %v2718 = vpop.f32.mrf.mxu0
          %v2719 = vadd.f32 %v2491, %v2718
          %v2720 = vpop.f32.mrf.mxu0
          %v2721 = vadd.f32 %v2492, %v2720
          %2722 = vmatmul.bf16.gmra.mxu0 %v2574
          %v2723 = vpop.f32.mrf.mxu0
          %v2724 = vadd.f32 %v2493, %v2723
          %v2725 = vpop.f32.mrf.mxu0
          %v2726 = vadd.f32 %v2494, %v2725
          %2727 = vdwg.mxu0
          %v2728 = vpack.c.bf16 %v2649, %v2649
          %v2729 = vpack.c.bf16 %v2651, %v2651
          %v2730 = vpack.c.bf16 %v2654, %v2654
          %v2731 = vpack.c.bf16 %v2656, %v2656
          %v2732 = vpack.c.bf16 %v2659, %v2659
          %v2733 = vpack.c.bf16 %v2661, %v2661
          %v2734 = vpack.c.bf16 %v2664, %v2664
          %v2735 = vpack.c.bf16 %v2666, %v2666
          %v2736 = vpack.c.bf16 %v2669, %v2669
          %v2737 = vpack.c.bf16 %v2671, %v2671
          %v2738 = vpack.c.bf16 %v2674, %v2674
          %v2739 = vpack.c.bf16 %v2676, %v2676
          %v2740 = vpack.c.bf16 %v2679, %v2679
          %v2741 = vpack.c.bf16 %v2681, %v2681
          %v2742 = vpack.c.bf16 %v2684, %v2684
          %v2743 = vpack.c.bf16 %v2686, %v2686
          %v2744 = vpack.c.bf16 %v2689, %v2689
          %v2745 = vpack.c.bf16 %v2691, %v2691
          %v2746 = vpack.c.bf16 %v2694, %v2694
          %v2747 = vpack.c.bf16 %v2696, %v2696
          %v2748 = vpack.c.bf16 %v2699, %v2699
          %v2749 = vpack.c.bf16 %v2701, %v2701
          %v2750 = vpack.c.bf16 %v2704, %v2704
          %v2751 = vpack.c.bf16 %v2706, %v2706
          %v2752 = vpack.c.bf16 %v2709, %v2709
          %v2753 = vpack.c.bf16 %v2711, %v2711
          %v2754 = vpack.c.bf16 %v2714, %v2714
          %v2755 = vpack.c.bf16 %v2716, %v2716
          %v2756 = vpack.c.bf16 %v2719, %v2719
          %v2757 = vpack.c.bf16 %v2721, %v2721
          %v2758 = vpack.c.bf16 %v2724, %v2724
          %v2759 = vpack.c.bf16 %v2726, %v2726
          %2760 = vst [vmem:[#allocation4] sm:$0xf] %v2728
          %2761 = vst [vmem:[#allocation4 + $0x4] sm:$0xf] %v2729
          %2762 = vst [vmem:[#allocation4 + $0x8] sm:$0xf] %v2730
          %2763 = vst [vmem:[#allocation4 + $0xc] sm:$0xf] %v2731
          %2764 = vst [vmem:[#allocation4 + $0x10] sm:$0xf] %v2732
          %2765 = vst [vmem:[#allocation4 + $0x14] sm:$0xf] %v2733
          %2766 = vst [vmem:[#allocation4 + $0x18] sm:$0xf] %v2734
          %2767 = vst [vmem:[#allocation4 + $0x1c] sm:$0xf] %v2735
          %2768 = vst [vmem:[#allocation4 + $0x20] sm:$0xf] %v2736
          %2769 = vst [vmem:[#allocation4 + $0x24] sm:$0xf] %v2737
          %2770 = vst [vmem:[#allocation4 + $0x28] sm:$0xf] %v2738
          %2771 = vst [vmem:[#allocation4 + $0x2c] sm:$0xf] %v2739
          %2772 = vst [vmem:[#allocation4 + $0x30] sm:$0xf] %v2740
          %2773 = vst [vmem:[#allocation4 + $0x34] sm:$0xf] %v2741
          %2774 = vst [vmem:[#allocation4 + $0x38] sm:$0xf] %v2742
          %2775 = vst [vmem:[#allocation4 + $0x3c] sm:$0xf] %v2743
          %2776 = vst [vmem:[#allocation4 + $0x40] sm:$0xf] %v2744
          %2777 = vst [vmem:[#allocation4 + $0x44] sm:$0xf] %v2745
          %2778 = vst [vmem:[#allocation4 + $0x48] sm:$0xf] %v2746
          %2779 = vst [vmem:[#allocation4 + $0x4c] sm:$0xf] %v2747
          %2780 = vst [vmem:[#allocation4 + $0x50] sm:$0xf] %v2748
          %2781 = vst [vmem:[#allocation4 + $0x54] sm:$0xf] %v2749
          %2782 = vst [vmem:[#allocation4 + $0x58] sm:$0xf] %v2750
          %2783 = vst [vmem:[#allocation4 + $0x5c] sm:$0xf] %v2751
          %2784 = vst [vmem:[#allocation4 + $0x60] sm:$0xf] %v2752
          %2785 = vst [vmem:[#allocation4 + $0x64] sm:$0xf] %v2753
          %2786 = vst [vmem:[#allocation4 + $0x68] sm:$0xf] %v2754
          %2787 = vst [vmem:[#allocation4 + $0x6c] sm:$0xf] %v2755
          %2788 = vst [vmem:[#allocation4 + $0x70] sm:$0xf] %v2756
          %2789 = vst [vmem:[#allocation4 + $0x74] sm:$0xf] %v2757
          %2790 = vst [vmem:[#allocation4 + $0x78] sm:$0xf] %v2758
          %2791 = vst [vmem:[#allocation4 + $0x7c] sm:$0xf] %v2759
        $region108: #{tpu_custom_call.1} parent=63 // pred_fallthru
          _
        %v2792 = vld [vmem:[#allocation8] sm:$0xff]
        %v2793 = vld [vmem:[#allocation8 + $0x8] sm:$0xff]
        %v2794 = vld [vmem:[#allocation8 + $0x10] sm:$0xff]
        %v2795 = vld [vmem:[#allocation8 + $0x18] sm:$0xff]
        %v2796 = vld [vmem:[#allocation8 + $0x20] sm:$0xff]
        %v2797 = vld [vmem:[#allocation8 + $0x28] sm:$0xff]
        %v2798 = vld [vmem:[#allocation8 + $0x30] sm:$0xff]
        %v2799 = vld [vmem:[#allocation8 + $0x38] sm:$0xff]
        %v2800 = vld [vmem:[#allocation8 + $0x40] sm:$0xff]
        %v2801 = vld [vmem:[#allocation8 + $0x48] sm:$0xff]
        %v2802 = vld [vmem:[#allocation8 + $0x50] sm:$0xff]
        %v2803 = vld [vmem:[#allocation8 + $0x58] sm:$0xff]
        %v2804 = vld [vmem:[#allocation8 + $0x60] sm:$0xff]
        %v2805 = vld [vmem:[#allocation8 + $0x68] sm:$0xff]
        %v2806 = vld [vmem:[#allocation8 + $0x70] sm:$0xff]
        %v2807 = vld [vmem:[#allocation8 + $0x78] sm:$0xff]
        %v2808 = vld [vmem:[#allocation8 + $0x80] sm:$0xff]
        %v2809 = vld [vmem:[#allocation8 + $0x88] sm:$0xff]
        %v2810 = vld [vmem:[#allocation8 + $0x90] sm:$0xff]
        %v2811 = vld [vmem:[#allocation8 + $0x98] sm:$0xff]
        %v2812 = vld [vmem:[#allocation8 + $0xa0] sm:$0xff]
        %v2813 = vld [vmem:[#allocation8 + $0xa8] sm:$0xff]
        %v2814 = vld [vmem:[#allocation8 + $0xb0] sm:$0xff]
        %v2815 = vld [vmem:[#allocation8 + $0xb8] sm:$0xff]
        %v2816 = vld [vmem:[#allocation8 + $0xc0] sm:$0xff]
        %v2817 = vld [vmem:[#allocation8 + $0xc8] sm:$0xff]
        %v2818 = vld [vmem:[#allocation8 + $0xd0] sm:$0xff]
        %v2819 = vld [vmem:[#allocation8 + $0xd8] sm:$0xff]
        %v2820 = vld [vmem:[#allocation8 + $0xe0] sm:$0xff]
        %v2821 = vld [vmem:[#allocation8 + $0xe8] sm:$0xff]
        %v2822 = vld [vmem:[#allocation8 + $0xf0] sm:$0xff]
        %v2823 = vld [vmem:[#allocation8 + $0xf8] sm:$0xff]
        %v2824 = vld [vmem:[#allocation4] sm:$0xf]
        %v2825 = vld [vmem:[#allocation4 + $0x4] sm:$0xf]
        %v2826 = vld [vmem:[#allocation4 + $0x8] sm:$0xf]
        %v2827 = vld [vmem:[#allocation4 + $0xc] sm:$0xf]
        %v2828 = vld [vmem:[#allocation4 + $0x10] sm:$0xf]
        %v2829 = vld [vmem:[#allocation4 + $0x14] sm:$0xf]
        %v2830 = vld [vmem:[#allocation4 + $0x18] sm:$0xf]
        %v2831 = vld [vmem:[#allocation4 + $0x1c] sm:$0xf]
        %v2832 = vld [vmem:[#allocation4 + $0x20] sm:$0xf]
        %v2833 = vld [vmem:[#allocation4 + $0x24] sm:$0xf]
        %v2834 = vld [vmem:[#allocation4 + $0x28] sm:$0xf]
        %v2835 = vld [vmem:[#allocation4 + $0x2c] sm:$0xf]
        %v2836 = vld [vmem:[#allocation4 + $0x30] sm:$0xf]
        %v2837 = vld [vmem:[#allocation4 + $0x34] sm:$0xf]
        %v2838 = vld [vmem:[#allocation4 + $0x38] sm:$0xf]
        %v2839 = vld [vmem:[#allocation4 + $0x3c] sm:$0xf]
        %v2840 = vld [vmem:[#allocation4 + $0x40] sm:$0xf]
        %v2841 = vld [vmem:[#allocation4 + $0x44] sm:$0xf]
        %v2842 = vld [vmem:[#allocation4 + $0x48] sm:$0xf]
        %v2843 = vld [vmem:[#allocation4 + $0x4c] sm:$0xf]
        %v2844 = vld [vmem:[#allocation4 + $0x50] sm:$0xf]
        %v2845 = vld [vmem:[#allocation4 + $0x54] sm:$0xf]
        %v2846 = vld [vmem:[#allocation4 + $0x58] sm:$0xf]
        %v2847 = vld [vmem:[#allocation4 + $0x5c] sm:$0xf]
        %v2848 = vld [vmem:[#allocation4 + $0x60] sm:$0xf]
        %v2849 = vld [vmem:[#allocation4 + $0x64] sm:$0xf]
        %v2850 = vld [vmem:[#allocation4 + $0x68] sm:$0xf]
        %v2851 = vld [vmem:[#allocation4 + $0x6c] sm:$0xf]
        %v2852 = vld [vmem:[#allocation4 + $0x70] sm:$0xf]
        %v2853 = vld [vmem:[#allocation4 + $0x74] sm:$0xf]
        %v2854 = vld [vmem:[#allocation4 + $0x78] sm:$0xf]
        %v2855 = vld [vmem:[#allocation4 + $0x7c] sm:$0xf]
        %v2888 = vunpack.c.l.b16 %v2792
        %v2889 = vunpack.c.h.b16 %v2792
        %v2890 = vunpack.c.l.b16 %v2793
        %v2891 = vunpack.c.h.b16 %v2793
        %v2892 = vunpack.c.l.b16 %v2794
        %v2893 = vunpack.c.h.b16 %v2794
        %v2894 = vunpack.c.l.b16 %v2795
        %v2895 = vunpack.c.h.b16 %v2795
        %v2896 = vunpack.c.l.b16 %v2796
        %v2897 = vunpack.c.h.b16 %v2796
        %v2898 = vunpack.c.l.b16 %v2797
        %v2899 = vunpack.c.h.b16 %v2797
        %v2900 = vunpack.c.l.b16 %v2798
        %v2901 = vunpack.c.h.b16 %v2798
        %v2902 = vunpack.c.l.b16 %v2799
        %v2903 = vunpack.c.h.b16 %v2799
        %v2904 = vunpack.c.l.b16 %v2800
        %v2905 = vunpack.c.h.b16 %v2800
        %v2906 = vunpack.c.l.b16 %v2801
        %v2907 = vunpack.c.h.b16 %v2801
        %v2908 = vunpack.c.l.b16 %v2802
        %v2909 = vunpack.c.h.b16 %v2802
        %v2910 = vunpack.c.l.b16 %v2803
        %v2911 = vunpack.c.h.b16 %v2803
        %v2912 = vunpack.c.l.b16 %v2804
        %v2913 = vunpack.c.h.b16 %v2804
        %v2914 = vunpack.c.l.b16 %v2805
        %v2915 = vunpack.c.h.b16 %v2805
        %v2916 = vunpack.c.l.b16 %v2806
        %v2917 = vunpack.c.h.b16 %v2806
        %v2918 = vunpack.c.l.b16 %v2807
        %v2919 = vunpack.c.h.b16 %v2807
        %v2920 = vunpack.c.l.b16 %v2808
        %v2921 = vunpack.c.h.b16 %v2808
        %v2922 = vunpack.c.l.b16 %v2809
        %v2923 = vunpack.c.h.b16 %v2809
        %v2924 = vunpack.c.l.b16 %v2810
        %v2925 = vunpack.c.h.b16 %v2810
        %v2926 = vunpack.c.l.b16 %v2811
        %v2927 = vunpack.c.h.b16 %v2811
        %v2928 = vunpack.c.l.b16 %v2812
        %v2929 = vunpack.c.h.b16 %v2812
        %v2930 = vunpack.c.l.b16 %v2813
        %v2931 = vunpack.c.h.b16 %v2813
        %v2932 = vunpack.c.l.b16 %v2814
        %v2933 = vunpack.c.h.b16 %v2814
        %v2934 = vunpack.c.l.b16 %v2815
        %v2935 = vunpack.c.h.b16 %v2815
        %v2936 = vunpack.c.l.b16 %v2816
        %v2937 = vunpack.c.h.b16 %v2816
        %v2938 = vunpack.c.l.b16 %v2817
        %v2939 = vunpack.c.h.b16 %v2817
        %v2940 = vunpack.c.l.b16 %v2818
        %v2941 = vunpack.c.h.b16 %v2818
        %v2942 = vunpack.c.l.b16 %v2819
        %v2943 = vunpack.c.h.b16 %v2819
        %v2944 = vunpack.c.l.b16 %v2820
        %v2945 = vunpack.c.h.b16 %v2820
        %v2946 = vunpack.c.l.b16 %v2821
        %v2947 = vunpack.c.h.b16 %v2821
        %v2948 = vunpack.c.l.b16 %v2822
        %v2949 = vunpack.c.h.b16 %v2822
        %v2950 = vunpack.c.l.b16 %v2823
        %v2951 = vunpack.c.h.b16 %v2823
        %v2952 = vpack.c.b16 %v2890, %v2888
        %v2953 = vpack.c.b16 %v2891, %v2889
        %v2954 = vpack.c.b16 %v2894, %v2892
        %v2955 = vpack.c.b16 %v2895, %v2893
        %v2956 = vpack.c.b16 %v2898, %v2896
        %v2957 = vpack.c.b16 %v2899, %v2897
        %v2958 = vpack.c.b16 %v2902, %v2900
        %v2959 = vpack.c.b16 %v2903, %v2901
        %v2960 = vpack.c.b16 %v2906, %v2904
        %v2961 = vpack.c.b16 %v2907, %v2905
        %v2962 = vpack.c.b16 %v2910, %v2908
        %v2963 = vpack.c.b16 %v2911, %v2909
        %v2964 = vpack.c.b16 %v2914, %v2912
        %v2965 = vpack.c.b16 %v2915, %v2913
        %v2966 = vpack.c.b16 %v2918, %v2916
        %v2967 = vpack.c.b16 %v2919, %v2917
        %v2968 = vpack.c.b16 %v2922, %v2920
        %v2969 = vpack.c.b16 %v2923, %v2921
        %v2970 = vpack.c.b16 %v2926, %v2924
        %v2971 = vpack.c.b16 %v2927, %v2925
        %v2972 = vpack.c.b16 %v2930, %v2928
        %v2973 = vpack.c.b16 %v2931, %v2929
        %v2974 = vpack.c.b16 %v2934, %v2932
        %v2975 = vpack.c.b16 %v2935, %v2933
        %v2976 = vpack.c.b16 %v2938, %v2936
        %v2977 = vpack.c.b16 %v2939, %v2937
        %v2978 = vpack.c.b16 %v2942, %v2940
        %v2979 = vpack.c.b16 %v2943, %v2941
        %v2980 = vpack.c.b16 %v2946, %v2944
        %v2981 = vpack.c.b16 %v2947, %v2945
        %v2982 = vpack.c.b16 %v2950, %v2948
        %v2983 = vpack.c.b16 %v2951, %v2949
        %v3048 = vunpack.c.l.b16 %v2824
        %v3049 = vunpack.c.l.b16 %v2825
        %v3050 = vunpack.c.l.b16 %v2826
        %v3051 = vunpack.c.l.b16 %v2827
        %v3052 = vunpack.c.l.b16 %v2828
        %v3053 = vunpack.c.l.b16 %v2829
        %v3054 = vunpack.c.l.b16 %v2830
        %v3055 = vunpack.c.l.b16 %v2831
        %v3056 = vunpack.c.l.b16 %v2832
        %v3057 = vunpack.c.l.b16 %v2833
        %v3058 = vunpack.c.l.b16 %v2834
        %v3059 = vunpack.c.l.b16 %v2835
        %v3060 = vunpack.c.l.b16 %v2836
        %v3061 = vunpack.c.l.b16 %v2837
        %v3062 = vunpack.c.l.b16 %v2838
        %v3063 = vunpack.c.l.b16 %v2839
        %v3064 = vunpack.c.l.b16 %v2840
        %v3065 = vunpack.c.l.b16 %v2841
        %v3066 = vunpack.c.l.b16 %v2842
        %v3067 = vunpack.c.l.b16 %v2843
        %v3068 = vunpack.c.l.b16 %v2844
        %v3069 = vunpack.c.l.b16 %v2845
        %v3070 = vunpack.c.l.b16 %v2846
        %v3071 = vunpack.c.l.b16 %v2847
        %v3072 = vunpack.c.l.b16 %v2848
        %v3073 = vunpack.c.l.b16 %v2849
        %v3074 = vunpack.c.l.b16 %v2850
        %v3075 = vunpack.c.l.b16 %v2851
        %v3076 = vunpack.c.l.b16 %v2852
        %v3077 = vunpack.c.l.b16 %v2853
        %v3078 = vunpack.c.l.b16 %v2854
        %v3079 = vunpack.c.l.b16 %v2855
        %v3080 = vpack.c.b16 %v3049, %v3048
        %v3081 = vpack.c.b16 %v3051, %v3050
        %v3082 = vpack.c.b16 %v3053, %v3052
        %v3083 = vpack.c.b16 %v3055, %v3054
        %v3084 = vpack.c.b16 %v3057, %v3056
        %v3085 = vpack.c.b16 %v3059, %v3058
        %v3086 = vpack.c.b16 %v3061, %v3060
        %v3087 = vpack.c.b16 %v3063, %v3062
        %v3088 = vpack.c.b16 %v3065, %v3064
        %v3089 = vpack.c.b16 %v3067, %v3066
        %v3090 = vpack.c.b16 %v3069, %v3068
        %v3091 = vpack.c.b16 %v3071, %v3070
        %v3092 = vpack.c.b16 %v3073, %v3072
        %v3093 = vpack.c.b16 %v3075, %v3074
        %v3094 = vpack.c.b16 %v3077, %v3076
        %v3095 = vpack.c.b16 %v3079, %v3078
        %3112 = vmatpush.bf16.msra.mxu0 %v3087
        %3113 = vmatpush.bf16.msra.mxu0 %v3086
        %3114 = vmatpush.bf16.msra.mxu0 %v3085
        %3115 = vmatpush.bf16.msra.mxu0 %v3084
        %3116 = vmatpush.bf16.msra.mxu0 %v3083
        %3117 = vmatpush.bf16.msra.mxu0 %v3082
        %3118 = vmatpush.bf16.msra.mxu0 %v3081
        %3119 = vmatpush.bf16.msra.mxu0 %v3080
        %3120 = vmatmul.bf16.gmra.mxu0 %v2952
        %v3121 = vpop.f32.mrf.mxu0
        %v3122 = vadd.f32 0.0, %v3121
        %v3123 = vpop.f32.mrf.mxu0
        %v3124 = vadd.f32 0.0, %v3123
        %3125 = vmatmul.bf16.gmra.mxu0 %v2954
        %v3126 = vpop.f32.mrf.mxu0
        %v3127 = vadd.f32 0.0, %v3126
        %v3128 = vpop.f32.mrf.mxu0
        %v3129 = vadd.f32 0.0, %v3128
        %3130 = vmatmul.bf16.gmra.mxu0 %v2956
        %v3131 = vpop.f32.mrf.mxu0
        %v3132 = vadd.f32 0.0, %v3131
        %v3133 = vpop.f32.mrf.mxu0
        %v3134 = vadd.f32 0.0, %v3133
        %3135 = vmatmul.bf16.gmra.mxu0 %v2958
        %v3136 = vpop.f32.mrf.mxu0
        %v3137 = vadd.f32 0.0, %v3136
        %v3138 = vpop.f32.mrf.mxu0
        %v3139 = vadd.f32 0.0, %v3138
        %3140 = vmatmul.bf16.gmra.mxu0 %v2960
        %v3141 = vpop.f32.mrf.mxu0
        %v3142 = vadd.f32 0.0, %v3141
        %v3143 = vpop.f32.mrf.mxu0
        %v3144 = vadd.f32 0.0, %v3143
        %3145 = vmatmul.bf16.gmra.mxu0 %v2962
        %v3146 = vpop.f32.mrf.mxu0
        %v3147 = vadd.f32 0.0, %v3146
        %v3148 = vpop.f32.mrf.mxu0
        %v3149 = vadd.f32 0.0, %v3148
        %3150 = vmatmul.bf16.gmra.mxu0 %v2964
        %v3151 = vpop.f32.mrf.mxu0
        %v3152 = vadd.f32 0.0, %v3151
        %v3153 = vpop.f32.mrf.mxu0
        %v3154 = vadd.f32 0.0, %v3153
        %3155 = vmatmul.bf16.gmra.mxu0 %v2966
        %v3156 = vpop.f32.mrf.mxu0
        %v3157 = vadd.f32 0.0, %v3156
        %v3158 = vpop.f32.mrf.mxu0
        %v3159 = vadd.f32 0.0, %v3158
        %3160 = vmatmul.bf16.gmra.mxu0 %v2968
        %v3161 = vpop.f32.mrf.mxu0
        %v3162 = vadd.f32 0.0, %v3161
        %v3163 = vpop.f32.mrf.mxu0
        %v3164 = vadd.f32 0.0, %v3163
        %3165 = vmatmul.bf16.gmra.mxu0 %v2970
        %v3166 = vpop.f32.mrf.mxu0
        %v3167 = vadd.f32 0.0, %v3166
        %v3168 = vpop.f32.mrf.mxu0
        %v3169 = vadd.f32 0.0, %v3168
        %3170 = vmatmul.bf16.gmra.mxu0 %v2972
        %v3171 = vpop.f32.mrf.mxu0
        %v3172 = vadd.f32 0.0, %v3171
        %v3173 = vpop.f32.mrf.mxu0
        %v3174 = vadd.f32 0.0, %v3173
        %3175 = vmatmul.bf16.gmra.mxu0 %v2974
        %v3176 = vpop.f32.mrf.mxu0
        %v3177 = vadd.f32 0.0, %v3176
        %v3178 = vpop.f32.mrf.mxu0
        %v3179 = vadd.f32 0.0, %v3178
        %3180 = vmatmul.bf16.gmra.mxu0 %v2976
        %v3181 = vpop.f32.mrf.mxu0
        %v3182 = vadd.f32 0.0, %v3181
        %v3183 = vpop.f32.mrf.mxu0
        %v3184 = vadd.f32 0.0, %v3183
        %3185 = vmatmul.bf16.gmra.mxu0 %v2978
        %v3186 = vpop.f32.mrf.mxu0
        %v3187 = vadd.f32 0.0, %v3186
        %v3188 = vpop.f32.mrf.mxu0
        %v3189 = vadd.f32 0.0, %v3188
        %3190 = vmatmul.bf16.gmra.mxu0 %v2980
        %v3191 = vpop.f32.mrf.mxu0
        %v3192 = vadd.f32 0.0, %v3191
        %v3193 = vpop.f32.mrf.mxu0
        %v3194 = vadd.f32 0.0, %v3193
        %3195 = vmatmul.bf16.gmra.mxu0 %v2982
        %v3196 = vpop.f32.mrf.mxu0
        %v3197 = vadd.f32 0.0, %v3196
        %v3198 = vpop.f32.mrf.mxu0
        %v3199 = vadd.f32 0.0, %v3198
        %3200 = vdwg.mxu0
        %3201 = vmatpush.bf16.msra.mxu0 %v3095
        %3202 = vmatpush.bf16.msra.mxu0 %v3094
        %3203 = vmatpush.bf16.msra.mxu0 %v3093
        %3204 = vmatpush.bf16.msra.mxu0 %v3092
        %3205 = vmatpush.bf16.msra.mxu0 %v3091
        %3206 = vmatpush.bf16.msra.mxu0 %v3090
        %3207 = vmatpush.bf16.msra.mxu0 %v3089
        %3208 = vmatpush.bf16.msra.mxu0 %v3088
        %3209 = vmatmul.bf16.gmra.mxu0 %v2953
        %v3210 = vpop.f32.mrf.mxu0
        %v3211 = vadd.f32 %v3122, %v3210
        %v3212 = vpop.f32.mrf.mxu0
        %v3213 = vadd.f32 %v3124, %v3212
        %3214 = vmatmul.bf16.gmra.mxu0 %v2955
        %v3215 = vpop.f32.mrf.mxu0
        %v3216 = vadd.f32 %v3127, %v3215
        %v3217 = vpop.f32.mrf.mxu0
        %v3218 = vadd.f32 %v3129, %v3217
        %3219 = vmatmul.bf16.gmra.mxu0 %v2957
        %v3220 = vpop.f32.mrf.mxu0
        %v3221 = vadd.f32 %v3132, %v3220
        %v3222 = vpop.f32.mrf.mxu0
        %v3223 = vadd.f32 %v3134, %v3222
        %3224 = vmatmul.bf16.gmra.mxu0 %v2959
        %v3225 = vpop.f32.mrf.mxu0
        %v3226 = vadd.f32 %v3137, %v3225
        %v3227 = vpop.f32.mrf.mxu0
        %v3228 = vadd.f32 %v3139, %v3227
        %3229 = vmatmul.bf16.gmra.mxu0 %v2961
        %v3230 = vpop.f32.mrf.mxu0
        %v3231 = vadd.f32 %v3142, %v3230
        %v3232 = vpop.f32.mrf.mxu0
        %v3233 = vadd.f32 %v3144, %v3232
        %3234 = vmatmul.bf16.gmra.mxu0 %v2963
        %v3235 = vpop.f32.mrf.mxu0
        %v3236 = vadd.f32 %v3147, %v3235
        %v3237 = vpop.f32.mrf.mxu0
        %v3238 = vadd.f32 %v3149, %v3237
        %3239 = vmatmul.bf16.gmra.mxu0 %v2965
        %v3240 = vpop.f32.mrf.mxu0
        %v3241 = vadd.f32 %v3152, %v3240
        %v3242 = vpop.f32.mrf.mxu0
        %v3243 = vadd.f32 %v3154, %v3242
        %3244 = vmatmul.bf16.gmra.mxu0 %v2967
        %v3245 = vpop.f32.mrf.mxu0
        %v3246 = vadd.f32 %v3157, %v3245
        %v3247 = vpop.f32.mrf.mxu0
        %v3248 = vadd.f32 %v3159, %v3247
        %3249 = vmatmul.bf16.gmra.mxu0 %v2969
        %v3250 = vpop.f32.mrf.mxu0
        %v3251 = vadd.f32 %v3162, %v3250
        %v3252 = vpop.f32.mrf.mxu0
        %v3253 = vadd.f32 %v3164, %v3252
        %3254 = vmatmul.bf16.gmra.mxu0 %v2971
        %v3255 = vpop.f32.mrf.mxu0
        %v3256 = vadd.f32 %v3167, %v3255
        %v3257 = vpop.f32.mrf.mxu0
        %v3258 = vadd.f32 %v3169, %v3257
        %3259 = vmatmul.bf16.gmra.mxu0 %v2973
        %v3260 = vpop.f32.mrf.mxu0
        %v3261 = vadd.f32 %v3172, %v3260
        %v3262 = vpop.f32.mrf.mxu0
        %v3263 = vadd.f32 %v3174, %v3262
        %3264 = vmatmul.bf16.gmra.mxu0 %v2975
        %v3265 = vpop.f32.mrf.mxu0
        %v3266 = vadd.f32 %v3177, %v3265
        %v3267 = vpop.f32.mrf.mxu0
        %v3268 = vadd.f32 %v3179, %v3267
        %3269 = vmatmul.bf16.gmra.mxu0 %v2977
        %v3270 = vpop.f32.mrf.mxu0
        %v3271 = vadd.f32 %v3182, %v3270
        %v3272 = vpop.f32.mrf.mxu0
        %v3273 = vadd.f32 %v3184, %v3272
        %3274 = vmatmul.bf16.gmra.mxu0 %v2979
        %v3275 = vpop.f32.mrf.mxu0
        %v3276 = vadd.f32 %v3187, %v3275
        %v3277 = vpop.f32.mrf.mxu0
        %v3278 = vadd.f32 %v3189, %v3277
        %3279 = vmatmul.bf16.gmra.mxu0 %v2981
        %v3280 = vpop.f32.mrf.mxu0
        %v3281 = vadd.f32 %v3192, %v3280
        %v3282 = vpop.f32.mrf.mxu0
        %v3283 = vadd.f32 %v3194, %v3282
        %3284 = vmatmul.bf16.gmra.mxu0 %v2983
        %v3285 = vpop.f32.mrf.mxu0
        %v3286 = vadd.f32 %v3197, %v3285
        %v3287 = vpop.f32.mrf.mxu0
        %v3288 = vadd.f32 %v3199, %v3287
        %3289 = vdwg.mxu0
        %s3290 = smul.u32 %s33, 256
        // Predicated region
        $region109: #{tpu_custom_call.1} parent=63 // pred_check
          %p3291 = pneg %p514
        $region110: #{tpu_custom_call.1} parent=63 // pred_check_branch
          %3293 = sbr.rel (%p3291) target = $region112
        $region111: #{tpu_custom_call.1} parent=63 // pred_region
          %v3294 = vld [vmem:[%s8] sm:$0x1]
          %v3296 = vperm.slane %v3294, 0
          %v3298 = vadd.f32 %v3211, %v3296
          %v3299 = vadd.f32 %v3213, %v3296
          %v3300 = vadd.f32 %v3216, %v3296
          %v3301 = vadd.f32 %v3218, %v3296
          %v3302 = vadd.f32 %v3221, %v3296
          %v3303 = vadd.f32 %v3223, %v3296
          %v3304 = vadd.f32 %v3226, %v3296
          %v3305 = vadd.f32 %v3228, %v3296
          %v3306 = vadd.f32 %v3231, %v3296
          %v3307 = vadd.f32 %v3233, %v3296
          %v3308 = vadd.f32 %v3236, %v3296
          %v3309 = vadd.f32 %v3238, %v3296
          %v3310 = vadd.f32 %v3241, %v3296
          %v3311 = vadd.f32 %v3243, %v3296
          %v3312 = vadd.f32 %v3246, %v3296
          %v3313 = vadd.f32 %v3248, %v3296
          %v3314 = vadd.f32 %v3251, %v3296
          %v3315 = vadd.f32 %v3253, %v3296
          %v3316 = vadd.f32 %v3256, %v3296
          %v3317 = vadd.f32 %v3258, %v3296
          %v3318 = vadd.f32 %v3261, %v3296
          %v3319 = vadd.f32 %v3263, %v3296
          %v3320 = vadd.f32 %v3266, %v3296
          %v3321 = vadd.f32 %v3268, %v3296
          %v3322 = vadd.f32 %v3271, %v3296
          %v3323 = vadd.f32 %v3273, %v3296
          %v3324 = vadd.f32 %v3276, %v3296
          %v3325 = vadd.f32 %v3278, %v3296
          %v3326 = vadd.f32 %v3281, %v3296
          %v3327 = vadd.f32 %v3283, %v3296
          %v3328 = vadd.f32 %v3286, %v3296
          %v3329 = vadd.f32 %v3288, %v3296
          %v3330 = vmax.f32 %v3298, 0.0
          %v3331 = vmax.f32 %v3299, 0.0
          %v3332 = vmax.f32 %v3300, 0.0
          %v3333 = vmax.f32 %v3301, 0.0
          %v3334 = vmax.f32 %v3302, 0.0
          %v3335 = vmax.f32 %v3303, 0.0
          %v3336 = vmax.f32 %v3304, 0.0
          %v3337 = vmax.f32 %v3305, 0.0
          %v3338 = vmax.f32 %v3306, 0.0
          %v3339 = vmax.f32 %v3307, 0.0
          %v3340 = vmax.f32 %v3308, 0.0
          %v3341 = vmax.f32 %v3309, 0.0
          %v3342 = vmax.f32 %v3310, 0.0
          %v3343 = vmax.f32 %v3311, 0.0
          %v3344 = vmax.f32 %v3312, 0.0
          %v3345 = vmax.f32 %v3313, 0.0
          %v3346 = vmax.f32 %v3314, 0.0
          %v3347 = vmax.f32 %v3315, 0.0
          %v3348 = vmax.f32 %v3316, 0.0
          %v3349 = vmax.f32 %v3317, 0.0
          %v3350 = vmax.f32 %v3318, 0.0
          %v3351 = vmax.f32 %v3319, 0.0
          %v3352 = vmax.f32 %v3320, 0.0
          %v3353 = vmax.f32 %v3321, 0.0
          %v3354 = vmax.f32 %v3322, 0.0
          %v3355 = vmax.f32 %v3323, 0.0
          %v3356 = vmax.f32 %v3324, 0.0
          %v3357 = vmax.f32 %v3325, 0.0
          %v3358 = vmax.f32 %v3326, 0.0
          %v3359 = vmax.f32 %v3327, 0.0
          %v3360 = vmax.f32 %v3328, 0.0
          %v3361 = vmax.f32 %v3329, 0.0
          %v3362 = vpack.c.bf16 %v3330, %v3330
          %v3363 = vpack.c.bf16 %v3331, %v3331
          %v3364 = vpack.c.bf16 %v3332, %v3332
          %v3365 = vpack.c.bf16 %v3333, %v3333
          %v3366 = vpack.c.bf16 %v3334, %v3334
          %v3367 = vpack.c.bf16 %v3335, %v3335
          %v3368 = vpack.c.bf16 %v3336, %v3336
          %v3369 = vpack.c.bf16 %v3337, %v3337
          %v3370 = vpack.c.bf16 %v3338, %v3338
          %v3371 = vpack.c.bf16 %v3339, %v3339
          %v3372 = vpack.c.bf16 %v3340, %v3340
          %v3373 = vpack.c.bf16 %v3341, %v3341
          %v3374 = vpack.c.bf16 %v3342, %v3342
          %v3375 = vpack.c.bf16 %v3343, %v3343
          %v3376 = vpack.c.bf16 %v3344, %v3344
          %v3377 = vpack.c.bf16 %v3345, %v3345
          %v3378 = vpack.c.bf16 %v3346, %v3346
          %v3379 = vpack.c.bf16 %v3347, %v3347
          %v3380 = vpack.c.bf16 %v3348, %v3348
          %v3381 = vpack.c.bf16 %v3349, %v3349
          %v3382 = vpack.c.bf16 %v3350, %v3350
          %v3383 = vpack.c.bf16 %v3351, %v3351
          %v3384 = vpack.c.bf16 %v3352, %v3352
          %v3385 = vpack.c.bf16 %v3353, %v3353
          %v3386 = vpack.c.bf16 %v3354, %v3354
          %v3387 = vpack.c.bf16 %v3355, %v3355
          %v3388 = vpack.c.bf16 %v3356, %v3356
          %v3389 = vpack.c.bf16 %v3357, %v3357
          %v3390 = vpack.c.bf16 %v3358, %v3358
          %v3391 = vpack.c.bf16 %v3359, %v3359
          %v3392 = vpack.c.bf16 %v3360, %v3360
          %v3393 = vpack.c.bf16 %v3361, %v3361
          %s3394 = sshra.s32 %s3290, 3
          %s3395 = sand.u32 %s3290, 7
          %s3396 = smul.addr %s3394, 4
          %s3397 = scalar_lea.vmem [#allocation2], %s3396
          %3398 = vst [vmem:[%s3397] sm:$0xf] %v3362
          %3399 = vst [vmem:[%s3397 + $0x4] sm:$0xf] %v3363
          %3400 = vst [vmem:[%s3397 + $0x8] sm:$0xf] %v3364
          %3401 = vst [vmem:[%s3397 + $0xc] sm:$0xf] %v3365
          %3402 = vst [vmem:[%s3397 + $0x10] sm:$0xf] %v3366
          %3403 = vst [vmem:[%s3397 + $0x14] sm:$0xf] %v3367
          %3404 = vst [vmem:[%s3397 + $0x18] sm:$0xf] %v3368
          %3405 = vst [vmem:[%s3397 + $0x1c] sm:$0xf] %v3369
          %3406 = vst [vmem:[%s3397 + $0x20] sm:$0xf] %v3370
          %3407 = vst [vmem:[%s3397 + $0x24] sm:$0xf] %v3371
          %3408 = vst [vmem:[%s3397 + $0x28] sm:$0xf] %v3372
          %3409 = vst [vmem:[%s3397 + $0x2c] sm:$0xf] %v3373
          %3410 = vst [vmem:[%s3397 + $0x30] sm:$0xf] %v3374
          %3411 = vst [vmem:[%s3397 + $0x34] sm:$0xf] %v3375
          %3412 = vst [vmem:[%s3397 + $0x38] sm:$0xf] %v3376
          %3413 = vst [vmem:[%s3397 + $0x3c] sm:$0xf] %v3377
          %3414 = vst [vmem:[%s3397 + $0x40] sm:$0xf] %v3378
          %3415 = vst [vmem:[%s3397 + $0x44] sm:$0xf] %v3379
          %3416 = vst [vmem:[%s3397 + $0x48] sm:$0xf] %v3380
          %3417 = vst [vmem:[%s3397 + $0x4c] sm:$0xf] %v3381
          %3418 = vst [vmem:[%s3397 + $0x50] sm:$0xf] %v3382
          %3419 = vst [vmem:[%s3397 + $0x54] sm:$0xf] %v3383
          %3420 = vst [vmem:[%s3397 + $0x58] sm:$0xf] %v3384
          %3421 = vst [vmem:[%s3397 + $0x5c] sm:$0xf] %v3385
          %3422 = vst [vmem:[%s3397 + $0x60] sm:$0xf] %v3386
          %3423 = vst [vmem:[%s3397 + $0x64] sm:$0xf] %v3387
          %3424 = vst [vmem:[%s3397 + $0x68] sm:$0xf] %v3388
          %3425 = vst [vmem:[%s3397 + $0x6c] sm:$0xf] %v3389
          %3426 = vst [vmem:[%s3397 + $0x70] sm:$0xf] %v3390
          %3427 = vst [vmem:[%s3397 + $0x74] sm:$0xf] %v3391
          %3428 = vst [vmem:[%s3397 + $0x78] sm:$0xf] %v3392
          %3429 = vst [vmem:[%s3397 + $0x7c] sm:$0xf] %v3393
        $region112: #{tpu_custom_call.1} parent=63 // pred_fallthru
          _
        // Predicated region
        $region113: #{tpu_custom_call.1} parent=63 // pred_check
          %p3430 = pneg %p865
        $region114: #{tpu_custom_call.1} parent=63 // pred_check_branch
          %3432 = sbr.rel (%p3430) target = $region116
        $region115: #{tpu_custom_call.1} parent=63 // pred_region
          %v3433 = vld [vmem:[%s9] sm:$0x1]
          %v3435 = vperm.slane %v3433, 0
          %v3437 = vadd.f32 %v3211, %v3435
          %v3438 = vadd.f32 %v3213, %v3435
          %v3439 = vadd.f32 %v3216, %v3435
          %v3440 = vadd.f32 %v3218, %v3435
          %v3441 = vadd.f32 %v3221, %v3435
          %v3442 = vadd.f32 %v3223, %v3435
          %v3443 = vadd.f32 %v3226, %v3435
          %v3444 = vadd.f32 %v3228, %v3435
          %v3445 = vadd.f32 %v3231, %v3435
          %v3446 = vadd.f32 %v3233, %v3435
          %v3447 = vadd.f32 %v3236, %v3435
          %v3448 = vadd.f32 %v3238, %v3435
          %v3449 = vadd.f32 %v3241, %v3435
          %v3450 = vadd.f32 %v3243, %v3435
          %v3451 = vadd.f32 %v3246, %v3435
          %v3452 = vadd.f32 %v3248, %v3435
          %v3453 = vadd.f32 %v3251, %v3435
          %v3454 = vadd.f32 %v3253, %v3435
          %v3455 = vadd.f32 %v3256, %v3435
          %v3456 = vadd.f32 %v3258, %v3435
          %v3457 = vadd.f32 %v3261, %v3435
          %v3458 = vadd.f32 %v3263, %v3435
          %v3459 = vadd.f32 %v3266, %v3435
          %v3460 = vadd.f32 %v3268, %v3435
          %v3461 = vadd.f32 %v3271, %v3435
          %v3462 = vadd.f32 %v3273, %v3435
          %v3463 = vadd.f32 %v3276, %v3435
          %v3464 = vadd.f32 %v3278, %v3435
          %v3465 = vadd.f32 %v3281, %v3435
          %v3466 = vadd.f32 %v3283, %v3435
          %v3467 = vadd.f32 %v3286, %v3435
          %v3468 = vadd.f32 %v3288, %v3435
          %v3469 = vmax.f32 %v3437, 0.0
          %v3470 = vmax.f32 %v3438, 0.0
          %v3471 = vmax.f32 %v3439, 0.0
          %v3472 = vmax.f32 %v3440, 0.0
          %v3473 = vmax.f32 %v3441, 0.0
          %v3474 = vmax.f32 %v3442, 0.0
          %v3475 = vmax.f32 %v3443, 0.0
          %v3476 = vmax.f32 %v3444, 0.0
          %v3477 = vmax.f32 %v3445, 0.0
          %v3478 = vmax.f32 %v3446, 0.0
          %v3479 = vmax.f32 %v3447, 0.0
          %v3480 = vmax.f32 %v3448, 0.0
          %v3481 = vmax.f32 %v3449, 0.0
          %v3482 = vmax.f32 %v3450, 0.0
          %v3483 = vmax.f32 %v3451, 0.0
          %v3484 = vmax.f32 %v3452, 0.0
          %v3485 = vmax.f32 %v3453, 0.0
          %v3486 = vmax.f32 %v3454, 0.0
          %v3487 = vmax.f32 %v3455, 0.0
          %v3488 = vmax.f32 %v3456, 0.0
          %v3489 = vmax.f32 %v3457, 0.0
          %v3490 = vmax.f32 %v3458, 0.0
          %v3491 = vmax.f32 %v3459, 0.0
          %v3492 = vmax.f32 %v3460, 0.0
          %v3493 = vmax.f32 %v3461, 0.0
          %v3494 = vmax.f32 %v3462, 0.0
          %v3495 = vmax.f32 %v3463, 0.0
          %v3496 = vmax.f32 %v3464, 0.0
          %v3497 = vmax.f32 %v3465, 0.0
          %v3498 = vmax.f32 %v3466, 0.0
          %v3499 = vmax.f32 %v3467, 0.0
          %v3500 = vmax.f32 %v3468, 0.0
          %v3501 = vpack.c.bf16 %v3469, %v3469
          %v3502 = vpack.c.bf16 %v3470, %v3470
          %v3503 = vpack.c.bf16 %v3471, %v3471
          %v3504 = vpack.c.bf16 %v3472, %v3472
          %v3505 = vpack.c.bf16 %v3473, %v3473
          %v3506 = vpack.c.bf16 %v3474, %v3474
          %v3507 = vpack.c.bf16 %v3475, %v3475
          %v3508 = vpack.c.bf16 %v3476, %v3476
          %v3509 = vpack.c.bf16 %v3477, %v3477
          %v3510 = vpack.c.bf16 %v3478, %v3478
          %v3511 = vpack.c.bf16 %v3479, %v3479
          %v3512 = vpack.c.bf16 %v3480, %v3480
          %v3513 = vpack.c.bf16 %v3481, %v3481
          %v3514 = vpack.c.bf16 %v3482, %v3482
          %v3515 = vpack.c.bf16 %v3483, %v3483
          %v3516 = vpack.c.bf16 %v3484, %v3484
          %v3517 = vpack.c.bf16 %v3485, %v3485
          %v3518 = vpack.c.bf16 %v3486, %v3486
          %v3519 = vpack.c.bf16 %v3487, %v3487
          %v3520 = vpack.c.bf16 %v3488, %v3488
          %v3521 = vpack.c.bf16 %v3489, %v3489
          %v3522 = vpack.c.bf16 %v3490, %v3490
          %v3523 = vpack.c.bf16 %v3491, %v3491
          %v3524 = vpack.c.bf16 %v3492, %v3492
          %v3525 = vpack.c.bf16 %v3493, %v3493
          %v3526 = vpack.c.bf16 %v3494, %v3494
          %v3527 = vpack.c.bf16 %v3495, %v3495
          %v3528 = vpack.c.bf16 %v3496, %v3496
          %v3529 = vpack.c.bf16 %v3497, %v3497
          %v3530 = vpack.c.bf16 %v3498, %v3498
          %v3531 = vpack.c.bf16 %v3499, %v3499
          %v3532 = vpack.c.bf16 %v3500, %v3500
          %s3533 = sshra.s32 %s3290, 3
          %s3534 = sand.u32 %s3290, 7
          %s3535 = smul.addr %s3533, 4
          %s3536 = scalar_lea.vmem [#allocation3], %s3535
          %3537 = vst [vmem:[%s3536] sm:$0xf] %v3501
          %3538 = vst [vmem:[%s3536 + $0x4] sm:$0xf] %v3502
          %3539 = vst [vmem:[%s3536 + $0x8] sm:$0xf] %v3503
          %3540 = vst [vmem:[%s3536 + $0xc] sm:$0xf] %v3504
          %3541 = vst [vmem:[%s3536 + $0x10] sm:$0xf] %v3505
          %3542 = vst [vmem:[%s3536 + $0x14] sm:$0xf] %v3506
          %3543 = vst [vmem:[%s3536 + $0x18] sm:$0xf] %v3507
          %3544 = vst [vmem:[%s3536 + $0x1c] sm:$0xf] %v3508
          %3545 = vst [vmem:[%s3536 + $0x20] sm:$0xf] %v3509
          %3546 = vst [vmem:[%s3536 + $0x24] sm:$0xf] %v3510
          %3547 = vst [vmem:[%s3536 + $0x28] sm:$0xf] %v3511
          %3548 = vst [vmem:[%s3536 + $0x2c] sm:$0xf] %v3512
          %3549 = vst [vmem:[%s3536 + $0x30] sm:$0xf] %v3513
          %3550 = vst [vmem:[%s3536 + $0x34] sm:$0xf] %v3514
          %3551 = vst [vmem:[%s3536 + $0x38] sm:$0xf] %v3515
          %3552 = vst [vmem:[%s3536 + $0x3c] sm:$0xf] %v3516
          %3553 = vst [vmem:[%s3536 + $0x40] sm:$0xf] %v3517
          %3554 = vst [vmem:[%s3536 + $0x44] sm:$0xf] %v3518
          %3555 = vst [vmem:[%s3536 + $0x48] sm:$0xf] %v3519
          %3556 = vst [vmem:[%s3536 + $0x4c] sm:$0xf] %v3520
          %3557 = vst [vmem:[%s3536 + $0x50] sm:$0xf] %v3521
          %3558 = vst [vmem:[%s3536 + $0x54] sm:$0xf] %v3522
          %3559 = vst [vmem:[%s3536 + $0x58] sm:$0xf] %v3523
          %3560 = vst [vmem:[%s3536 + $0x5c] sm:$0xf] %v3524
          %3561 = vst [vmem:[%s3536 + $0x60] sm:$0xf] %v3525
          %3562 = vst [vmem:[%s3536 + $0x64] sm:$0xf] %v3526
          %3563 = vst [vmem:[%s3536 + $0x68] sm:$0xf] %v3527
          %3564 = vst [vmem:[%s3536 + $0x6c] sm:$0xf] %v3528
          %3565 = vst [vmem:[%s3536 + $0x70] sm:$0xf] %v3529
          %3566 = vst [vmem:[%s3536 + $0x74] sm:$0xf] %v3530
          %3567 = vst [vmem:[%s3536 + $0x78] sm:$0xf] %v3531
          %3568 = vst [vmem:[%s3536 + $0x7c] sm:$0xf] %v3532
        $region116: #{tpu_custom_call.1} parent=63 // pred_fallthru
          _
        // Predicated region
        $region117: #{tpu_custom_call.1} parent=63 // pred_check
          %p3569 = pneg %p1624
        $region118: #{tpu_custom_call.1} parent=63 // pred_check_branch
          %3571 = sbr.rel (%p3569) target = $region120
        $region119: #{tpu_custom_call.1} parent=63 // pred_region
          %v3572 = vld [vmem:[%s10] sm:$0x1]
          %v3574 = vperm.slane %v3572, 0
          %v3576 = vadd.f32 %v3211, %v3574
          %v3577 = vadd.f32 %v3213, %v3574
          %v3578 = vadd.f32 %v3216, %v3574
          %v3579 = vadd.f32 %v3218, %v3574
          %v3580 = vadd.f32 %v3221, %v3574
          %v3581 = vadd.f32 %v3223, %v3574
          %v3582 = vadd.f32 %v3226, %v3574
          %v3583 = vadd.f32 %v3228, %v3574
          %v3584 = vadd.f32 %v3231, %v3574
          %v3585 = vadd.f32 %v3233, %v3574
          %v3586 = vadd.f32 %v3236, %v3574
          %v3587 = vadd.f32 %v3238, %v3574
          %v3588 = vadd.f32 %v3241, %v3574
          %v3589 = vadd.f32 %v3243, %v3574
          %v3590 = vadd.f32 %v3246, %v3574
          %v3591 = vadd.f32 %v3248, %v3574
          %v3592 = vadd.f32 %v3251, %v3574
          %v3593 = vadd.f32 %v3253, %v3574
          %v3594 = vadd.f32 %v3256, %v3574
          %v3595 = vadd.f32 %v3258, %v3574
          %v3596 = vadd.f32 %v3261, %v3574
          %v3597 = vadd.f32 %v3263, %v3574
          %v3598 = vadd.f32 %v3266, %v3574
          %v3599 = vadd.f32 %v3268, %v3574
          %v3600 = vadd.f32 %v3271, %v3574
          %v3601 = vadd.f32 %v3273, %v3574
          %v3602 = vadd.f32 %v3276, %v3574
          %v3603 = vadd.f32 %v3278, %v3574
          %v3604 = vadd.f32 %v3281, %v3574
          %v3605 = vadd.f32 %v3283, %v3574
          %v3606 = vadd.f32 %v3286, %v3574
          %v3607 = vadd.f32 %v3288, %v3574
          %v3608 = vmax.f32 %v3576, 0.0
          %v3609 = vmax.f32 %v3577, 0.0
          %v3610 = vmax.f32 %v3578, 0.0
          %v3611 = vmax.f32 %v3579, 0.0
          %v3612 = vmax.f32 %v3580, 0.0
          %v3613 = vmax.f32 %v3581, 0.0
          %v3614 = vmax.f32 %v3582, 0.0
          %v3615 = vmax.f32 %v3583, 0.0
          %v3616 = vmax.f32 %v3584, 0.0
          %v3617 = vmax.f32 %v3585, 0.0
          %v3618 = vmax.f32 %v3586, 0.0
          %v3619 = vmax.f32 %v3587, 0.0
          %v3620 = vmax.f32 %v3588, 0.0
          %v3621 = vmax.f32 %v3589, 0.0
          %v3622 = vmax.f32 %v3590, 0.0
          %v3623 = vmax.f32 %v3591, 0.0
          %v3624 = vmax.f32 %v3592, 0.0
          %v3625 = vmax.f32 %v3593, 0.0
          %v3626 = vmax.f32 %v3594, 0.0
          %v3627 = vmax.f32 %v3595, 0.0
          %v3628 = vmax.f32 %v3596, 0.0
          %v3629 = vmax.f32 %v3597, 0.0
          %v3630 = vmax.f32 %v3598, 0.0
          %v3631 = vmax.f32 %v3599, 0.0
          %v3632 = vmax.f32 %v3600, 0.0
          %v3633 = vmax.f32 %v3601, 0.0
          %v3634 = vmax.f32 %v3602, 0.0
          %v3635 = vmax.f32 %v3603, 0.0
          %v3636 = vmax.f32 %v3604, 0.0
          %v3637 = vmax.f32 %v3605, 0.0
          %v3638 = vmax.f32 %v3606, 0.0
          %v3639 = vmax.f32 %v3607, 0.0
          %v3640 = vlaneseq
          %v3641 = vand.u32 %v3640, 127
          %vm3642 = vcmp.lt.s32.totalorder %v3641, 7
          %v3643 = vsel %vm3642, %v3608, -1e+30
          %v3644 = vsel %vm3642, %v3609, -1e+30
          %v3645 = vsel %vm3642, %v3610, -1e+30
          %v3646 = vsel %vm3642, %v3611, -1e+30
          %v3647 = vsel %vm3642, %v3612, -1e+30
          %v3648 = vsel %vm3642, %v3613, -1e+30
          %v3649 = vsel %vm3642, %v3614, -1e+30
          %v3650 = vsel %vm3642, %v3615, -1e+30
          %v3651 = vsel %vm3642, %v3616, -1e+30
          %v3652 = vsel %vm3642, %v3617, -1e+30
          %v3653 = vsel %vm3642, %v3618, -1e+30
          %v3654 = vsel %vm3642, %v3619, -1e+30
          %v3655 = vsel %vm3642, %v3620, -1e+30
          %v3656 = vsel %vm3642, %v3621, -1e+30
          %v3657 = vsel %vm3642, %v3622, -1e+30
          %v3658 = vsel %vm3642, %v3623, -1e+30
          %v3659 = vsel %vm3642, %v3624, -1e+30
          %v3660 = vsel %vm3642, %v3625, -1e+30
          %v3661 = vsel %vm3642, %v3626, -1e+30
          %v3662 = vsel %vm3642, %v3627, -1e+30
          %v3663 = vsel %vm3642, %v3628, -1e+30
          %v3664 = vsel %vm3642, %v3629, -1e+30
          %v3665 = vsel %vm3642, %v3630, -1e+30
          %v3666 = vsel %vm3642, %v3631, -1e+30
          %v3667 = vsel %vm3642, %v3632, -1e+30
          %v3668 = vsel %vm3642, %v3633, -1e+30
          %v3669 = vsel %vm3642, %v3634, -1e+30
          %v3670 = vsel %vm3642, %v3635, -1e+30
          %v3671 = vsel %vm3642, %v3636, -1e+30
          %v3672 = vsel %vm3642, %v3637, -1e+30
          %v3673 = vsel %vm3642, %v3638, -1e+30
          %v3674 = vsel %vm3642, %v3639, -1e+30
          %3675 = vmax.xlane.f32.xlu0 %v3643
          %v3676 = vpop.xlane.xlu0 %3675
          %3677 = vmax.xlane.f32.xlu0 %v3644
          %v3678 = vpop.xlane.xlu0 %3677
          %3679 = vmax.xlane.f32.xlu0 %v3645
          %v3680 = vpop.xlane.xlu0 %3679
          %3681 = vmax.xlane.f32.xlu0 %v3646
          %v3682 = vpop.xlane.xlu0 %3681
          %3683 = vmax.xlane.f32.xlu0 %v3647
          %v3684 = vpop.xlane.xlu0 %3683
          %3685 = vmax.xlane.f32.xlu0 %v3648
          %v3686 = vpop.xlane.xlu0 %3685
          %3687 = vmax.xlane.f32.xlu0 %v3649
          %v3688 = vpop.xlane.xlu0 %3687
          %3689 = vmax.xlane.f32.xlu0 %v3650
          %v3690 = vpop.xlane.xlu0 %3689
          %3691 = vmax.xlane.f32.xlu0 %v3651
          %v3692 = vpop.xlane.xlu0 %3691
          %3693 = vmax.xlane.f32.xlu0 %v3652
          %v3694 = vpop.xlane.xlu0 %3693
          %3695 = vmax.xlane.f32.xlu0 %v3653
          %v3696 = vpop.xlane.xlu0 %3695
          %3697 = vmax.xlane.f32.xlu0 %v3654
          %v3698 = vpop.xlane.xlu0 %3697
          %3699 = vmax.xlane.f32.xlu0 %v3655
          %v3700 = vpop.xlane.xlu0 %3699
          %3701 = vmax.xlane.f32.xlu0 %v3656
          %v3702 = vpop.xlane.xlu0 %3701
          %3703 = vmax.xlane.f32.xlu0 %v3657
          %v3704 = vpop.xlane.xlu0 %3703
          %3705 = vmax.xlane.f32.xlu0 %v3658
          %v3706 = vpop.xlane.xlu0 %3705
          %3707 = vmax.xlane.f32.xlu0 %v3659
          %v3708 = vpop.xlane.xlu0 %3707
          %3709 = vmax.xlane.f32.xlu0 %v3660
          %v3710 = vpop.xlane.xlu0 %3709
          %3711 = vmax.xlane.f32.xlu0 %v3661
          %v3712 = vpop.xlane.xlu0 %3711
          %3713 = vmax.xlane.f32.xlu0 %v3662
          %v3714 = vpop.xlane.xlu0 %3713
          %3715 = vmax.xlane.f32.xlu0 %v3663
          %v3716 = vpop.xlane.xlu0 %3715
          %3717 = vmax.xlane.f32.xlu0 %v3664
          %v3718 = vpop.xlane.xlu0 %3717
          %3719 = vmax.xlane.f32.xlu0 %v3665
          %v3720 = vpop.xlane.xlu0 %3719
          %3721 = vmax.xlane.f32.xlu0 %v3666
          %v3722 = vpop.xlane.xlu0 %3721
          %3723 = vmax.xlane.f32.xlu0 %v3667
          %v3724 = vpop.xlane.xlu0 %3723
          %3725 = vmax.xlane.f32.xlu0 %v3668
          %v3726 = vpop.xlane.xlu0 %3725
          %3727 = vmax.xlane.f32.xlu0 %v3669
          %v3728 = vpop.xlane.xlu0 %3727
          %3729 = vmax.xlane.f32.xlu0 %v3670
          %v3730 = vpop.xlane.xlu0 %3729
          %3731 = vmax.xlane.f32.xlu0 %v3671
          %v3732 = vpop.xlane.xlu0 %3731
          %3733 = vmax.xlane.f32.xlu0 %v3672
          %v3734 = vpop.xlane.xlu0 %3733
          %3735 = vmax.xlane.f32.xlu0 %v3673
          %v3736 = vpop.xlane.xlu0 %3735
          %3737 = vmax.xlane.f32.xlu0 %v3674
          %v3738 = vpop.xlane.xlu0 %3737
          %v3739 = vsub.f32 %v3643, %v3676
          %v3740 = vsub.f32 %v3644, %v3678
          %v3741 = vsub.f32 %v3645, %v3680
          %v3742 = vsub.f32 %v3646, %v3682
          %v3743 = vsub.f32 %v3647, %v3684
          %v3744 = vsub.f32 %v3648, %v3686
          %v3745 = vsub.f32 %v3649, %v3688
          %v3746 = vsub.f32 %v3650, %v3690
          %v3747 = vsub.f32 %v3651, %v3692
          %v3748 = vsub.f32 %v3652, %v3694
          %v3749 = vsub.f32 %v3653, %v3696
          %v3750 = vsub.f32 %v3654, %v3698
          %v3751 = vsub.f32 %v3655, %v3700
          %v3752 = vsub.f32 %v3656, %v3702
          %v3753 = vsub.f32 %v3657, %v3704
          %v3754 = vsub.f32 %v3658, %v3706
          %v3755 = vsub.f32 %v3659, %v3708
          %v3756 = vsub.f32 %v3660, %v3710
          %v3757 = vsub.f32 %v3661, %v3712
          %v3758 = vsub.f32 %v3662, %v3714
          %v3759 = vsub.f32 %v3663, %v3716
          %v3760 = vsub.f32 %v3664, %v3718
          %v3761 = vsub.f32 %v3665, %v3720
          %v3762 = vsub.f32 %v3666, %v3722
          %v3763 = vsub.f32 %v3667, %v3724
          %v3764 = vsub.f32 %v3668, %v3726
          %v3765 = vsub.f32 %v3669, %v3728
          %v3766 = vsub.f32 %v3670, %v3730
          %v3767 = vsub.f32 %v3671, %v3732
          %v3768 = vsub.f32 %v3672, %v3734
          %v3769 = vsub.f32 %v3673, %v3736
          %v3770 = vsub.f32 %v3674, %v3738
          %v3771 = vmul.f32 %v3739, 1.442695
          %v3772 = vpow.pop %v3771
          %v3773 = vmul.f32 %v3740, 1.442695
          %v3774 = vpow.pop %v3773
          %v3775 = vmul.f32 %v3741, 1.442695
          %v3776 = vpow.pop %v3775
          %v3777 = vmul.f32 %v3742, 1.442695
          %v3778 = vpow.pop %v3777
          %v3779 = vmul.f32 %v3743, 1.442695
          %v3780 = vpow.pop %v3779
          %v3781 = vmul.f32 %v3744, 1.442695
          %v3782 = vpow.pop %v3781
          %v3783 = vmul.f32 %v3745, 1.442695
          %v3784 = vpow.pop %v3783
          %v3785 = vmul.f32 %v3746, 1.442695
          %v3786 = vpow.pop %v3785
          %v3787 = vmul.f32 %v3747, 1.442695
          %v3788 = vpow.pop %v3787
          %v3789 = vmul.f32 %v3748, 1.442695
          %v3790 = vpow.pop %v3789
          %v3791 = vmul.f32 %v3749, 1.442695
          %v3792 = vpow.pop %v3791
          %v3793 = vmul.f32 %v3750, 1.442695
          %v3794 = vpow.pop %v3793
          %v3795 = vmul.f32 %v3751, 1.442695
          %v3796 = vpow.pop %v3795
          %v3797 = vmul.f32 %v3752, 1.442695
          %v3798 = vpow.pop %v3797
          %v3799 = vmul.f32 %v3753, 1.442695
          %v3800 = vpow.pop %v3799
          %v3801 = vmul.f32 %v3754, 1.442695
          %v3802 = vpow.pop %v3801
          %v3803 = vmul.f32 %v3755, 1.442695
          %v3804 = vpow.pop %v3803
          %v3805 = vmul.f32 %v3756, 1.442695
          %v3806 = vpow.pop %v3805
          %v3807 = vmul.f32 %v3757, 1.442695
          %v3808 = vpow.pop %v3807
          %v3809 = vmul.f32 %v3758, 1.442695
          %v3810 = vpow.pop %v3809
          %v3811 = vmul.f32 %v3759, 1.442695
          %v3812 = vpow.pop %v3811
          %v3813 = vmul.f32 %v3760, 1.442695
          %v3814 = vpow.pop %v3813
          %v3815 = vmul.f32 %v3761, 1.442695
          %v3816 = vpow.pop %v3815
          %v3817 = vmul.f32 %v3762, 1.442695
          %v3818 = vpow.pop %v3817
          %v3819 = vmul.f32 %v3763, 1.442695
          %v3820 = vpow.pop %v3819
          %v3821 = vmul.f32 %v3764, 1.442695
          %v3822 = vpow.pop %v3821
          %v3823 = vmul.f32 %v3765, 1.442695
          %v3824 = vpow.pop %v3823
          %v3825 = vmul.f32 %v3766, 1.442695
          %v3826 = vpow.pop %v3825
          %v3827 = vmul.f32 %v3767, 1.442695
          %v3828 = vpow.pop %v3827
          %v3829 = vmul.f32 %v3768, 1.442695
          %v3830 = vpow.pop %v3829
          %v3831 = vmul.f32 %v3769, 1.442695
          %v3832 = vpow.pop %v3831
          %v3833 = vmul.f32 %v3770, 1.442695
          %v3834 = vpow.pop %v3833
          %v3835 = vsel %vm3642, %v3772, 0.0
          %v3836 = vsel %vm3642, %v3774, 0.0
          %v3837 = vsel %vm3642, %v3776, 0.0
          %v3838 = vsel %vm3642, %v3778, 0.0
          %v3839 = vsel %vm3642, %v3780, 0.0
          %v3840 = vsel %vm3642, %v3782, 0.0
          %v3841 = vsel %vm3642, %v3784, 0.0
          %v3842 = vsel %vm3642, %v3786, 0.0
          %v3843 = vsel %vm3642, %v3788, 0.0
          %v3844 = vsel %vm3642, %v3790, 0.0
          %v3845 = vsel %vm3642, %v3792, 0.0
          %v3846 = vsel %vm3642, %v3794, 0.0
          %v3847 = vsel %vm3642, %v3796, 0.0
          %v3848 = vsel %vm3642, %v3798, 0.0
          %v3849 = vsel %vm3642, %v3800, 0.0
          %v3850 = vsel %vm3642, %v3802, 0.0
          %v3851 = vsel %vm3642, %v3804, 0.0
          %v3852 = vsel %vm3642, %v3806, 0.0
          %v3853 = vsel %vm3642, %v3808, 0.0
          %v3854 = vsel %vm3642, %v3810, 0.0
          %v3855 = vsel %vm3642, %v3812, 0.0
          %v3856 = vsel %vm3642, %v3814, 0.0
          %v3857 = vsel %vm3642, %v3816, 0.0
          %v3858 = vsel %vm3642, %v3818, 0.0
          %v3859 = vsel %vm3642, %v3820, 0.0
          %v3860 = vsel %vm3642, %v3822, 0.0
          %v3861 = vsel %vm3642, %v3824, 0.0
          %v3862 = vsel %vm3642, %v3826, 0.0
          %v3863 = vsel %vm3642, %v3828, 0.0
          %v3864 = vsel %vm3642, %v3830, 0.0
          %v3865 = vsel %vm3642, %v3832, 0.0
          %v3866 = vsel %vm3642, %v3834, 0.0
          %3867 = vadd.xlane.f32.xlu0 %v3835
          %v3868 = vpop.xlane.xlu0 %3867
          %3869 = vadd.xlane.f32.xlu0 %v3836
          %v3870 = vpop.xlane.xlu0 %3869
          %3871 = vadd.xlane.f32.xlu0 %v3837
          %v3872 = vpop.xlane.xlu0 %3871
          %3873 = vadd.xlane.f32.xlu0 %v3838
          %v3874 = vpop.xlane.xlu0 %3873
          %3875 = vadd.xlane.f32.xlu0 %v3839
          %v3876 = vpop.xlane.xlu0 %3875
          %3877 = vadd.xlane.f32.xlu0 %v3840
          %v3878 = vpop.xlane.xlu0 %3877
          %3879 = vadd.xlane.f32.xlu0 %v3841
          %v3880 = vpop.xlane.xlu0 %3879
          %3881 = vadd.xlane.f32.xlu0 %v3842
          %v3882 = vpop.xlane.xlu0 %3881
          %3883 = vadd.xlane.f32.xlu0 %v3843
          %v3884 = vpop.xlane.xlu0 %3883
          %3885 = vadd.xlane.f32.xlu0 %v3844
          %v3886 = vpop.xlane.xlu0 %3885
          %3887 = vadd.xlane.f32.xlu0 %v3845
          %v3888 = vpop.xlane.xlu0 %3887
          %3889 = vadd.xlane.f32.xlu0 %v3846
          %v3890 = vpop.xlane.xlu0 %3889
          %3891 = vadd.xlane.f32.xlu0 %v3847
          %v3892 = vpop.xlane.xlu0 %3891
          %3893 = vadd.xlane.f32.xlu0 %v3848
          %v3894 = vpop.xlane.xlu0 %3893
          %3895 = vadd.xlane.f32.xlu0 %v3849
          %v3896 = vpop.xlane.xlu0 %3895
          %3897 = vadd.xlane.f32.xlu0 %v3850
          %v3898 = vpop.xlane.xlu0 %3897
          %3899 = vadd.xlane.f32.xlu0 %v3851
          %v3900 = vpop.xlane.xlu0 %3899
          %3901 = vadd.xlane.f32.xlu0 %v3852
          %v3902 = vpop.xlane.xlu0 %3901
          %3903 = vadd.xlane.f32.xlu0 %v3853
          %v3904 = vpop.xlane.xlu0 %3903
          %3905 = vadd.xlane.f32.xlu0 %v3854
          %v3906 = vpop.xlane.xlu0 %3905
          %3907 = vadd.xlane.f32.xlu0 %v3855
          %v3908 = vpop.xlane.xlu0 %3907
          %3909 = vadd.xlane.f32.xlu0 %v3856
          %v3910 = vpop.xlane.xlu0 %3909
          %3911 = vadd.xlane.f32.xlu0 %v3857
          %v3912 = vpop.xlane.xlu0 %3911
          %3913 = vadd.xlane.f32.xlu0 %v3858
          %v3914 = vpop.xlane.xlu0 %3913
          %3915 = vadd.xlane.f32.xlu0 %v3859
          %v3916 = vpop.xlane.xlu0 %3915
          %3917 = vadd.xlane.f32.xlu0 %v3860
          %v3918 = vpop.xlane.xlu0 %3917
          %3919 = vadd.xlane.f32.xlu0 %v3861
          %v3920 = vpop.xlane.xlu0 %3919
          %3921 = vadd.xlane.f32.xlu0 %v3862
          %v3922 = vpop.xlane.xlu0 %3921
          %3923 = vadd.xlane.f32.xlu0 %v3863
          %v3924 = vpop.xlane.xlu0 %3923
          %3925 = vadd.xlane.f32.xlu0 %v3864
          %v3926 = vpop.xlane.xlu0 %3925
          %3927 = vadd.xlane.f32.xlu0 %v3865
          %v3928 = vpop.xlane.xlu0 %3927
          %3929 = vadd.xlane.f32.xlu0 %v3866
          %v3930 = vpop.xlane.xlu0 %3929
          %v3931 = vlog2.pop %v3868
          %v3932 = vmul.f32 %v3931, 0.6931472
          %v3933 = vlog2.pop %v3870
          %v3934 = vmul.f32 %v3933, 0.6931472
          %v3935 = vlog2.pop %v3872
          %v3936 = vmul.f32 %v3935, 0.6931472
          %v3937 = vlog2.pop %v3874
          %v3938 = vmul.f32 %v3937, 0.6931472
          %v3939 = vlog2.pop %v3876
          %v3940 = vmul.f32 %v3939, 0.6931472
          %v3941 = vlog2.pop %v3878
          %v3942 = vmul.f32 %v3941, 0.6931472
          %v3943 = vlog2.pop %v3880
          %v3944 = vmul.f32 %v3943, 0.6931472
          %v3945 = vlog2.pop %v3882
          %v3946 = vmul.f32 %v3945, 0.6931472
          %v3947 = vlog2.pop %v3884
          %v3948 = vmul.f32 %v3947, 0.6931472
          %v3949 = vlog2.pop %v3886
          %v3950 = vmul.f32 %v3949, 0.6931472
          %v3951 = vlog2.pop %v3888
          %v3952 = vmul.f32 %v3951, 0.6931472
          %v3953 = vlog2.pop %v3890
          %v3954 = vmul.f32 %v3953, 0.6931472
          %v3955 = vlog2.pop %v3892
          %v3956 = vmul.f32 %v3955, 0.6931472
          %v3957 = vlog2.pop %v3894
          %v3958 = vmul.f32 %v3957, 0.6931472
          %v3959 = vlog2.pop %v3896
          %v3960 = vmul.f32 %v3959, 0.6931472
          %v3961 = vlog2.pop %v3898
          %v3962 = vmul.f32 %v3961, 0.6931472
          %v3963 = vlog2.pop %v3900
          %v3964 = vmul.f32 %v3963, 0.6931472
          %v3965 = vlog2.pop %v3902
          %v3966 = vmul.f32 %v3965, 0.6931472
          %v3967 = vlog2.pop %v3904
          %v3968 = vmul.f32 %v3967, 0.6931472
          %v3969 = vlog2.pop %v3906
          %v3970 = vmul.f32 %v3969, 0.6931472
          %v3971 = vlog2.pop %v3908
          %v3972 = vmul.f32 %v3971, 0.6931472
          %v3973 = vlog2.pop %v3910
          %v3974 = vmul.f32 %v3973, 0.6931472
          %v3975 = vlog2.pop %v3912
          %v3976 = vmul.f32 %v3975, 0.6931472
          %v3977 = vlog2.pop %v3914
          %v3978 = vmul.f32 %v3977, 0.6931472
          %v3979 = vlog2.pop %v3916
          %v3980 = vmul.f32 %v3979, 0.6931472
          %v3981 = vlog2.pop %v3918
          %v3982 = vmul.f32 %v3981, 0.6931472
          %v3983 = vlog2.pop %v3920
          %v3984 = vmul.f32 %v3983, 0.6931472
          %v3985 = vlog2.pop %v3922
          %v3986 = vmul.f32 %v3985, 0.6931472
          %v3987 = vlog2.pop %v3924
          %v3988 = vmul.f32 %v3987, 0.6931472
          %v3989 = vlog2.pop %v3926
          %v3990 = vmul.f32 %v3989, 0.6931472
          %v3991 = vlog2.pop %v3928
          %v3992 = vmul.f32 %v3991, 0.6931472
          %v3993 = vlog2.pop %v3930
          %v3994 = vmul.f32 %v3993, 0.6931472
          %v3995 = vsub.f32 %v3739, %v3932
          %v3996 = vsub.f32 %v3740, %v3934
          %v3997 = vsub.f32 %v3741, %v3936
          %v3998 = vsub.f32 %v3742, %v3938
          %v3999 = vsub.f32 %v3743, %v3940
          %v4000 = vsub.f32 %v3744, %v3942
          %v4001 = vsub.f32 %v3745, %v3944
          %v4002 = vsub.f32 %v3746, %v3946
          %v4003 = vsub.f32 %v3747, %v3948
          %v4004 = vsub.f32 %v3748, %v3950
          %v4005 = vsub.f32 %v3749, %v3952
          %v4006 = vsub.f32 %v3750, %v3954
          %v4007 = vsub.f32 %v3751, %v3956
          %v4008 = vsub.f32 %v3752, %v3958
          %v4009 = vsub.f32 %v3753, %v3960
          %v4010 = vsub.f32 %v3754, %v3962
          %v4011 = vsub.f32 %v3755, %v3964
          %v4012 = vsub.f32 %v3756, %v3966
          %v4013 = vsub.f32 %v3757, %v3968
          %v4014 = vsub.f32 %v3758, %v3970
          %v4015 = vsub.f32 %v3759, %v3972
          %v4016 = vsub.f32 %v3760, %v3974
          %v4017 = vsub.f32 %v3761, %v3976
          %v4018 = vsub.f32 %v3762, %v3978
          %v4019 = vsub.f32 %v3763, %v3980
          %v4020 = vsub.f32 %v3764, %v3982
          %v4021 = vsub.f32 %v3765, %v3984
          %v4022 = vsub.f32 %v3766, %v3986
          %v4023 = vsub.f32 %v3767, %v3988
          %v4024 = vsub.f32 %v3768, %v3990
          %v4025 = vsub.f32 %v3769, %v3992
          %v4026 = vsub.f32 %v3770, %v3994
          %4027 = vst [vmem:[#allocation19] sm:$0xff] %v3995
          %4028 = vst [vmem:[#allocation19 + $0x8] sm:$0xff] %v3996
          %4029 = vst [vmem:[#allocation19 + $0x10] sm:$0xff] %v3997
          %4030 = vst [vmem:[#allocation19 + $0x18] sm:$0xff] %v3998
          %4031 = vst [vmem:[#allocation19 + $0x20] sm:$0xff] %v3999
          %4032 = vst [vmem:[#allocation19 + $0x28] sm:$0xff] %v4000
          %4033 = vst [vmem:[#allocation19 + $0x30] sm:$0xff] %v4001
          %4034 = vst [vmem:[#allocation19 + $0x38] sm:$0xff] %v4002
          %4035 = vst [vmem:[#allocation19 + $0x40] sm:$0xff] %v4003
          %4036 = vst [vmem:[#allocation19 + $0x48] sm:$0xff] %v4004
          %4037 = vst [vmem:[#allocation19 + $0x50] sm:$0xff] %v4005
          %4038 = vst [vmem:[#allocation19 + $0x58] sm:$0xff] %v4006
          %4039 = vst [vmem:[#allocation19 + $0x60] sm:$0xff] %v4007
          %4040 = vst [vmem:[#allocation19 + $0x68] sm:$0xff] %v4008
          %4041 = vst [vmem:[#allocation19 + $0x70] sm:$0xff] %v4009
          %4042 = vst [vmem:[#allocation19 + $0x78] sm:$0xff] %v4010
          %4043 = vst [vmem:[#allocation19 + $0x80] sm:$0xff] %v4011
          %4044 = vst [vmem:[#allocation19 + $0x88] sm:$0xff] %v4012
          %4045 = vst [vmem:[#allocation19 + $0x90] sm:$0xff] %v4013
          %4046 = vst [vmem:[#allocation19 + $0x98] sm:$0xff] %v4014
          %4047 = vst [vmem:[#allocation19 + $0xa0] sm:$0xff] %v4015
          %4048 = vst [vmem:[#allocation19 + $0xa8] sm:$0xff] %v4016
          %4049 = vst [vmem:[#allocation19 + $0xb0] sm:$0xff] %v4017
          %4050 = vst [vmem:[#allocation19 + $0xb8] sm:$0xff] %v4018
          %4051 = vst [vmem:[#allocation19 + $0xc0] sm:$0xff] %v4019
          %4052 = vst [vmem:[#allocation19 + $0xc8] sm:$0xff] %v4020
          %4053 = vst [vmem:[#allocation19 + $0xd0] sm:$0xff] %v4021
          %4054 = vst [vmem:[#allocation19 + $0xd8] sm:$0xff] %v4022
          %4055 = vst [vmem:[#allocation19 + $0xe0] sm:$0xff] %v4023
          %4056 = vst [vmem:[#allocation19 + $0xe8] sm:$0xff] %v4024
          %4057 = vst [vmem:[#allocation19 + $0xf0] sm:$0xff] %v4025
          %4058 = vst [vmem:[#allocation19 + $0xf8] sm:$0xff] %v4026
        $region120: #{tpu_custom_call.1} parent=63 // pred_fallthru
          _
        // Predicated region
        $region121: #{tpu_custom_call.1} parent=63 // pred_check
          %p4059 = pneg %p294
        $region122: #{tpu_custom_call.1} parent=63 // pred_check_branch
          %4061 = sbr.rel (%p4059) target = $region124
        $region123: #{tpu_custom_call.1} parent=63 // pred_region
          %s4062 = smul.u32 32, %s33
          %4064 = vsyncadd [#allocation7], 0
          %s4065 = smul.addr %s4062, 8
          %s4066 = scalar_lea.hbm %s11, %s4065
          %s4067 = sshll.u32 [#allocation19], 4
          %s4068 = int_to_ptr.vmem [resolvable:$true] %s4067
          %s4069 = sshll.u32 %s4066, 4
          %s4070 = int_to_ptr.hbm [resolvable:$true] %s4069
          %4075 = dma.vmem_to_hbm [thread:$0]  %s4068, 4096, %s4070, [#allocation7], 128, 128, 8
        $region124: #{tpu_custom_call.1} parent=63 // pred_fallthru
          _
        // Predicated region
        $region125: #{tpu_custom_call.1} parent=63 // pred_check
          %p4076 = pneg %p294
        $region126: #{tpu_custom_call.1} parent=63 // pred_check_branch
          %4078 = sbr.rel (%p4076) target = $region128
        $region127: #{tpu_custom_call.1} parent=63 // pred_region
          %4080 = dma.done [#allocation7], 4096
        $region128: #{tpu_custom_call.1} parent=63 // pred_fallthru
          _
      $region64: #{tpu_custom_call.1} parent=5 // pred_fallthru
        _
      %p4081 = scmp.le.s32.totalorder 2, %s23
      // Predicated region
      $region129: #{tpu_custom_call.1} parent=5 // pred_check
        %p4082 = pneg %p4081
      $region130: #{tpu_custom_call.1} parent=5 // pred_check_branch
        %4084 = sbr.rel (%p4082) target = $region132
      $region131: #{tpu_custom_call.1} parent=5 // pred_region
        %s4085 = ssub.s32 %s23, 2
      $region132: #{tpu_custom_call.1} parent=5 // pred_fallthru
        _
    $region6: #{tpu_custom_call.1} parent=1 // loop_footer
      %s27 = sadd.s32 1, %s23
    $region7: #{tpu_custom_call.1} parent=1 // loop_footer_branch
      %22 = sbr.rel target = $region3
    $region8: #{tpu_custom_call.1} parent=1 // loop_exit
      _
    %4086 = vsyncpa [#allocation6], 1
    %s4087 = scalar_lea.sflag [#allocation6], 1
    %4088 = vsyncpa %s4087, 1
    %4089 = vsyncpa [#allocation9], 1
    %4090 = vsyncpa [#allocation12], 1
    %4091 = vsyncpa [#allocation15], 1
    %4092 = vsyncpa [#allocation18], 1
    %4093 = vsyncpa [#allocation7], 1
    %s4094 = scalar_lea.sflag [#allocation7], 1
    %4095 = vsyncpa %s4094, 1

</llo_original>
